<compile_context>
chip_gen: v7x
topology: tpu7x:2x2x1
jax: 0.10.0
libtpu: 0.0.40
codegen_flags: <defaults>
</compile_context>

<pallas_src>
import jax
import jax.numpy as jnp
from jax import lax
from jax.experimental import pallas as pl
from jax.experimental.pallas import tpu as pltpu


# ----------------------------------------------------------------------------
# Kernel A: squeeze (1x1 conv, folded BN, ReLU) fused with ConvTranspose2d
#           k=[1,4], stride=[1,2], pad=[0,1] upconv (+ ReLU), single matmul,
#           lane-dense interleaved output.
# ----------------------------------------------------------------------------
def _squeeze_upconv_kernel(x_ref, sqw_ref, sqb_ref, wup_ref, upb_ref, o_ref):
    tr, w, cin = x_ref.shape
    sq = sqw_ref.shape[1]

    # squeeze: BN scale pre-folded into sqw, shift in sqb; bf16 MXU, f32 acc.
    xs = jnp.dot(x_ref[...].reshape(tr * w, cin), sqw_ref[...],
                 preferred_element_type=jnp.float32) + sqb_ref[...]
    xs = jnp.maximum(xs, 0.0)                                   # ReLU
    xs3 = xs.reshape(tr, w, sq).astype(jnp.bfloat16)

    # One zero-padded staging buffer sliced three ways (no prev/next copies).
    zero = jnp.zeros((tr, 1, sq), jnp.bfloat16)
    xpad = jnp.concatenate([zero, xs3, zero], axis=1)           # (tr, w+2, sq)
    lhs = jnp.concatenate(
        [xpad[:, 1:w + 1], xpad[:, 0:w], xpad[:, 2:w + 2]],     # [xs | prev | next]
        axis=-1).reshape(tr * w, 3 * sq)

    # Combined upconv: one matmul yields [even | odd] per input column.
    #   even = xs@Wk1 + prev@Wk3 ; odd = xs@Wk2 + next@Wk0  (block weight in wup).
    up = jnp.dot(lhs, wup_ref[...], preferred_element_type=jnp.float32) + upb_ref[...]
    up = jnp.maximum(up, 0.0)                                   # ReLU

    # Single full-block, lane-dense store; [n, W, 2*sq] -> [B, H, 2W, sq] is a
    # free view in the wrapper.
    o_ref[...] = up.reshape(tr, w, 2 * sq).astype(o_ref.dtype)


def _pick_row_tile(n, w, cin, sq, budget_bytes=6 << 20, min_steps=4):
    # VMEM-budget-derived row tile (double-buffered bf16 in/out blocks plus the
    # in-kernel f32/bf16 temporaries); keeps v5e's 16 MiB scoped default safe
    # and guarantees >= min_steps grid steps so v7x megacore pipelining engages.
    per_row = w * (2 * 2 * cin          # input block, bf16, 2 buffers
                   + 2 * 2 * (2 * sq)   # output block, bf16, 2 buffers
                   + 4 * sq             # f32 squeeze activations
                   + 2 * 4 * sq         # bf16 staging (padded + 3*sq LHS)
                   + 4 * 2 * sq)        # f32 upconv result
    tr = max(1, budget_bytes // max(per_row, 1))
    tr = min(tr, max(1, -(-n // min_steps)))    # >= min_steps steps when possible
    tr = min(tr, n)
    if tr > 8:
        tr = (tr // 8) * 8
    return int(tr)


def squeeze_upconv(x_rows, sq_w, sq_b, w_up, up_b2):
    """x_rows: [B*H, W, Cin] bf16 -> interleaved [B*H, W, 2*sq] bf16."""
    n, w, cin = x_rows.shape
    sq = sq_w.shape[1]
    tr = _pick_row_tile(n, w, cin, sq)
    grid = pl.cdiv(n, tr)                 # ragged last block: masked OOB writes,
    return pl.pallas_call(                # safe because mixing is within-row only.
        _squeeze_upconv_kernel,
        out_shape=jax.ShapeDtypeStruct((n, w, 2 * sq), jnp.bfloat16),
        grid=(grid,),
        in_specs=[
            pl.BlockSpec((tr, w, cin), lambda i: (i, 0, 0)),
            pl.BlockSpec((cin, sq), lambda i: (0, 0)),
            pl.BlockSpec((1, sq), lambda i: (0, 0)),
            pl.BlockSpec((3 * sq, 2 * sq), lambda i: (0, 0)),
            pl.BlockSpec((1, 2 * sq), lambda i: (0, 0)),
        ],
        out_specs=pl.BlockSpec((tr, w, 2 * sq), lambda i: (i, 0, 0)),
        compiler_params=pltpu.CompilerParams(dimension_semantics=("parallel",)),
    )(x_rows, sq_w, sq_b, w_up, up_b2)


# ----------------------------------------------------------------------------
# Kernel B: expand1x1 (+BN+ReLU) and RangeConv2d branch (two 3x3 convs as 9
#           accumulating tap-matmuls each, norm1+LeakyReLU, x - |x*d - xd|,
#           expand3x3_bn+ReLU) with the channel concat, H-row tiled with halo.
# ----------------------------------------------------------------------------
def _expand_range_kernel(xm_ref, xt_ref, xb_ref, dm_ref, dt_ref, db_ref,
                         e1w_ref, e1b_ref, w3_ref, rb_ref, e3s_ref, e3b_ref,
                         o_ref):
    _, th, w2, sq = xm_ref.shape
    e1 = e1w_ref.shape[1]
    e3 = rb_ref.shape[1]
    n = th * w2
    i = pl.program_id(1)
    n_h = pl.num_programs(1)

    x_main = xm_ref[0]                                        # (th, w2, sq) bf16
    # Halo rows come from the neighbouring H-tiles (clamped index maps); at the
    # image boundary the clamped row is gated to zero -> correct zero padding.
    x_top = xt_ref[0] * (i > 0).astype(jnp.bfloat16)          # (1, w2, sq)
    x_bot = xb_ref[0] * (i < n_h - 1).astype(jnp.bfloat16)

    # ---- expand1x1: 1x1 conv (BN scale folded) + ReLU on the center rows ----
    out1 = jnp.dot(x_main.reshape(n, sq), e1w_ref[...],
                   preferred_element_type=jnp.float32) + e1b_ref[...]
    out1 = jnp.maximum(out1, 0.0)

    # ---- shared zero-padded bf16 staging for both conv branches -------------
    zc = jnp.zeros((th + 2, 1, sq), jnp.bfloat16)
    xu_pad = jnp.concatenate([x_top, x_main, x_bot], axis=0)   # (th+2, w2, sq)
    xu_pad = jnp.concatenate([zc, xu_pad, zc], axis=1)         # (th+2, w2+2, sq)

    dn_main = dm_ref[0]                                        # (th, w2, 1) f32
    dn_pad = jnp.concatenate([dt_ref[0], dn_main, db_ref[0]], axis=0)
    zd = jnp.zeros((th + 2, 1, 1), jnp.float32)
    dn_pad = jnp.concatenate([zd, dn_pad, zd], axis=1)         # (th+2, w2+2, 1)
    xd_pad = (xu_pad.astype(jnp.float32) * dn_pad).astype(jnp.bfloat16)

    # ---- two 3x3 convs as 9 accumulating tap-matmuls each (no im2col) -------
    w3 = w3_ref[...]                                           # (9, sq, e3) bf16
    cx = jnp.zeros((n, e3), jnp.float32)
    cxd = jnp.zeros((n, e3), jnp.float32)
    for dy in range(3):
        for dx in range(3):
            k = dy * 3 + dx
            cx = cx + jnp.dot(xu_pad[dy:dy + th, dx:dx + w2, :].reshape(n, sq),
                              w3[k], preferred_element_type=jnp.float32)
            cxd = cxd + jnp.dot(xd_pad[dy:dy + th, dx:dx + w2, :].reshape(n, sq),
                                w3[k], preferred_element_type=jnp.float32)
    cx = cx + rb_ref[...]                                      # norm1 BN folded
    cxd = cxd + rb_ref[...]
    cx = jnp.where(cx >= 0.0, cx, 0.01 * cx)                   # LeakyReLU
    cxd = jnp.where(cxd >= 0.0, cxd, 0.01 * cxd)

    dn_flat = dn_main.reshape(n, 1)
    rr = cx - jnp.abs(cx * dn_flat - cxd)                      # x - |x1 - xd|
    out3 = jnp.maximum(rr * e3s_ref[...] + e3b_ref[...], 0.0)  # expand3x3_bn + ReLU

    # ---- concat([expand1x1, expand3x3]) written directly, bf16 --------------
    o_ref[0] = jnp.concatenate([out1, out3], axis=-1).reshape(
        th, w2, e1 + e3).astype(o_ref.dtype)


def _pick_h_tile(h, w2, sq, cout, budget_bytes=8 << 20):
    # VMEM-budget-derived H row tile; th must divide H (so no ragged conv tile),
    # and we prefer >= 2 H-tiles so grid = (B, n_h) has enough steps for
    # pipelining / megacore sharding.
    per_row = w2 * (2 * 2 * sq           # x_up main block, bf16, double buffered
                    + 2 * 4              # dn block, f32, double buffered
                    + 2 * 2 * cout       # output block, bf16, double buffered
                    + 2 * 2 * sq         # xu_pad + xd_pad bf16 staging
                    + 4                  # dn_pad f32
                    + 4 * 3 * cout)      # f32 temporaries (out1 / cx / cxd)
    cap = max(1, budget_bytes // max(per_row, 1))
    if h >= 2:
        cap = min(cap, h // 2)
    th = 1
    for d in range(1, h + 1):
        if h % d == 0 and d <= cap:
            th = d
    return th


def expand_range(x_up, dn, e1_w, e1_b, w3, r_b, e3_s, e3_b):
    bsz, h, w2, sq = x_up.shape
    e1 = e1_w.shape[1]
    e3 = w3.shape[2]
    th = _pick_h_tile(h, w2, sq, e1 + e3)
    n_h = h // th

    # Three Blocked views of the same arrays supply the +/-1 row halo with
    # minimal extra DMA (2 rows per tile); index maps clamp at the image edge
    # and the kernel gates the clamped row to zero.
    in_specs = [
        pl.BlockSpec((1, th, w2, sq), lambda b, i: (b, i, 0, 0)),
        pl.BlockSpec((1, 1, w2, sq),
                     lambda b, i: (b, jnp.maximum(i * th - 1, 0), 0, 0)),
        pl.BlockSpec((1, 1, w2, sq),
                     lambda b, i: (b, jnp.minimum((i + 1) * th, h - 1), 0, 0)),
        pl.BlockSpec((1, th, w2, 1), lambda b, i: (b, i, 0, 0)),
        pl.BlockSpec((1, 1, w2, 1),
                     lambda b, i: (b, jnp.maximum(i * th - 1, 0), 0, 0)),
        pl.BlockSpec((1, 1, w2, 1),
                     lambda b, i: (b, jnp.minimum((i + 1) * th, h - 1), 0, 0)),
        pl.BlockSpec((sq, e1), lambda b, i: (0, 0)),
        pl.BlockSpec((1, e1), lambda b, i: (0, 0)),
        pl.BlockSpec((9, sq, e3), lambda b, i: (0, 0, 0)),
        pl.BlockSpec((1, e3), lambda b, i: (0, 0)),
        pl.BlockSpec((1, e3), lambda b, i: (0, 0)),
        pl.BlockSpec((1, e3), lambda b, i: (0, 0)),
    ]
    return pl.pallas_call(
        _expand_range_kernel,
        out_shape=jax.ShapeDtypeStruct((bsz, h, w2, e1 + e3), jnp.bfloat16),
        grid=(bsz, n_h),
        in_specs=in_specs,
        out_specs=pl.BlockSpec((1, th, w2, e1 + e3), lambda b, i: (b, i, 0, 0)),
        compiler_params=pltpu.CompilerParams(
            dimension_semantics=("parallel", "parallel")),
    )(x_up, x_up, x_up, dn, dn, dn, e1_w, e1_b, w3, r_b, e3_s, e3_b)


# ----------------------------------------------------------------------------
# BN folding and parameter setup
# ----------------------------------------------------------------------------
def fold_bn(gamma, beta, mean, var, conv_bias=None, eps=1e-5):
    scale = gamma / jnp.sqrt(var + eps)
    shift = beta - mean * scale
    if conv_bias is not None:
        shift = shift + conv_bias * scale
    return scale.reshape(1, -1), shift.reshape(1, -1)


def init_params(key, inplanes, sq, e1, e3):
    ks = jax.random.split(key, 12)

    def bn_params(k, c):
        k1, k2, k3, k4 = jax.random.split(k, 4)
        gamma = 1.0 + 0.1 * jax.random.normal(k1, (c,), jnp.float32)
        beta = 0.1 * jax.random.normal(k2, (c,), jnp.float32)
        mean = 0.1 * jax.random.normal(k3, (c,), jnp.float32)
        var = 1.0 + 0.1 * jax.random.uniform(k4, (c,), jnp.float32)
        return (gamma, beta, mean, var)

    p = {}
    p["squeeze_w_oihw"] = 0.2 * jax.random.normal(ks[0], (sq, inplanes, 1, 1), jnp.float32)
    p["squeeze_b"] = 0.1 * jax.random.normal(ks[1], (sq,), jnp.float32)
    p["squeeze_bn"] = bn_params(ks[2], sq)
    p["upconv_w"] = 0.2 * jax.random.normal(ks[3], (sq, sq, 1, 4), jnp.float32)  # [in,out,1,4]
    p["upconv_b"] = 0.1 * jax.random.normal(ks[4], (sq,), jnp.float32)
    p["e1_w_oihw"] = 0.2 * jax.random.normal(ks[5], (e1, sq, 1, 1), jnp.float32)
    p["e1_b"] = 0.1 * jax.random.normal(ks[6], (e1,), jnp.float32)
    p["e1_bn"] = bn_params(ks[7], e1)
    p["r_w_oihw"] = 0.2 * jax.random.normal(ks[8], (e3, sq, 3, 3), jnp.float32)
    p["r_b"] = 0.1 * jax.random.normal(ks[9], (e3,), jnp.float32)
    p["r_bn"] = bn_params(ks[10], e3)      # RangeConv2d.norm1
    p["e3_bn"] = bn_params(ks[11], e3)     # expand3x3_bn
    return p


# ----------------------------------------------------------------------------
# RangeFireUp forward (stride == 2; stride != 2 is undefined in the PyTorch code)
# ----------------------------------------------------------------------------
def range_fire_up_forward(x_nchw, depth, params):
    # x_nchw: [B, inplanes, H, W];  depth: [B, H, 2W] (matches post-upconv spatial)
    b, cin, h, w = x_nchw.shape
    # bf16 input folded into the NCHW->NHWC transpose (halves kernel A's DMA).
    x = jnp.transpose(x_nchw, (0, 2, 3, 1)).astype(jnp.bfloat16)

    # ---- fold eval-mode BN: scale into weights, shift into bias; bf16 MXU ----
    s_scale, s_shift = fold_bn(*params["squeeze_bn"], params["squeeze_b"])
    sq_w = (params["squeeze_w_oihw"][:, :, 0, 0].T * s_scale).astype(jnp.bfloat16)
    sq = sq_w.shape[1]

    # Block weight for the single-matmul upconv: LHS order is [xs | prev | next].
    wt = params["upconv_w"]                                           # [in, out, 1, 4]
    wk0, wk1, wk2, wk3 = (wt[:, :, 0, k] for k in range(4))
    z = jnp.zeros((sq, sq), jnp.float32)
    w_up = jnp.concatenate([
        jnp.concatenate([wk1, wk2], axis=1),
        jnp.concatenate([wk3, z], axis=1),
        jnp.concatenate([z, wk0], axis=1)], axis=0).astype(jnp.bfloat16)   # (3sq, 2sq)
    up_b = params["upconv_b"].reshape(1, -1)
    up_b2 = jnp.concatenate([up_b, up_b], axis=-1)                         # (1, 2sq)

    e1_scale, e1_shift = fold_bn(*params["e1_bn"], params["e1_b"])
    e1_w = (params["e1_w_oihw"][:, :, 0, 0].T * e1_scale).astype(jnp.bfloat16)

    r_scale, r_shift = fold_bn(*params["r_bn"], params["r_b"])
    w3 = (jnp.transpose(params["r_w_oihw"], (2, 3, 1, 0)) * r_scale
          ).reshape(9, sq, -1).astype(jnp.bfloat16)                        # (9, sq, e3)

    e3_scale, e3_shift = fold_bn(*params["e3_bn"])

    # ---- fused squeeze + upconv; interleaved even/odd, lane-dense output ----
    x_up = squeeze_upconv(x.reshape(b * h, w, cin), sq_w, s_shift, w_up, up_b2)
    x_up = x_up.reshape(b, h, 2 * w, sq)            # free view of the interleave

    # ---- depth / max(depth, dim=0) precomputed as dn (eps-guarded inverse) --
    depth = depth.astype(jnp.float32)
    inv_max = 1.0 / jnp.maximum(jnp.max(depth, axis=0, keepdims=True), 1e-12)
    dn = (depth * inv_max)[..., None]               # [B, H, 2W, 1] f32

    # ---- fused expand1x1 + RangeConv2d + expand3x3_bn + concat (H-tiled) ----
    out = expand_range(x_up, dn, e1_w, e1_shift, w3, r_shift, e3_scale, e3_shift)
    # Restore module semantics: NCHW, f32 (cast fused into the transpose copy).
    return jnp.transpose(out, (0, 3, 1, 2)).astype(jnp.float32)


# ----------------------------------------------------------------------------
# Pure-JAX reference (eval-mode BN, HIGHEST precision), for correctness checking
# ----------------------------------------------------------------------------
def reference_forward(x, depth, p):
    eps = 1e-5
    hp = lax.Precision.HIGHEST

    def bn(y, prm):
        g, b2, m, v = prm
        return ((y - m[None, :, None, None]) / jnp.sqrt(v + eps)[None, :, None, None]
                * g[None, :, None, None] + b2[None, :, None, None])

    def conv(y, w, b2, pad):
        o = lax.conv_general_dilated(y, w, (1, 1), ((pad, pad), (pad, pad)),
                                     dimension_numbers=("NCHW", "OIHW", "NCHW"),
                                     precision=hp)
        return o + b2[None, :, None, None]

    relu = lambda y: jnp.maximum(y, 0.0)
    lrelu = lambda y: jnp.where(y >= 0.0, y, 0.01 * y)

    xs = relu(bn(conv(x, p["squeeze_w_oihw"], p["squeeze_b"], 0), p["squeeze_bn"]))
    # ConvTranspose2d as lhs-dilated conv with flipped, in/out-swapped kernel
    w_conv = jnp.transpose(p["upconv_w"], (1, 0, 2, 3))[:, :, ::-1, ::-1]
    up = lax.conv_general_dilated(xs, w_conv, (1, 1), ((0, 0), (2, 2)),
                                  lhs_dilation=(1, 2),
                                  dimension_numbers=("NCHW", "OIHW", "NCHW"),
                                  precision=hp)
    up = relu(up + p["upconv_b"][None, :, None, None])
    out1 = relu(bn(conv(up, p["e1_w_oihw"], p["e1_b"], 0), p["e1_bn"]))

    dn = (depth / jnp.max(depth, axis=0))[:, None, :, :]

    def rconv(y):
        return lrelu(bn(conv(y, p["r_w_oihw"], p["r_b"], 1), p["r_bn"]))

    cx = rconv(up)
    cxd = rconv(up * dn)
    rr = cx - jnp.abs(cx * dn - cxd)
    out3 = relu(bn(rr, p["e3_bn"]))
    return jnp.concatenate([out1, out3], axis=1)


if __name__ == "__main__":
    inplanes, squeeze_planes, expand1x1_planes, expand3x3_planes = 8, 8, 16, 16
    B, H, W = 2, 8, 8                        # input spatial; depth matches upsampled width 2W

    key = jax.random.PRNGKey(0)
    kx, kd, kp = jax.random.split(key, 3)
    x = jax.random.normal(kx, (B, inplanes, H, W), jnp.float32)
    depth = jax.random.uniform(kd, (B, H, 2 * W), jnp.float32, minval=0.1, maxval=1.0)
    params = init_params(kp, inplanes, squeeze_planes, expand1x1_planes, expand3x3_planes)

    out = jax.jit(range_fire_up_forward)(x, depth, params)
    out = jax.block_until_ready(out)

    assert out.shape == (B, expand1x1_planes + expand3x3_planes, H, 2 * W), out.shape
    ref = reference_forward(x, depth, params)
    max_err = float(jnp.max(jnp.abs(out - ref)))
    # bf16 MXU operands / bf16 inter-kernel activations / bf16 final store vs
    # HIGHEST-precision f32 reference: expect ~1e-2-level absolute error.
    assert max_err < 1e-1, f"max abs err {max_err}"
    print("KERNEL_OK")
</pallas_src>

<mosaic_0001>
module attributes {stable_mosaic.version = 11 : i64} {
  func.func @_squeeze_upconv_kernel(%arg0: i32, %arg1: memref<4x8x8xbf16, #tpu.memory_space<vmem>>, %arg2: memref<8x8xbf16, #tpu.memory_space<vmem>>, %arg3: memref<1x8xf32, #tpu.memory_space<vmem>>, %arg4: memref<24x16xbf16, #tpu.memory_space<vmem>>, %arg5: memref<1x16xf32, #tpu.memory_space<vmem>>, %arg6: memref<4x8x16xbf16, #tpu.memory_space<vmem>>) attributes {dimension_semantics = [#tpu.dimension_semantics<parallel>], iteration_bounds = array<i64: 4>, scalar_prefetch = 0 : i64, scratch_operands = 0 : i64, tpu.core_type = #tpu.core_type<tc>, window_params = [{transform_indices = @transform_0, window_bounds = array<i64: 4, 8, 8>}, {pipeline_mode = #tpu.pipeline_mode<synchronous>, transform_indices = @transform_1, window_bounds = array<i64: 8, 8>}, {pipeline_mode = #tpu.pipeline_mode<synchronous>, transform_indices = @transform_2, window_bounds = array<i64: 1, 8>}, {pipeline_mode = #tpu.pipeline_mode<synchronous>, transform_indices = @transform_3, window_bounds = array<i64: 24, 16>}, {pipeline_mode = #tpu.pipeline_mode<synchronous>, transform_indices = @transform_4, window_bounds = array<i64: 1, 16>}, {transform_indices = @transform_5, window_bounds = array<i64: 4, 8, 16>}]} {
    %c0 = arith.constant 0 : index
    %c0_0 = arith.constant 0 : index
    %c0_1 = arith.constant 0 : index
    %0 = vector.load %arg1[%c0, %c0_0, %c0_1] : memref<4x8x8xbf16, #tpu.memory_space<vmem>>, vector<4x8x8xbf16>
    %1 = vector.shape_cast %0 : vector<4x8x8xbf16> to vector<32x8xbf16>
    %c0_2 = arith.constant 0 : index
    %c0_3 = arith.constant 0 : index
    %2 = vector.load %arg2[%c0_2, %c0_3] : memref<8x8xbf16, #tpu.memory_space<vmem>>, vector<8x8xbf16>
    %cst = arith.constant dense<0.000000e+00> : vector<32x8xf32>
    %3 = tpu.matmul %1, %2, %cst {dimension_numbers = #tpu.dot_dimension_numbers<[1], [0], [0], [1], [0, 0, 1, 1], [], []>} : vector<32x8xbf16>, vector<8x8xbf16>, vector<32x8xf32> -> vector<32x8xf32>
    %c0_4 = arith.constant 0 : index
    %c0_5 = arith.constant 0 : index
    %4 = vector.load %arg3[%c0_4, %c0_5] : memref<1x8xf32, #tpu.memory_space<vmem>>, vector<1x8xf32>
    %5 = vector.broadcast %4 : vector<1x8xf32> to vector<32x8xf32>
    %6 = arith.addf %3, %5 : vector<32x8xf32>
    %cst_6 = arith.constant 0.000000e+00 : f32
    %7 = vector.broadcast %cst_6 : f32 to vector<32x8xf32>
    %8 = arith.maximumf %6, %7 : vector<32x8xf32>
    %9 = vector.shape_cast %8 : vector<32x8xf32> to vector<4x8x8xf32>
    %10 = arith.truncf %9 : vector<4x8x8xf32> to vector<4x8x8xbf16>
    %cst_7 = arith.constant 0.000000e+00 : bf16
    %11 = vector.broadcast %cst_7 : bf16 to vector<4x1x8xbf16>
    %12 = tpu.concatenate %11, %10, %11 in 1 : vector<4x1x8xbf16>, vector<4x8x8xbf16>, vector<4x1x8xbf16> -> vector<4x10x8xbf16>
    %13 = vector.extract_strided_slice %12 {offsets = [0, 1, 0], sizes = [4, 8, 8], strides = [1, 1, 1]} : vector<4x10x8xbf16> to vector<4x8x8xbf16>
    %14 = vector.extract_strided_slice %12 {offsets = [0, 0, 0], sizes = [4, 8, 8], strides = [1, 1, 1]} : vector<4x10x8xbf16> to vector<4x8x8xbf16>
    %15 = vector.extract_strided_slice %12 {offsets = [0, 2, 0], sizes = [4, 8, 8], strides = [1, 1, 1]} : vector<4x10x8xbf16> to vector<4x8x8xbf16>
    %16 = tpu.concatenate %13, %14, %15 in 2 : vector<4x8x8xbf16>, vector<4x8x8xbf16>, vector<4x8x8xbf16> -> vector<4x8x24xbf16>
    %17 = vector.shape_cast %16 : vector<4x8x24xbf16> to vector<32x24xbf16>
    %c0_8 = arith.constant 0 : index
    %c0_9 = arith.constant 0 : index
    %18 = vector.load %arg4[%c0_8, %c0_9] : memref<24x16xbf16, #tpu.memory_space<vmem>>, vector<24x16xbf16>
    %cst_10 = arith.constant dense<0.000000e+00> : vector<32x16xf32>
    %19 = tpu.matmul %17, %18, %cst_10 {dimension_numbers = #tpu.dot_dimension_numbers<[1], [0], [0], [1], [0, 0, 1, 1], [], []>} : vector<32x24xbf16>, vector<24x16xbf16>, vector<32x16xf32> -> vector<32x16xf32>
    %c0_11 = arith.constant 0 : index
    %c0_12 = arith.constant 0 : index
    %20 = vector.load %arg5[%c0_11, %c0_12] : memref<1x16xf32, #tpu.memory_space<vmem>>, vector<1x16xf32>
    %21 = vector.broadcast %20 : vector<1x16xf32> to vector<32x16xf32>
    %22 = arith.addf %19, %21 : vector<32x16xf32>
    %cst_13 = arith.constant 0.000000e+00 : f32
    %23 = vector.broadcast %cst_13 : f32 to vector<32x16xf32>
    %24 = arith.maximumf %22, %23 : vector<32x16xf32>
    %25 = vector.shape_cast %24 : vector<32x16xf32> to vector<4x8x16xf32>
    %26 = arith.truncf %25 : vector<4x8x16xf32> to vector<4x8x16xbf16>
    %c0_14 = arith.constant 0 : index
    %c0_15 = arith.constant 0 : index
    %c0_16 = arith.constant 0 : index
    %27 = vector.load %arg6[%c0_14, %c0_15, %c0_16] : memref<4x8x16xbf16, #tpu.memory_space<vmem>>, vector<4x8x16xbf16>
    tpu.vector_store %arg6[%c0_14, %c0_15, %c0_16], %26 {strides = array<i32>} : memref<4x8x16xbf16, #tpu.memory_space<vmem>>, vector<4x8x16xbf16>,
    return
  }
  func.func @transform_0(%arg0: i32) -> (i32, i32, i32) {
    %c0_i32 = arith.constant 0 : i32
    %c0_i32_0 = arith.constant 0 : i32
    %c0_i32_1 = arith.constant 0 : i32
    return %arg0, %c0_i32, %c0_i32_0 : i32, i32, i32
  }
  func.func @transform_1(%arg0: i32) -> (i32, i32) {
    %c0_i32 = arith.constant 0 : i32
    %c0_i32_0 = arith.constant 0 : i32
    %c0_i32_1 = arith.constant 0 : i32
    return %c0_i32, %c0_i32_0 : i32, i32
  }
  func.func @transform_2(%arg0: i32) -> (i32, i32) {
    %c0_i32 = arith.constant 0 : i32
    %c0_i32_0 = arith.constant 0 : i32
    %c0_i32_1 = arith.constant 0 : i32
    return %c0_i32, %c0_i32_0 : i32, i32
  }
  func.func @transform_3(%arg0: i32) -> (i32, i32) {
    %c0_i32 = arith.constant 0 : i32
    %c0_i32_0 = arith.constant 0 : i32
    %c0_i32_1 = arith.constant 0 : i32
    return %c0_i32, %c0_i32_0 : i32, i32
  }
  func.func @transform_4(%arg0: i32) -> (i32, i32) {
    %c0_i32 = arith.constant 0 : i32
    %c0_i32_0 = arith.constant 0 : i32
    %c0_i32_1 = arith.constant 0 : i32
    return %c0_i32, %c0_i32_0 : i32, i32
  }
  func.func @transform_5(%arg0: i32) -> (i32, i32, i32) {
    %c0_i32 = arith.constant 0 : i32
    %c0_i32_0 = arith.constant 0 : i32
    %c0_i32_1 = arith.constant 0 : i32
    return %arg0, %c0_i32, %c0_i32_0 : i32, i32, i32
  }
}

module attributes {stable_mosaic.version = 11 : i64} {
  func.func @_expand_range_kernel(%arg0: i32, %arg1: i32, %arg2: memref<1x4x16x8xbf16, #tpu.memory_space<vmem>>, %arg3: memref<1x1x16x8xbf16, #tpu.memory_space<vmem>>, %arg4: memref<1x1x16x8xbf16, #tpu.memory_space<vmem>>, %arg5: memref<1x4x16x1xf32, #tpu.memory_space<vmem>>, %arg6: memref<1x1x16x1xf32, #tpu.memory_space<vmem>>, %arg7: memref<1x1x16x1xf32, #tpu.memory_space<vmem>>, %arg8: memref<8x16xbf16, #tpu.memory_space<vmem>>, %arg9: memref<1x16xf32, #tpu.memory_space<vmem>>, %arg10: memref<9x8x16xbf16, #tpu.memory_space<vmem>>, %arg11: memref<1x16xf32, #tpu.memory_space<vmem>>, %arg12: memref<1x16xf32, #tpu.memory_space<vmem>>, %arg13: memref<1x16xf32, #tpu.memory_space<vmem>>, %arg14: memref<1x4x16x32xbf16, #tpu.memory_space<vmem>>) attributes {dimension_semantics = [#tpu.dimension_semantics<parallel>, #tpu.dimension_semantics<parallel>], iteration_bounds = array<i64: 2, 2>, scalar_prefetch = 0 : i64, scratch_operands = 0 : i64, tpu.core_type = #tpu.core_type<tc>, window_params = [{transform_indices = @transform_0, window_bounds = array<i64: 1, 4, 16, 8>}, {transform_indices = @transform_1, window_bounds = array<i64: 1, 1, 16, 8>}, {transform_indices = @transform_2, window_bounds = array<i64: 1, 1, 16, 8>}, {transform_indices = @transform_3, window_bounds = array<i64: 1, 4, 16, 1>}, {transform_indices = @transform_4, window_bounds = array<i64: 1, 1, 16, 1>}, {transform_indices = @transform_5, window_bounds = array<i64: 1, 1, 16, 1>}, {pipeline_mode = #tpu.pipeline_mode<synchronous>, transform_indices = @transform_6, window_bounds = array<i64: 8, 16>}, {pipeline_mode = #tpu.pipeline_mode<synchronous>, transform_indices = @transform_7, window_bounds = array<i64: 1, 16>}, {pipeline_mode = #tpu.pipeline_mode<synchronous>, transform_indices = @transform_8, window_bounds = array<i64: 9, 8, 16>}, {pipeline_mode = #tpu.pipeline_mode<synchronous>, transform_indices = @transform_9, window_bounds = array<i64: 1, 16>}, {pipeline_mode = #tpu.pipeline_mode<synchronous>, transform_indices = @transform_10, window_bounds = array<i64: 1, 16>}, {pipeline_mode = #tpu.pipeline_mode<synchronous>, transform_indices = @transform_11, window_bounds = array<i64: 1, 16>}, {transform_indices = @transform_12, window_bounds = array<i64: 1, 4, 16, 32>}]} {
    %c0 = arith.constant 0 : index
    %c0_0 = arith.constant 0 : index
    %c0_1 = arith.constant 0 : index
    %c0_2 = arith.constant 0 : index
    %0 = vector.load %arg2[%c0, %c0_0, %c0_1, %c0_2] : memref<1x4x16x8xbf16, #tpu.memory_space<vmem>>, vector<1x4x16x8xbf16>
    %1 = vector.shape_cast %0 : vector<1x4x16x8xbf16> to vector<4x16x8xbf16>
    %c0_3 = arith.constant 0 : index
    %c0_4 = arith.constant 0 : index
    %c0_5 = arith.constant 0 : index
    %c0_6 = arith.constant 0 : index
    %2 = vector.load %arg3[%c0_3, %c0_4, %c0_5, %c0_6] : memref<1x1x16x8xbf16, #tpu.memory_space<vmem>>, vector<1x1x16x8xbf16>
    %3 = vector.shape_cast %2 : vector<1x1x16x8xbf16> to vector<1x16x8xbf16>
    %c0_i32 = arith.constant 0 : i32
    %4 = arith.cmpi sgt, %arg1, %c0_i32 : i32
    %5 = arith.extui %4 : i1 to i32
    %6 = arith.sitofp %5 : i32 to f32
    %7 = arith.truncf %6 : f32 to bf16
    %8 = vector.broadcast %7 : bf16 to vector<1x16x8xbf16>
    %9 = arith.mulf %3, %8 : vector<1x16x8xbf16>
    %c0_7 = arith.constant 0 : index
    %c0_8 = arith.constant 0 : index
    %c0_9 = arith.constant 0 : index
    %c0_10 = arith.constant 0 : index
    %10 = vector.load %arg4[%c0_7, %c0_8, %c0_9, %c0_10] : memref<1x1x16x8xbf16, #tpu.memory_space<vmem>>, vector<1x1x16x8xbf16>
    %11 = vector.shape_cast %10 : vector<1x1x16x8xbf16> to vector<1x16x8xbf16>
    %c1_i32 = arith.constant 1 : i32
    %12 = arith.cmpi slt, %arg1, %c1_i32 : i32
    %13 = arith.extui %12 : i1 to i32
    %14 = arith.sitofp %13 : i32 to f32
    %15 = arith.truncf %14 : f32 to bf16
    %16 = vector.broadcast %15 : bf16 to vector<1x16x8xbf16>
    %17 = arith.mulf %11, %16 : vector<1x16x8xbf16>
    %18 = vector.shape_cast %1 : vector<4x16x8xbf16> to vector<64x8xbf16>
    %c0_11 = arith.constant 0 : index
    %c0_12 = arith.constant 0 : index
    %19 = vector.load %arg8[%c0_11, %c0_12] : memref<8x16xbf16, #tpu.memory_space<vmem>>, vector<8x16xbf16>
    %cst = arith.constant dense<0.000000e+00> : vector<64x16xf32>
    %20 = tpu.matmul %18, %19, %cst {dimension_numbers = #tpu.dot_dimension_numbers<[1], [0], [0], [1], [0, 0, 1, 1], [], []>} : vector<64x8xbf16>, vector<8x16xbf16>, vector<64x16xf32> -> vector<64x16xf32>
    %c0_13 = arith.constant 0 : index
    %c0_14 = arith.constant 0 : index
    %21 = vector.load %arg9[%c0_13, %c0_14] : memref<1x16xf32, #tpu.memory_space<vmem>>, vector<1x16xf32>
    %22 = vector.broadcast %21 : vector<1x16xf32> to vector<64x16xf32>
    %23 = arith.addf %20, %22 : vector<64x16xf32>
    %cst_15 = arith.constant 0.000000e+00 : f32
    %24 = vector.broadcast %cst_15 : f32 to vector<64x16xf32>
    %25 = arith.maximumf %23, %24 : vector<64x16xf32>
    %cst_16 = arith.constant 0.000000e+00 : bf16
    %26 = vector.broadcast %cst_16 : bf16 to vector<6x1x8xbf16>
    %27 = tpu.concatenate %9, %1, %17 in 0 : vector<1x16x8xbf16>, vector<4x16x8xbf16>, vector<1x16x8xbf16> -> vector<6x16x8xbf16>
    %28 = tpu.concatenate %26, %27, %26 in 1 : vector<6x1x8xbf16>, vector<6x16x8xbf16>, vector<6x1x8xbf16> -> vector<6x18x8xbf16>
    %c0_17 = arith.constant 0 : index
    %c0_18 = arith.constant 0 : index
    %c0_19 = arith.constant 0 : index
    %c0_20 = arith.constant 0 : index
    %29 = vector.load %arg5[%c0_17, %c0_18, %c0_19, %c0_20] : memref<1x4x16x1xf32, #tpu.memory_space<vmem>>, vector<1x4x16x1xf32>
    %30 = vector.shape_cast %29 : vector<1x4x16x1xf32> to vector<4x16x1xf32>
    %c0_21 = arith.constant 0 : index
    %c0_22 = arith.constant 0 : index
    %c0_23 = arith.constant 0 : index
    %c0_24 = arith.constant 0 : index
    %31 = vector.load %arg6[%c0_21, %c0_22, %c0_23, %c0_24] : memref<1x1x16x1xf32, #tpu.memory_space<vmem>>, vector<1x1x16x1xf32>
    %32 = vector.shape_cast %31 : vector<1x1x16x1xf32> to vector<1x16x1xf32>
    %c0_25 = arith.constant 0 : index
    %c0_26 = arith.constant 0 : index
    %c0_27 = arith.constant 0 : index
    %c0_28 = arith.constant 0 : index
    %33 = vector.load %arg7[%c0_25, %c0_26, %c0_27, %c0_28] : memref<1x1x16x1xf32, #tpu.memory_space<vmem>>, vector<1x1x16x1xf32>
    %34 = vector.shape_cast %33 : vector<1x1x16x1xf32> to vector<1x16x1xf32>
    %35 = tpu.concatenate %32, %30, %34 in 0 : vector<1x16x1xf32>, vector<4x16x1xf32>, vector<1x16x1xf32> -> vector<6x16x1xf32>
    %cst_29 = arith.constant 0.000000e+00 : f32
    %36 = vector.broadcast %cst_29 : f32 to vector<6x1x1xf32>
    %37 = tpu.concatenate %36, %35, %36 in 1 : vector<6x1x1xf32>, vector<6x16x1xf32>, vector<6x1x1xf32> -> vector<6x18x1xf32>
    %38 = arith.extf %28 : vector<6x18x8xbf16> to vector<6x18x8xf32>
    %39 = vector.broadcast %37 : vector<6x18x1xf32> to vector<6x18x8xf32>
    %40 = arith.mulf %38, %39 : vector<6x18x8xf32>
    %41 = arith.truncf %40 : vector<6x18x8xf32> to vector<6x18x8xbf16>
    %c0_30 = arith.constant 0 : index
    %c0_31 = arith.constant 0 : index
    %c0_32 = arith.constant 0 : index
    %42 = vector.load %arg10[%c0_30, %c0_31, %c0_32] : memref<9x8x16xbf16, #tpu.memory_space<vmem>>, vector<9x8x16xbf16>
    %cst_33 = arith.constant 0.000000e+00 : f32
    %43 = vector.broadcast %cst_33 : f32 to vector<64x16xf32>
    %cst_34 = arith.constant 0.000000e+00 : f32
    %44 = vector.broadcast %cst_34 : f32 to vector<64x16xf32>
    %45 = vector.extract_strided_slice %28 {offsets = [0, 0, 0], sizes = [4, 16, 8], strides = [1, 1, 1]} : vector<6x18x8xbf16> to vector<4x16x8xbf16>
    %46 = vector.shape_cast %45 : vector<4x16x8xbf16> to vector<64x8xbf16>
    %47 = vector.extract_strided_slice %42 {offsets = [0, 0, 0], sizes = [1, 8, 16], strides = [1, 1, 1]} : vector<9x8x16xbf16> to vector<1x8x16xbf16>
    %48 = vector.shape_cast %47 : vector<1x8x16xbf16> to vector<8x16xbf16>
    %cst_35 = arith.constant dense<0.000000e+00> : vector<64x16xf32>
    %49 = tpu.matmul %46, %48, %cst_35 {dimension_numbers = #tpu.dot_dimension_numbers<[1], [0], [0], [1], [0, 0, 1, 1], [], []>} : vector<64x8xbf16>, vector<8x16xbf16>, vector<64x16xf32> -> vector<64x16xf32>
    %50 = arith.addf %43, %49 : vector<64x16xf32>
    %51 = vector.extract_strided_slice %41 {offsets = [0, 0, 0], sizes = [4, 16, 8], strides = [1, 1, 1]} : vector<6x18x8xbf16> to vector<4x16x8xbf16>
    %52 = vector.shape_cast %51 : vector<4x16x8xbf16> to vector<64x8xbf16>
    %53 = vector.extract_strided_slice %42 {offsets = [0, 0, 0], sizes = [1, 8, 16], strides = [1, 1, 1]} : vector<9x8x16xbf16> to vector<1x8x16xbf16>
    %54 = vector.shape_cast %53 : vector<1x8x16xbf16> to vector<8x16xbf16>
    %cst_36 = arith.constant dense<0.000000e+00> : vector<64x16xf32>
    %55 = tpu.matmul %52, %54, %cst_36 {dimension_numbers = #tpu.dot_dimension_numbers<[1], [0], [0], [1], [0, 0, 1, 1], [], []>} : vector<64x8xbf16>, vector<8x16xbf16>, vector<64x16xf32> -> vector<64x16xf32>
    %56 = arith.addf %44, %55 : vector<64x16xf32>
    %57 = vector.extract_strided_slice %28 {offsets = [0, 1, 0], sizes = [4, 16, 8], strides = [1, 1, 1]} : vector<6x18x8xbf16> to vector<4x16x8xbf16>
    %58 = vector.shape_cast %57 : vector<4x16x8xbf16> to vector<64x8xbf16>
    %59 = vector.extract_strided_slice %42 {offsets = [1, 0, 0], sizes = [1, 8, 16], strides = [1, 1, 1]} : vector<9x8x16xbf16> to vector<1x8x16xbf16>
    %60 = vector.shape_cast %59 : vector<1x8x16xbf16> to vector<8x16xbf16>
    %cst_37 = arith.constant dense<0.000000e+00> : vector<64x16xf32>
    %61 = tpu.matmul %58, %60, %cst_37 {dimension_numbers = #tpu.dot_dimension_numbers<[1], [0], [0], [1], [0, 0, 1, 1], [], []>} : vector<64x8xbf16>, vector<8x16xbf16>, vector<64x16xf32> -> vector<64x16xf32>
    %62 = arith.addf %50, %61 : vector<64x16xf32>
    %63 = vector.extract_strided_slice %41 {offsets = [0, 1, 0], sizes = [4, 16, 8], strides = [1, 1, 1]} : vector<6x18x8xbf16> to vector<4x16x8xbf16>
    %64 = vector.shape_cast %63 : vector<4x16x8xbf16> to vector<64x8xbf16>
    %65 = vector.extract_strided_slice %42 {offsets = [1, 0, 0], sizes = [1, 8, 16], strides = [1, 1, 1]} : vector<9x8x16xbf16> to vector<1x8x16xbf16>
    %66 = vector.shape_cast %65 : vector<1x8x16xbf16> to vector<8x16xbf16>
    %cst_38 = arith.constant dense<0.000000e+00> : vector<64x16xf32>
    %67 = tpu.matmul %64, %66, %cst_38 {dimension_numbers = #tpu.dot_dimension_numbers<[1], [0], [0], [1], [0, 0, 1, 1], [], []>} : vector<64x8xbf16>, vector<8x16xbf16>, vector<64x16xf32> -> vector<64x16xf32>
    %68 = arith.addf %56, %67 : vector<64x16xf32>
    %69 = vector.extract_strided_slice %28 {offsets = [0, 2, 0], sizes = [4, 16, 8], strides = [1, 1, 1]} : vector<6x18x8xbf16> to vector<4x16x8xbf16>
    %70 = vector.shape_cast %69 : vector<4x16x8xbf16> to vector<64x8xbf16>
    %71 = vector.extract_strided_slice %42 {offsets = [2, 0, 0], sizes = [1, 8, 16], strides = [1, 1, 1]} : vector<9x8x16xbf16> to vector<1x8x16xbf16>
    %72 = vector.shape_cast %71 : vector<1x8x16xbf16> to vector<8x16xbf16>
    %cst_39 = arith.constant dense<0.000000e+00> : vector<64x16xf32>
    %73 = tpu.matmul %70, %72, %cst_39 {dimension_numbers = #tpu.dot_dimension_numbers<[1], [0], [0], [1], [0, 0, 1, 1], [], []>} : vector<64x8xbf16>, vector<8x16xbf16>, vector<64x16xf32> -> vector<64x16xf32>
    %74 = arith.addf %62, %73 : vector<64x16xf32>
    %75 = vector.extract_strided_slice %41 {offsets = [0, 2, 0], sizes = [4, 16, 8], strides = [1, 1, 1]} : vector<6x18x8xbf16> to vector<4x16x8xbf16>
    %76 = vector.shape_cast %75 : vector<4x16x8xbf16> to vector<64x8xbf16>
    %77 = vector.extract_strided_slice %42 {offsets = [2, 0, 0], sizes = [1, 8, 16], strides = [1, 1, 1]} : vector<9x8x16xbf16> to vector<1x8x16xbf16>
    %78 = vector.shape_cast %77 : vector<1x8x16xbf16> to vector<8x16xbf16>
    %cst_40 = arith.constant dense<0.000000e+00> : vector<64x16xf32>
    %79 = tpu.matmul %76, %78, %cst_40 {dimension_numbers = #tpu.dot_dimension_numbers<[1], [0], [0], [1], [0, 0, 1, 1], [], []>} : vector<64x8xbf16>, vector<8x16xbf16>, vector<64x16xf32> -> vector<64x16xf32>
    %80 = arith.addf %68, %79 : vector<64x16xf32>
    %81 = vector.extract_strided_slice %28 {offsets = [1, 0, 0], sizes = [4, 16, 8], strides = [1, 1, 1]} : vector<6x18x8xbf16> to vector<4x16x8xbf16>
    %82 = vector.shape_cast %81 : vector<4x16x8xbf16> to vector<64x8xbf16>
    %83 = vector.extract_strided_slice %42 {offsets = [3, 0, 0], sizes = [1, 8, 16], strides = [1, 1, 1]} : vector<9x8x16xbf16> to vector<1x8x16xbf16>
    %84 = vector.shape_cast %83 : vector<1x8x16xbf16> to vector<8x16xbf16>
    %cst_41 = arith.constant dense<0.000000e+00> : vector<64x16xf32>
    %85 = tpu.matmul %82, %84, %cst_41 {dimension_numbers = #tpu.dot_dimension_numbers<[1], [0], [0], [1], [0, 0, 1, 1], [], []>} : vector<64x8xbf16>, vector<8x16xbf16>, vector<64x16xf32> -> vector<64x16xf32>
    %86 = arith.addf %74, %85 : vector<64x16xf32>
    %87 = vector.extract_strided_slice %41 {offsets = [1, 0, 0], sizes = [4, 16, 8], strides = [1, 1, 1]} : vector<6x18x8xbf16> to vector<4x16x8xbf16>
    %88 = vector.shape_cast %87 : vector<4x16x8xbf16> to vector<64x8xbf16>
    %89 = vector.extract_strided_slice %42 {offsets = [3, 0, 0], sizes = [1, 8, 16], strides = [1, 1, 1]} : vector<9x8x16xbf16> to vector<1x8x16xbf16>
    %90 = vector.shape_cast %89 : vector<1x8x16xbf16> to vector<8x16xbf16>
    %cst_42 = arith.constant dense<0.000000e+00> : vector<64x16xf32>
    %91 = tpu.matmul %88, %90, %cst_42 {dimension_numbers = #tpu.dot_dimension_numbers<[1], [0], [0], [1], [0, 0, 1, 1], [], []>} : vector<64x8xbf16>, vector<8x16xbf16>, vector<64x16xf32> -> vector<64x16xf32>
    %92 = arith.addf %80, %91 : vector<64x16xf32>
    %93 = vector.extract_strided_slice %28 {offsets = [1, 1, 0], sizes = [4, 16, 8], strides = [1, 1, 1]} : vector<6x18x8xbf16> to vector<4x16x8xbf16>
    %94 = vector.shape_cast %93 : vector<4x16x8xbf16> to vector<64x8xbf16>
    %95 = vector.extract_strided_slice %42 {offsets = [4, 0, 0], sizes = [1, 8, 16], strides = [1, 1, 1]} : vector<9x8x16xbf16> to vector<1x8x16xbf16>
    %96 = vector.shape_cast %95 : vector<1x8x16xbf16> to vector<8x16xbf16>
    %cst_43 = arith.constant dense<0.000000e+00> : vector<64x16xf32>
    %97 = tpu.matmul %94, %96, %cst_43 {dimension_numbers = #tpu.dot_dimension_numbers<[1], [0], [0], [1], [0, 0, 1, 1], [], []>} : vector<64x8xbf16>, vector<8x16xbf16>, vector<64x16xf32> -> vector<64x16xf32>
    %98 = arith.addf %86, %97 : vector<64x16xf32>
    %99 = vector.extract_strided_slice %41 {offsets = [1, 1, 0], sizes = [4, 16, 8], strides = [1, 1, 1]} : vector<6x18x8xbf16> to vector<4x16x8xbf16>
    %100 = vector.shape_cast %99 : vector<4x16x8xbf16> to vector<64x8xbf16>
    %101 = vector.extract_strided_slice %42 {offsets = [4, 0, 0], sizes = [1, 8, 16], strides = [1, 1, 1]} : vector<9x8x16xbf16> to vector<1x8x16xbf16>
    %102 = vector.shape_cast %101 : vector<1x8x16xbf16> to vector<8x16xbf16>
    %cst_44 = arith.constant dense<0.000000e+00> : vector<64x16xf32>
    %103 = tpu.matmul %100, %102, %cst_44 {dimension_numbers = #tpu.dot_dimension_numbers<[1], [0], [0], [1], [0, 0, 1, 1], [], []>} : vector<64x8xbf16>, vector<8x16xbf16>, vector<64x16xf32> -> vector<64x16xf32>
    %104 = arith.addf %92, %103 : vector<64x16xf32>
    %105 = vector.extract_strided_slice %28 {offsets = [1, 2, 0], sizes = [4, 16, 8], strides = [1, 1, 1]} : vector<6x18x8xbf16> to vector<4x16x8xbf16>
    %106 = vector.shape_cast %105 : vector<4x16x8xbf16> to vector<64x8xbf16>
    %107 = vector.extract_strided_slice %42 {offsets = [5, 0, 0], sizes = [1, 8, 16], strides = [1, 1, 1]} : vector<9x8x16xbf16> to vector<1x8x16xbf16>
    %108 = vector.shape_cast %107 : vector<1x8x16xbf16> to vector<8x16xbf16>
    %cst_45 = arith.constant dense<0.000000e+00> : vector<64x16xf32>
    %109 = tpu.matmul %106, %108, %cst_45 {dimension_numbers = #tpu.dot_dimension_numbers<[1], [0], [0], [1], [0, 0, 1, 1], [], []>} : vector<64x8xbf16>, vector<8x16xbf16>, vector<64x16xf32> -> vector<64x16xf32>
    %110 = arith.addf %98, %109 : vector<64x16xf32>
    %111 = vector.extract_strided_slice %41 {offsets = [1, 2, 0], sizes = [4, 16, 8], strides = [1, 1, 1]} : vector<6x18x8xbf16> to vector<4x16x8xbf16>
    %112 = vector.shape_cast %111 : vector<4x16x8xbf16> to vector<64x8xbf16>
    %113 = vector.extract_strided_slice %42 {offsets = [5, 0, 0], sizes = [1, 8, 16], strides = [1, 1, 1]} : vector<9x8x16xbf16> to vector<1x8x16xbf16>
    %114 = vector.shape_cast %113 : vector<1x8x16xbf16> to vector<8x16xbf16>
    %cst_46 = arith.constant dense<0.000000e+00> : vector<64x16xf32>
    %115 = tpu.matmul %112, %114, %cst_46 {dimension_numbers = #tpu.dot_dimension_numbers<[1], [0], [0], [1], [0, 0, 1, 1], [], []>} : vector<64x8xbf16>, vector<8x16xbf16>, vector<64x16xf32> -> vector<64x16xf32>
    %116 = arith.addf %104, %115 : vector<64x16xf32>
    %117 = vector.extract_strided_slice %28 {offsets = [2, 0, 0], sizes = [4, 16, 8], strides = [1, 1, 1]} : vector<6x18x8xbf16> to vector<4x16x8xbf16>
    %118 = vector.shape_cast %117 : vector<4x16x8xbf16> to vector<64x8xbf16>
    %119 = vector.extract_strided_slice %42 {offsets = [6, 0, 0], sizes = [1, 8, 16], strides = [1, 1, 1]} : vector<9x8x16xbf16> to vector<1x8x16xbf16>
    %120 = vector.shape_cast %119 : vector<1x8x16xbf16> to vector<8x16xbf16>
    %cst_47 = arith.constant dense<0.000000e+00> : vector<64x16xf32>
    %121 = tpu.matmul %118, %120, %cst_47 {dimension_numbers = #tpu.dot_dimension_numbers<[1], [0], [0], [1], [0, 0, 1, 1], [], []>} : vector<64x8xbf16>, vector<8x16xbf16>, vector<64x16xf32> -> vector<64x16xf32>
    %122 = arith.addf %110, %121 : vector<64x16xf32>
    %123 = vector.extract_strided_slice %41 {offsets = [2, 0, 0], sizes = [4, 16, 8], strides = [1, 1, 1]} : vector<6x18x8xbf16> to vector<4x16x8xbf16>
    %124 = vector.shape_cast %123 : vector<4x16x8xbf16> to vector<64x8xbf16>
    %125 = vector.extract_strided_slice %42 {offsets = [6, 0, 0], sizes = [1, 8, 16], strides = [1, 1, 1]} : vector<9x8x16xbf16> to vector<1x8x16xbf16>
    %126 = vector.shape_cast %125 : vector<1x8x16xbf16> to vector<8x16xbf16>
    %cst_48 = arith.constant dense<0.000000e+00> : vector<64x16xf32>
    %127 = tpu.matmul %124, %126, %cst_48 {dimension_numbers = #tpu.dot_dimension_numbers<[1], [0], [0], [1], [0, 0, 1, 1], [], []>} : vector<64x8xbf16>, vector<8x16xbf16>, vector<64x16xf32> -> vector<64x16xf32>
    %128 = arith.addf %116, %127 : vector<64x16xf32>
    %129 = vector.extract_strided_slice %28 {offsets = [2, 1, 0], sizes = [4, 16, 8], strides = [1, 1, 1]} : vector<6x18x8xbf16> to vector<4x16x8xbf16>
    %130 = vector.shape_cast %129 : vector<4x16x8xbf16> to vector<64x8xbf16>
    %131 = vector.extract_strided_slice %42 {offsets = [7, 0, 0], sizes = [1, 8, 16], strides = [1, 1, 1]} : vector<9x8x16xbf16> to vector<1x8x16xbf16>
    %132 = vector.shape_cast %131 : vector<1x8x16xbf16> to vector<8x16xbf16>
    %cst_49 = arith.constant dense<0.000000e+00> : vector<64x16xf32>
    %133 = tpu.matmul %130, %132, %cst_49 {dimension_numbers = #tpu.dot_dimension_numbers<[1], [0], [0], [1], [0, 0, 1, 1], [], []>} : vector<64x8xbf16>, vector<8x16xbf16>, vector<64x16xf32> -> vector<64x16xf32>
    %134 = arith.addf %122, %133 : vector<64x16xf32>
    %135 = vector.extract_strided_slice %41 {offsets = [2, 1, 0], sizes = [4, 16, 8], strides = [1, 1, 1]} : vector<6x18x8xbf16> to vector<4x16x8xbf16>
    %136 = vector.shape_cast %135 : vector<4x16x8xbf16> to vector<64x8xbf16>
    %137 = vector.extract_strided_slice %42 {offsets = [7, 0, 0], sizes = [1, 8, 16], strides = [1, 1, 1]} : vector<9x8x16xbf16> to vector<1x8x16xbf16>
    %138 = vector.shape_cast %137 : vector<1x8x16xbf16> to vector<8x16xbf16>
    %cst_50 = arith.constant dense<0.000000e+00> : vector<64x16xf32>
    %139 = tpu.matmul %136, %138, %cst_50 {dimension_numbers = #tpu.dot_dimension_numbers<[1], [0], [0], [1], [0, 0, 1, 1], [], []>} : vector<64x8xbf16>, vector<8x16xbf16>, vector<64x16xf32> -> vector<64x16xf32>
    %140 = arith.addf %128, %139 : vector<64x16xf32>
    %141 = vector.extract_strided_slice %28 {offsets = [2, 2, 0], sizes = [4, 16, 8], strides = [1, 1, 1]} : vector<6x18x8xbf16> to vector<4x16x8xbf16>
    %142 = vector.shape_cast %141 : vector<4x16x8xbf16> to vector<64x8xbf16>
    %143 = vector.extract_strided_slice %42 {offsets = [8, 0, 0], sizes = [1, 8, 16], strides = [1, 1, 1]} : vector<9x8x16xbf16> to vector<1x8x16xbf16>
    %144 = vector.shape_cast %143 : vector<1x8x16xbf16> to vector<8x16xbf16>
    %cst_51 = arith.constant dense<0.000000e+00> : vector<64x16xf32>
    %145 = tpu.matmul %142, %144, %cst_51 {dimension_numbers = #tpu.dot_dimension_numbers<[1], [0], [0], [1], [0, 0, 1, 1], [], []>} : vector<64x8xbf16>, vector<8x16xbf16>, vector<64x16xf32> -> vector<64x16xf32>
    %146 = arith.addf %134, %145 : vector<64x16xf32>
    %147 = vector.extract_strided_slice %41 {offsets = [2, 2, 0], sizes = [4, 16, 8], strides = [1, 1, 1]} : vector<6x18x8xbf16> to vector<4x16x8xbf16>
    %148 = vector.shape_cast %147 : vector<4x16x8xbf16> to vector<64x8xbf16>
    %149 = vector.extract_strided_slice %42 {offsets = [8, 0, 0], sizes = [1, 8, 16], strides = [1, 1, 1]} : vector<9x8x16xbf16> to vector<1x8x16xbf16>
    %150 = vector.shape_cast %149 : vector<1x8x16xbf16> to vector<8x16xbf16>
    %cst_52 = arith.constant dense<0.000000e+00> : vector<64x16xf32>
    %151 = tpu.matmul %148, %150, %cst_52 {dimension_numbers = #tpu.dot_dimension_numbers<[1], [0], [0], [1], [0, 0, 1, 1], [], []>} : vector<64x8xbf16>, vector<8x16xbf16>, vector<64x16xf32> -> vector<64x16xf32>
    %152 = arith.addf %140, %151 : vector<64x16xf32>
    %c0_53 = arith.constant 0 : index
    %c0_54 = arith.constant 0 : index
    %153 = vector.load %arg11[%c0_53, %c0_54] : memref<1x16xf32, #tpu.memory_space<vmem>>, vector<1x16xf32>
    %154 = vector.broadcast %153 : vector<1x16xf32> to vector<64x16xf32>
    %155 = arith.addf %146, %154 : vector<64x16xf32>
    %c0_55 = arith.constant 0 : index
    %c0_56 = arith.constant 0 : index
    %156 = vector.load %arg11[%c0_55, %c0_56] : memref<1x16xf32, #tpu.memory_space<vmem>>, vector<1x16xf32>
    %157 = vector.broadcast %156 : vector<1x16xf32> to vector<64x16xf32>
    %158 = arith.addf %152, %157 : vector<64x16xf32>
    %cst_57 = arith.constant 0.000000e+00 : f32
    %159 = vector.broadcast %cst_57 : f32 to vector<64x16xf32>
    %160 = arith.cmpf oge, %155, %159 : vector<64x16xf32>
    %cst_58 = arith.constant 0.00999999977 : f32
    %161 = vector.broadcast %cst_58 : f32 to vector<64x16xf32>
    %162 = arith.mulf %161, %155 : vector<64x16xf32>
    %163 = arith.select %160, %155, %162 : vector<64x16xi1>, vector<64x16xf32>
    %cst_59 = arith.constant 0.000000e+00 : f32
    %164 = vector.broadcast %cst_59 : f32 to vector<64x16xf32>
    %165 = arith.cmpf oge, %158, %164 : vector<64x16xf32>
    %cst_60 = arith.constant 0.00999999977 : f32
    %166 = vector.broadcast %cst_60 : f32 to vector<64x16xf32>
    %167 = arith.mulf %166, %158 : vector<64x16xf32>
    %168 = arith.select %165, %158, %167 : vector<64x16xi1>, vector<64x16xf32>
    %169 = vector.shape_cast %30 : vector<4x16x1xf32> to vector<64x1xf32>
    %170 = vector.broadcast %169 : vector<64x1xf32> to vector<64x16xf32>
    %171 = arith.mulf %163, %170 : vector<64x16xf32>
    %172 = arith.subf %171, %168 : vector<64x16xf32>
    %173 = math.absf %172 : vector<64x16xf32>
    %174 = arith.subf %163, %173 : vector<64x16xf32>
    %c0_61 = arith.constant 0 : index
    %c0_62 = arith.constant 0 : index
    %175 = vector.load %arg12[%c0_61, %c0_62] : memref<1x16xf32, #tpu.memory_space<vmem>>, vector<1x16xf32>
    %176 = vector.broadcast %175 : vector<1x16xf32> to vector<64x16xf32>
    %177 = arith.mulf %174, %176 : vector<64x16xf32>
    %c0_63 = arith.constant 0 : index
    %c0_64 = arith.constant 0 : index
    %178 = vector.load %arg13[%c0_63, %c0_64] : memref<1x16xf32, #tpu.memory_space<vmem>>, vector<1x16xf32>
    %179 = vector.broadcast %178 : vector<1x16xf32> to vector<64x16xf32>
    %180 = arith.addf %177, %179 : vector<64x16xf32>
    %cst_65 = arith.constant 0.000000e+00 : f32
    %181 = vector.broadcast %cst_65 : f32 to vector<64x16xf32>
    %182 = arith.maximumf %180, %181 : vector<64x16xf32>
    %183 = tpu.concatenate %25, %182 in 1 : vector<64x16xf32>, vector<64x16xf32> -> vector<64x32xf32>
    %184 = vector.shape_cast %183 : vector<64x32xf32> to vector<4x16x32xf32>
    %185 = arith.truncf %184 : vector<4x16x32xf32> to vector<4x16x32xbf16>
    %c0_66 = arith.constant 0 : index
    %c0_67 = arith.constant 0 : index
    %c0_68 = arith.constant 0 : index
    %c0_69 = arith.constant 0 : index
    %186 = vector.load %arg14[%c0_66, %c0_67, %c0_68, %c0_69] : memref<1x4x16x32xbf16, #tpu.memory_space<vmem>>, vector<1x4x16x32xbf16>
    %187 = vector.shape_cast %186 : vector<1x4x16x32xbf16> to vector<4x16x32xbf16>
    %188 = vector.shape_cast %185 : vector<4x16x32xbf16> to vector<1x4x16x32xbf16>
    tpu.vector_store %arg14[%c0_66, %c0_67, %c0_68, %c0_69], %188 {strides = array<i32>} : memref<1x4x16x32xbf16, #tpu.memory_space<vmem>>, vector<1x4x16x32xbf16>,
    return
  }
  func.func @transform_0(%arg0: i32, %arg1: i32) -> (i32, i32, i32, i32) {
    %c0_i32 = arith.constant 0 : i32
    %c0_i32_0 = arith.constant 0 : i32
    %c0_i32_1 = arith.constant 0 : i32
    return %arg0, %arg1, %c0_i32, %c0_i32_0 : i32, i32, i32, i32
  }
  func.func @transform_1(%arg0: i32, %arg1: i32) -> (i32, i32, i32, i32) {
    %c4_i32 = arith.constant 4 : i32
    %0 = arith.muli %arg1, %c4_i32 : i32
    %c1_i32 = arith.constant 1 : i32
    %1 = arith.subi %0, %c1_i32 : i32
    %c0_i32 = arith.constant 0 : i32
    %2 = arith.maxsi %1, %c0_i32 : i32
    %c0_i32_0 = arith.constant 0 : i32
    %c0_i32_1 = arith.constant 0 : i32
    %c0_i32_2 = arith.constant 0 : i32
    return %arg0, %2, %c0_i32_0, %c0_i32_1 : i32, i32, i32, i32
  }
  func.func @transform_2(%arg0: i32, %arg1: i32) -> (i32, i32, i32, i32) {
    %c1_i32 = arith.constant 1 : i32
    %0 = arith.addi %arg1, %c1_i32 : i32
    %c4_i32 = arith.constant 4 : i32
    %1 = arith.muli %0, %c4_i32 : i32
    %c7_i32 = arith.constant 7 : i32
    %2 = arith.minsi %1, %c7_i32 : i32
    %c0_i32 = arith.constant 0 : i32
    %c0_i32_0 = arith.constant 0 : i32
    %c0_i32_1 = arith.constant 0 : i32
    return %arg0, %2, %c0_i32, %c0_i32_0 : i32, i32, i32, i32
  }
  func.func @transform_3(%arg0: i32, %arg1: i32) -> (i32, i32, i32, i32) {
    %c0_i32 = arith.constant 0 : i32
    %c0_i32_0 = arith.constant 0 : i32
    %c0_i32_1 = arith.constant 0 : i32
    return %arg0, %arg1, %c0_i32, %c0_i32_0 : i32, i32, i32, i32
  }
  func.func @transform_4(%arg0: i32, %arg1: i32) -> (i32, i32, i32, i32) {
    %c4_i32 = arith.constant 4 : i32
    %0 = arith.muli %arg1, %c4_i32 : i32
    %c1_i32 = arith.constant 1 : i32
    %1 = arith.subi %0, %c1_i32 : i32
    %c0_i32 = arith.constant 0 : i32
    %2 = arith.maxsi %1, %c0_i32 : i32
    %c0_i32_0 = arith.constant 0 : i32
    %c0_i32_1 = arith.constant 0 : i32
    %c0_i32_2 = arith.constant 0 : i32
    return %arg0, %2, %c0_i32_0, %c0_i32_1 : i32, i32, i32, i32
  }
  func.func @transform_5(%arg0: i32, %arg1: i32) -> (i32, i32, i32, i32) {
    %c1_i32 = arith.constant 1 : i32
    %0 = arith.addi %arg1, %c1_i32 : i32
    %c4_i32 = arith.constant 4 : i32
    %1 = arith.muli %0, %c4_i32 : i32
    %c7_i32 = arith.constant 7 : i32
    %2 = arith.minsi %1, %c7_i32 : i32
    %c0_i32 = arith.constant 0 : i32
    %c0_i32_0 = arith.constant 0 : i32
    %c0_i32_1 = arith.constant 0 : i32
    return %arg0, %2, %c0_i32, %c0_i32_0 : i32, i32, i32, i32
  }
  func.func @transform_6(%arg0: i32, %arg1: i32) -> (i32, i32) {
    %c0_i32 = arith.constant 0 : i32
    %c0_i32_0 = arith.constant 0 : i32
    %c0_i32_1 = arith.constant 0 : i32
    return %c0_i32, %c0_i32_0 : i32, i32
  }
  func.func @transform_7(%arg0: i32, %arg1: i32) -> (i32, i32) {
    %c0_i32 = arith.constant 0 : i32
    %c0_i32_0 = arith.constant 0 : i32
    %c0_i32_1 = arith.constant 0 : i32
    return %c0_i32, %c0_i32_0 : i32, i32
  }
  func.func @transform_8(%arg0: i32, %arg1: i32) -> (i32, i32, i32) {
    %c0_i32 = arith.constant 0 : i32
    %c0_i32_0 = arith.constant 0 : i32
    %c0_i32_1 = arith.constant 0 : i32
    %c0_i32_2 = arith.constant 0 : i32
    return %c0_i32, %c0_i32_0, %c0_i32_1 : i32, i32, i32
  }
  func.func @transform_9(%arg0: i32, %arg1: i32) -> (i32, i32) {
    %c0_i32 = arith.constant 0 : i32
    %c0_i32_0 = arith.constant 0 : i32
    %c0_i32_1 = arith.constant 0 : i32
    return %c0_i32, %c0_i32_0 : i32, i32
  }
  func.func @transform_10(%arg0: i32, %arg1: i32) -> (i32, i32) {
    %c0_i32 = arith.constant 0 : i32
    %c0_i32_0 = arith.constant 0 : i32
    %c0_i32_1 = arith.constant 0 : i32
    return %c0_i32, %c0_i32_0 : i32, i32
  }
  func.func @transform_11(%arg0: i32, %arg1: i32) -> (i32, i32) {
    %c0_i32 = arith.constant 0 : i32
    %c0_i32_0 = arith.constant 0 : i32
    %c0_i32_1 = arith.constant 0 : i32
    return %c0_i32, %c0_i32_0 : i32, i32
  }
  func.func @transform_12(%arg0: i32, %arg1: i32) -> (i32, i32, i32, i32) {
    %c0_i32 = arith.constant 0 : i32
    %c0_i32_0 = arith.constant 0 : i32
    %c0_i32_1 = arith.constant 0 : i32
    return %arg0, %arg1, %c0_i32, %c0_i32_0 : i32, i32, i32, i32
  }
}

</mosaic_0001>

<llo_original>
// kernel: range_fire_up_forward.2
$region0: #{range_fire_up_forward.2}
  #allocation0 [shape = 'u32[]', space=smem, size = 0x4, offset = 0x4, fixed_abs, tag = 'smem constant byte address 0x4 - core index']
  #allocation1 [shape = 'u32[144,128]{1,0:T(1,128)}', space=vmem, size = 0x12000, scoped, tag = 'internal scratch']
  %s0 = inlined_call_operand.vmem [shape: bf16[16,8,8], index: 0, kind: input, shape index: {}]
  %s1 = inlined_call_operand.vmem [shape: bf16[8,8], index: 1, kind: input, shape index: {}]
  %s2 = inlined_call_operand.vmem [shape: f32[1,8], index: 2, kind: input, shape index: {}]
  %s3 = inlined_call_operand.vmem [shape: bf16[24,16], index: 3, kind: input, shape index: {}]
  %s4 = inlined_call_operand.vmem [shape: f32[1,16], index: 4, kind: input, shape index: {}]
  %s5 = inlined_call_operand.vmem [shape: bf16[16,8,16], index: 5, kind: output, shape index: {}]
  %s6 = sld [smem:[#allocation0]]
  $region53: #{range_fire_up_forward.2} parent=0
    _
  %s8 = ssub.s32 1, %s6
  %s9 = scalar_select 0, %s8, %s6
  loop: start=0, step=1, limit=6
  $region2: #{range_fire_up_forward.2} parent=0 // loop_pre_header
    _
  $region3: #{range_fire_up_forward.2} parent=0 // loop_header
    %s11 = sphi 0, %s15
    %p12 = scmp.ge.s32.totalorder %s11, 6
    %s21 = sphi 0, %s23
    %s24 = sphi 0, %s21
    %s25 = sphi 0, %s24
    %s41 = sphi 0, %s25
    %s45 = sphi 0, %s45
    %s47 = sphi 0, %s45
    %s48 = sphi 0, %s47
    %s62 = sphi 0, %s48
    %s66 = sphi 0, %s66
    %s68 = sphi 0, %s66
    %s69 = sphi 0, %s68
    %s83 = sphi 0, %s69
    %s87 = sphi 0, %s87
    %s89 = sphi 0, %s87
    %s90 = sphi 0, %s89
    %s104 = sphi 0, %s90
    %s108 = sphi 0, %s108
    %s110 = sphi 0, %s108
    %s111 = sphi 0, %s110
    %s125 = sphi 0, %s111
    %s131 = sphi 0, %s133
    %s134 = sphi 0, %s131
    %s135 = sphi 0, %s134
    %s151 = sphi 0, %s135
  $region4: #{range_fire_up_forward.2} parent=0 // loop_header_branch
    %14 = sbr.rel (%p12) target = $region8
  $region5: #{range_fire_up_forward.2} parent=0 // loop_body
    %s16 = ssub.s32 %s11, 1
    %s17 = ssub.s32 %s11, 2
    %s18 = sadd.s32 %s11, 1
    %s19 = ssub.s32 %s11, %s18
    %p20 = scmp.eq.s32.totalorder %s19, 0
    %s22 = sadd.s32 %s21, 1
    %s23 = scalar_select %p20, %s21, %s22
    %p26 = pneg %p20
    %p27 = scmp.eq.s32.totalorder %s11, 3
    %p28 = por %p26, %p27
    %p29 = scmp.ne.s32.totalorder %s21, %s24
    %p30 = scmp.eq.s32.totalorder %s11, 0
    %p31 = por %p29, %p30
    %p32 = scmp.ne.s32.totalorder %s21, %s24
    %p33 = scmp.eq.s32.totalorder %s16, 3
    %p34 = por %p32, %p33
    %p35 = scmp.ne.s32.totalorder %s24, %s25
    %p36 = scmp.eq.s32.totalorder %s16, 0
    %p37 = por %p35, %p36
    %p38 = scmp.ne.s32.totalorder %s24, %s25
    %p39 = scmp.eq.s32.totalorder %s17, 3
    %p40 = por %p38, %p39
    %p42 = scmp.ne.s32.totalorder %s25, %s41
    %p43 = scmp.eq.s32.totalorder %s17, 0
    %p44 = por %p42, %p43
    %s46 = sadd.s32 %s45, 1
    %p49 = scmp.eq.s32.totalorder %s11, 3
    %p50 = scmp.ne.s32.totalorder %s45, %s47
    %p51 = scmp.eq.s32.totalorder %s11, 0
    %p52 = por %p50, %p51
    %p53 = scmp.ne.s32.totalorder %s45, %s47
    %p54 = scmp.eq.s32.totalorder %s16, 3
    %p55 = por %p53, %p54
    %p56 = scmp.ne.s32.totalorder %s47, %s48
    %p57 = scmp.eq.s32.totalorder %s16, 0
    %p58 = por %p56, %p57
    %p59 = scmp.ne.s32.totalorder %s47, %s48
    %p60 = scmp.eq.s32.totalorder %s17, 3
    %p61 = por %p59, %p60
    %p63 = scmp.ne.s32.totalorder %s48, %s62
    %p64 = scmp.eq.s32.totalorder %s17, 0
    %p65 = por %p63, %p64
    %s67 = sadd.s32 %s66, 1
    %p70 = scmp.eq.s32.totalorder %s11, 3
    %p71 = scmp.ne.s32.totalorder %s66, %s68
    %p72 = scmp.eq.s32.totalorder %s11, 0
    %p73 = por %p71, %p72
    %p74 = scmp.ne.s32.totalorder %s66, %s68
    %p75 = scmp.eq.s32.totalorder %s16, 3
    %p76 = por %p74, %p75
    %p77 = scmp.ne.s32.totalorder %s68, %s69
    %p78 = scmp.eq.s32.totalorder %s16, 0
    %p79 = por %p77, %p78
    %p80 = scmp.ne.s32.totalorder %s68, %s69
    %p81 = scmp.eq.s32.totalorder %s17, 3
    %p82 = por %p80, %p81
    %p84 = scmp.ne.s32.totalorder %s69, %s83
    %p85 = scmp.eq.s32.totalorder %s17, 0
    %p86 = por %p84, %p85
    %s88 = sadd.s32 %s87, 1
    %p91 = scmp.eq.s32.totalorder %s11, 3
    %p92 = scmp.ne.s32.totalorder %s87, %s89
    %p93 = scmp.eq.s32.totalorder %s11, 0
    %p94 = por %p92, %p93
    %p95 = scmp.ne.s32.totalorder %s87, %s89
    %p96 = scmp.eq.s32.totalorder %s16, 3
    %p97 = por %p95, %p96
    %p98 = scmp.ne.s32.totalorder %s89, %s90
    %p99 = scmp.eq.s32.totalorder %s16, 0
    %p100 = por %p98, %p99
    %p101 = scmp.ne.s32.totalorder %s89, %s90
    %p102 = scmp.eq.s32.totalorder %s17, 3
    %p103 = por %p101, %p102
    %p105 = scmp.ne.s32.totalorder %s90, %s104
    %p106 = scmp.eq.s32.totalorder %s17, 0
    %p107 = por %p105, %p106
    %s109 = sadd.s32 %s108, 1
    %p112 = scmp.eq.s32.totalorder %s11, 3
    %p113 = scmp.ne.s32.totalorder %s108, %s110
    %p114 = scmp.eq.s32.totalorder %s11, 0
    %p115 = por %p113, %p114
    %p116 = scmp.ne.s32.totalorder %s108, %s110
    %p117 = scmp.eq.s32.totalorder %s16, 3
    %p118 = por %p116, %p117
    %p119 = scmp.ne.s32.totalorder %s110, %s111
    %p120 = scmp.eq.s32.totalorder %s16, 0
    %p121 = por %p119, %p120
    %p122 = scmp.ne.s32.totalorder %s110, %s111
    %p123 = scmp.eq.s32.totalorder %s17, 3
    %p124 = por %p122, %p123
    %p126 = scmp.ne.s32.totalorder %s111, %s125
    %p127 = scmp.eq.s32.totalorder %s17, 0
    %p128 = por %p126, %p127
    %s129 = ssub.s32 %s11, %s18
    %p130 = scmp.eq.s32.totalorder %s129, 0
    %s132 = sadd.s32 %s131, 1
    %s133 = scalar_select %p130, %s131, %s132
    %p136 = pneg %p130
    %p137 = scmp.eq.s32.totalorder %s11, 3
    %p138 = por %p136, %p137
    %p139 = scmp.ne.s32.totalorder %s131, %s134
    %p140 = scmp.eq.s32.totalorder %s11, 0
    %p141 = por %p139, %p140
    %p142 = scmp.ne.s32.totalorder %s131, %s134
    %p143 = scmp.eq.s32.totalorder %s16, 3
    %p144 = por %p142, %p143
    %p145 = scmp.ne.s32.totalorder %s134, %s135
    %p146 = scmp.eq.s32.totalorder %s16, 0
    %p147 = por %p145, %p146
    %p148 = scmp.ne.s32.totalorder %s134, %s135
    %p149 = scmp.eq.s32.totalorder %s17, 3
    %p150 = por %p148, %p149
    %p152 = scmp.ne.s32.totalorder %s135, %s151
    %p153 = scmp.eq.s32.totalorder %s17, 0
    %p154 = por %p152, %p153
    %p155 = scmp.le.s32.totalorder 1, %s11
    %p156 = scmp.lt.s32.totalorder %s11, 5
    %p157 = pnand %p155, %p156
    %p158 = pneg %p157
    // Predicated region
    $region9: #{range_fire_up_forward.2} parent=5 // pred_check
      _
    $region10: #{range_fire_up_forward.2} parent=5 // pred_check_branch
      %160 = sbr.rel (%p157) target = $region12
    $region11: #{range_fire_up_forward.2} parent=5 // pred_region
      %s161 = ssub.s32 %s11, 1
      // Predicated region
      $region13: #{range_fire_up_forward.2} parent=11 // pred_check
        %p162 = pneg %p58
      $region14: #{range_fire_up_forward.2} parent=11 // pred_check_branch
        %164 = sbr.rel (%p162) target = $region16
      $region15: #{range_fire_up_forward.2} parent=11 // pred_region
        _
      $region16: #{range_fire_up_forward.2} parent=11 // pred_fallthru
        _
      // Predicated region
      $region17: #{range_fire_up_forward.2} parent=11 // pred_check
        %p165 = pneg %p79
      $region18: #{range_fire_up_forward.2} parent=11 // pred_check_branch
        %167 = sbr.rel (%p165) target = $region20
      $region19: #{range_fire_up_forward.2} parent=11 // pred_region
        _
      $region20: #{range_fire_up_forward.2} parent=11 // pred_fallthru
        _
      // Predicated region
      $region21: #{range_fire_up_forward.2} parent=11 // pred_check
        %p168 = pneg %p100
      $region22: #{range_fire_up_forward.2} parent=11 // pred_check_branch
        %170 = sbr.rel (%p168) target = $region24
      $region23: #{range_fire_up_forward.2} parent=11 // pred_region
        _
      $region24: #{range_fire_up_forward.2} parent=11 // pred_fallthru
        _
      // Predicated region
      $region25: #{range_fire_up_forward.2} parent=11 // pred_check
        %p171 = pneg %p121
      $region26: #{range_fire_up_forward.2} parent=11 // pred_check_branch
        %173 = sbr.rel (%p171) target = $region28
      $region27: #{range_fire_up_forward.2} parent=11 // pred_region
        _
      $region28: #{range_fire_up_forward.2} parent=11 // pred_fallthru
        _
    $region12: #{range_fire_up_forward.2} parent=5 // pred_fallthru
      _
    %p174 = scmp.lt.s32.totalorder %s11, 4
    // Predicated region
    $region29: #{range_fire_up_forward.2} parent=5 // pred_check
      %p175 = pneg %p174
    $region30: #{range_fire_up_forward.2} parent=5 // pred_check_branch
      %177 = sbr.rel (%p175) target = $region32
    $region31: #{range_fire_up_forward.2} parent=5 // pred_region
      // Predicated region
      $region33: #{range_fire_up_forward.2} parent=31 // pred_check
        %p178 = pneg %p31
      $region34: #{range_fire_up_forward.2} parent=31 // pred_check_branch
        %180 = sbr.rel (%p178) target = $region36
      $region35: #{range_fire_up_forward.2} parent=31 // pred_region
        %s181 = smul.u32 4, %s11
        %p182 = scmp.lt.s32.totalorder %s181, 15
        %s183 = scalar_select %p182, %s181, 15
        %s184 = smul.addr %s183, 4
        %s185 = scalar_lea.vmem %s0, %s184
        %s186 = smul.u32 4, %s11
      $region36: #{range_fire_up_forward.2} parent=31 // pred_fallthru
        _
    $region32: #{range_fire_up_forward.2} parent=5 // pred_fallthru
      _
    %p187 = scmp.le.s32.totalorder 1, %s11
    %p188 = scmp.lt.s32.totalorder %s11, 5
    %p189 = pnand %p187, %p188
    %p190 = pneg %p189
    // Predicated region
    $region37: #{range_fire_up_forward.2} parent=5 // pred_check
      _
    $region38: #{range_fire_up_forward.2} parent=5 // pred_check_branch
      %192 = sbr.rel (%p189) target = $region40
    $region39: #{range_fire_up_forward.2} parent=5 // pred_region
      %s193 = ssub.s32 %s11, 1
      %s194 = smul.u32 4, %s16
      %p195 = scmp.lt.s32.totalorder %s194, 15
      %s196 = scalar_select %p195, %s194, 15
      %s197 = smul.addr %s196, 4
      %s198 = scalar_lea.vmem %s0, %s197
      %p199 = pneg %p37
      %p200 = pneg %p34
      %p201 = pneg %p58
      %p202 = pneg %p55
      %p203 = pneg %p79
      %p204 = pneg %p76
      %p205 = pneg %p100
      %p206 = pneg %p97
      %p207 = pneg %p121
      %p208 = pneg %p118
      %p209 = pneg %p147
      %p210 = pneg %p144
      %s211 = smul.u32 4, %s16
      %p212 = scmp.lt.s32.totalorder %s211, 15
      %s213 = scalar_select %p212, %s211, 15
      %s214 = smul.addr %s213, 4
      %s215 = scalar_lea.vmem %s5, %s214
      %s216 = smul.u32 4, %s16
      %p217 = scmp.lt.s32.totalorder %s216, 15
      %s218 = scalar_select %p217, %s216, 15
      %s219 = smul.addr %s218, 4
      %s220 = scalar_lea.vmem %s0, %s219
      %s221 = smul.u32 4, %s16
      %s222 = smul.u32 4, %s16
      %p223 = scmp.lt.s32.totalorder %s222, 15
      %s224 = scalar_select %p223, %s222, 15
      %s225 = smul.addr %s224, 4
      %s226 = scalar_lea.vmem %s5, %s225
      %s227 = smul.u32 4, %s16
      %v229 = vld [vmem:[%s220] sm:$0xf]
      %v230 = vld [vmem:[%s220 + $0x4] sm:$0xf]
      %v231 = vld [vmem:[%s220 + $0x8] sm:$0xf]
      %v232 = vld [vmem:[%s220 + $0xc] sm:$0xf]
      %v233 = vld [vmem:[%s1] sm:$0xf]
      %v234 = vld [vmem:[%s2] sm:$0x1]
      %v236 = vlaneseq
      %v237 = vshrl.u32 %v236, 7
      %v238 = vsub.s32 0, %v237
      %v239 = vrot.slane %v234, %v238
      %v245 = vunpack.c.l.b16 %v229
      %v246 = vunpack.c.l.b16 %v230
      %v247 = vunpack.c.l.b16 %v231
      %v248 = vunpack.c.l.b16 %v232
      %v249 = vpack.c.b16 %v246, %v245
      %v250 = vpack.c.b16 %v248, %v247
      %vm251 = vcmask 64512
      %v253 = vsel %vm251, %v249, 0
      %v256 = vsel %vm251, %v250, 0
      %vm258 = vcmask 1043456
      %v260 = vsel %vm258, %v233, 0
      %262 = vmatprep.subr.bf16.mxu0 0
      %263 = vmatpush1.bf16.msra.mxu0 %v260
      %264 = vmatprep.subr.bf16.mxu0 0
      %265 = vmatpush1.bf16.msra.mxu0 0
      %266 = vmatprep.subr.bf16.mxu0 0
      %267 = vmatpush1.bf16.msra.mxu0 0
      %268 = vmatprep.subr.bf16.mxu0 0
      %269 = vmatpush1.bf16.msra.mxu0 0
      %270 = vmatprep.subr.bf16.mxu0 0
      %271 = vmatpush1.bf16.msra.mxu0 0
      %272 = vmatprep.subr.bf16.mxu0 0
      %273 = vmatpush1.bf16.msra.mxu0 0
      %274 = vmatprep.subr.bf16.mxu0 0
      %275 = vmatpush1.bf16.msra.mxu0 0
      %276 = vmatprep.subr.bf16.mxu0 0
      %277 = vmatpush1.bf16.msra.mxu0 0
      %278 = vmatprep.subr.bf16.mxu0 0
      %279 = vmatpush1.bf16.msra.mxu0 0
      %280 = vmatprep.subr.bf16.mxu0 0
      %281 = vmatpush1.bf16.msra.mxu0 0
      %282 = vmatprep.subr.bf16.mxu0 0
      %283 = vmatpush1.bf16.msra.mxu0 0
      %284 = vmatprep.subr.bf16.mxu0 0
      %285 = vmatpush1.bf16.msra.mxu0 0
      %286 = vmatprep.subr.bf16.mxu0 0
      %287 = vmatpush1.bf16.msra.mxu0 0
      %288 = vmatprep.subr.bf16.mxu0 0
      %289 = vmatpush1.bf16.msra.mxu0 0
      %290 = vmatprep.subr.bf16.mxu0 0
      %291 = vmatpush1.bf16.msra.mxu0 0
      %292 = vmatprep.subr.bf16.mxu0 0
      %293 = vmatpush1.bf16.msra.mxu0 0
      %294 = vmatprep.mubr.bf16.mxu0 0
      %295 = vmatmul.mubr.bf16.gmra.mrb[0].mxu0 %v253
      %v296 = vpop.f32.mrb[0].mxu0
      %v297 = vadd.f32 %v239, %v296
      %v298 = vpop.f32.mrb[0].mxu0
      %v299 = vpop.f32.mrb[0].mxu0
      %v300 = vadd.f32 %v239, %v299
      %v301 = vpop.f32.mrb[0].mxu0
      %302 = vmatprep.mubr.bf16.mxu0 0
      %303 = vmatmul.mubr.bf16.gmra.mrb[0].mxu0 %v256
      %v304 = vpop.f32.mrb[0].mxu0
      %v305 = vadd.f32 %v239, %v304
      %v306 = vpop.f32.mrb[0].mxu0
      %v307 = vpop.f32.mrb[0].mxu0
      %v308 = vadd.f32 %v239, %v307
      %v309 = vpop.f32.mrb[0].mxu0
      %310 = vdwg.mxu0
      %v311 = vmax.f32 %v297, 0.0
      %v312 = vmax.f32 %v300, 0.0
      %v313 = vmax.f32 %v305, 0.0
      %v314 = vmax.f32 %v308, 0.0
      %v315 = vpack.c.bf16 %v311, %v311
      %v316 = vpack.c.bf16 %v312, %v312
      %v317 = vpack.c.bf16 %v313, %v313
      %v318 = vpack.c.bf16 %v314, %v314
      %v320 = vshrl.u32 %v315, 16
      %v322 = vrot.slane %v320, 7
      %v323 = vshll.u32 %v315, 16
      %v325 = vor.u32 %v322, %v323
      %v327 = vshrl.u32 %v316, 16
      %v329 = vrot.slane %v327, 7
      %v330 = vshll.u32 %v316, 16
      %v332 = vor.u32 %v329, %v330
      %v334 = vshrl.u32 %v317, 16
      %v336 = vrot.slane %v334, 7
      %v337 = vshll.u32 %v317, 16
      %v339 = vor.u32 %v336, %v337
      %v341 = vshrl.u32 %v318, 16
      %v343 = vrot.slane %v341, 7
      %v344 = vshll.u32 %v318, 16
      %v346 = vor.u32 %v343, %v344
      %vm351 = vcmask 1040384
      %vm352 = vsmask.f32 256
      %vm353 = vmand %vm351, %vm352
      %v354 = vsel %vm353, 0, %v325
      %v355 = vsel %vm353, 0, %v332
      %v356 = vsel %vm353, 0, %v339
      %v357 = vsel %vm353, 0, %v346
      %vm358 = vcmask 1044480
      %vm359 = vsmask.f32 4352
      %vm360 = vmand %vm358, %vm359
      %v361 = vsel %vm360, %v354, 0
      %v362 = vsel %vm360, %v355, 0
      %v363 = vsel %vm360, %v356, 0
      %v364 = vsel %vm360, %v357, 0
      %v366 = vshrl.u32 %v361, 16
      %v368 = vrot.slane %v366, 7
      %v369 = vshll.u32 %v361, 16
      %v371 = vor.u32 %v368, %v369
      %v373 = vshrl.u32 %v362, 16
      %v375 = vrot.slane %v373, 7
      %v376 = vshll.u32 %v362, 16
      %v378 = vor.u32 %v375, %v376
      %v380 = vshrl.u32 %v363, 16
      %v382 = vrot.slane %v380, 7
      %v383 = vshll.u32 %v363, 16
      %v385 = vor.u32 %v382, %v383
      %v387 = vshrl.u32 %v364, 16
      %v389 = vrot.slane %v387, 7
      %v390 = vshll.u32 %v364, 16
      %v392 = vor.u32 %v389, %v390
      %393 = vrot.lane.b32.xlu0 %v371, 8
      %v394 = vpop.permute.xlu0 %393
      %395 = vrot.lane.b32.xlu0 %v378, 8
      %v396 = vpop.permute.xlu0 %395
      %397 = vrot.lane.b32.xlu0 %v385, 8
      %v398 = vpop.permute.xlu0 %397
      %399 = vrot.lane.b32.xlu0 %v392, 8
      %v400 = vpop.permute.xlu0 %399
      %v401 = vrot.slane %v369, 1
      %v402 = vor.u32 %v366, %v401
      %v403 = vrot.slane %v376, 1
      %v404 = vor.u32 %v373, %v403
      %v405 = vrot.slane %v383, 1
      %v406 = vor.u32 %v380, %v405
      %v407 = vrot.slane %v390, 1
      %v408 = vor.u32 %v387, %v407
      %409 = vrot.lane.b32.xlu0 %v402, 16
      %v410 = vpop.permute.xlu0 %409
      %411 = vrot.lane.b32.xlu0 %v404, 16
      %v412 = vpop.permute.xlu0 %411
      %413 = vrot.lane.b32.xlu0 %v406, 16
      %v414 = vpop.permute.xlu0 %413
      %415 = vrot.lane.b32.xlu0 %v408, 16
      %v416 = vpop.permute.xlu0 %415
      %v418 = vsel %vm251, %v361, %v394
      %v420 = vsel %vm251, %v362, %v396
      %v422 = vsel %vm251, %v363, %v398
      %v424 = vsel %vm251, %v364, %v400
      %vm425 = vcmask 130048
      %v427 = vsel %vm425, %v418, %v410
      %v429 = vsel %vm425, %v420, %v412
      %v431 = vsel %vm425, %v422, %v414
      %v433 = vsel %vm425, %v424, %v416
      %v438 = vunpack.c.l.b16 %v427
      %v439 = vunpack.c.h.b16 %v427
      %v440 = vunpack.c.l.b16 %v429
      %v441 = vunpack.c.h.b16 %v429
      %v442 = vunpack.c.l.b16 %v431
      %v443 = vunpack.c.h.b16 %v431
      %v444 = vunpack.c.l.b16 %v433
      %v445 = vunpack.c.h.b16 %v433
      %v446 = vpack.c.b16 %v438, %v438
      %v447 = vpack.c.b16 %v439, %v439
      %v448 = vpack.c.b16 %v440, %v440
      %v449 = vpack.c.b16 %v441, %v441
      %v450 = vpack.c.b16 %v442, %v442
      %v451 = vpack.c.b16 %v443, %v443
      %v452 = vpack.c.b16 %v444, %v444
      %v453 = vpack.c.b16 %v445, %v445
      %vm454 = vsmask.f32 3328
      %vm455 = vsmask.f32 7440
      %vm456 = vmor %vm454, %vm455
      %v458 = vshrl.u32 %v446, 16
      %v460 = vrot.slane %v458, 4
      %v461 = vshll.u32 %v446, 16
      %v463 = vrot.slane %v461, 5
      %v464 = vor.u32 %v460, %v463
      %v465 = vrot.slane %v464, 4
      %v467 = vshll.u32 %v447, 16
      %v469 = vrot.slane %v467, 5
      %v470 = vsel %vm456, %v465, %v469
      %v472 = vshrl.u32 %v448, 16
      %v474 = vrot.slane %v472, 4
      %v475 = vshll.u32 %v448, 16
      %v477 = vrot.slane %v475, 5
      %v478 = vor.u32 %v474, %v477
      %v479 = vrot.slane %v478, 4
      %v481 = vshll.u32 %v449, 16
      %v483 = vrot.slane %v481, 5
      %v484 = vsel %vm456, %v479, %v483
      %v486 = vshrl.u32 %v450, 16
      %v488 = vrot.slane %v486, 4
      %v489 = vshll.u32 %v450, 16
      %v491 = vrot.slane %v489, 5
      %v492 = vor.u32 %v488, %v491
      %v493 = vrot.slane %v492, 4
      %v495 = vshll.u32 %v451, 16
      %v497 = vrot.slane %v495, 5
      %v498 = vsel %vm456, %v493, %v497
      %v500 = vshrl.u32 %v452, 16
      %v502 = vrot.slane %v500, 4
      %v503 = vshll.u32 %v452, 16
      %v505 = vrot.slane %v503, 5
      %v506 = vor.u32 %v502, %v505
      %v507 = vrot.slane %v506, 4
      %v509 = vshll.u32 %v453, 16
      %v511 = vrot.slane %v509, 5
      %v512 = vsel %vm456, %v507, %v511
      %v513 = vld [vmem:[%s3] sm:$0xf]
      %v514 = vld [vmem:[%s3 + $0x4] sm:$0xf]
      %v515 = vld [vmem:[%s3 + $0x8] sm:$0xf]
      %v516 = vld [vmem:[%s4] sm:$0x1]
      %v518 = vlaneseq
      %v519 = vshrl.u32 %v518, 7
      %v520 = vsub.s32 0, %v519
      %v521 = vrot.slane %v516, %v520
      %v523 = vunpack.c.l.b16 %v470
      %v524 = vunpack.c.l.b16 %v484
      %v525 = vunpack.c.l.b16 %v498
      %v526 = vunpack.c.l.b16 %v512
      %v527 = vpack.c.b16 %v524, %v523
      %v528 = vpack.c.b16 %v526, %v525
      %v532 = vunpack.c.l.b16 %v513
      %v533 = vunpack.c.l.b16 %v514
      %v534 = vunpack.c.l.b16 %v515
      %v535 = vpack.c.b16 %v533, %v532
      %v536 = vpack.c.b16 %v534, %v534
      %vm538 = vcmask 195584
      %v540 = vsel %vm538, %v527, 0
      %v543 = vsel %vm538, %v528, 0
      %v546 = vsel %vm258, %v536, 0
      %548 = vmatprep.subr.bf16.mxu0 0
      %549 = vmatpush1.bf16.msra.mxu0 %v535
      %550 = vmatprep.subr.bf16.mxu0 0
      %551 = vmatpush1.bf16.msra.mxu0 %v546
      %552 = vmatprep.subr.bf16.mxu0 0
      %553 = vmatpush1.bf16.msra.mxu0 0
      %554 = vmatprep.subr.bf16.mxu0 0
      %555 = vmatpush1.bf16.msra.mxu0 0
      %556 = vmatprep.subr.bf16.mxu0 0
      %557 = vmatpush1.bf16.msra.mxu0 0
      %558 = vmatprep.subr.bf16.mxu0 0
      %559 = vmatpush1.bf16.msra.mxu0 0
      %560 = vmatprep.subr.bf16.mxu0 0
      %561 = vmatpush1.bf16.msra.mxu0 0
      %562 = vmatprep.subr.bf16.mxu0 0
      %563 = vmatpush1.bf16.msra.mxu0 0
      %564 = vmatprep.subr.bf16.mxu0 0
      %565 = vmatpush1.bf16.msra.mxu0 0
      %566 = vmatprep.subr.bf16.mxu0 0
      %567 = vmatpush1.bf16.msra.mxu0 0
      %568 = vmatprep.subr.bf16.mxu0 0
      %569 = vmatpush1.bf16.msra.mxu0 0
      %570 = vmatprep.subr.bf16.mxu0 0
      %571 = vmatpush1.bf16.msra.mxu0 0
      %572 = vmatprep.subr.bf16.mxu0 0
      %573 = vmatpush1.bf16.msra.mxu0 0
      %574 = vmatprep.subr.bf16.mxu0 0
      %575 = vmatpush1.bf16.msra.mxu0 0
      %576 = vmatprep.subr.bf16.mxu0 0
      %577 = vmatpush1.bf16.msra.mxu0 0
      %578 = vmatprep.subr.bf16.mxu0 0
      %579 = vmatpush1.bf16.msra.mxu0 0
      %580 = vmatprep.mubr.bf16.mxu0 0
      %581 = vmatmul.mubr.bf16.gmra.mrb[0].mxu0 %v540
      %v582 = vpop.f32.mrb[0].mxu0
      %v583 = vadd.f32 %v521, %v582
      %v584 = vpop.f32.mrb[0].mxu0
      %v585 = vpop.f32.mrb[0].mxu0
      %v586 = vadd.f32 %v521, %v585
      %v587 = vpop.f32.mrb[0].mxu0
      %588 = vmatprep.mubr.bf16.mxu0 0
      %589 = vmatmul.mubr.bf16.gmra.mrb[0].mxu0 %v543
      %v590 = vpop.f32.mrb[0].mxu0
      %v591 = vadd.f32 %v521, %v590
      %v592 = vpop.f32.mrb[0].mxu0
      %v593 = vpop.f32.mrb[0].mxu0
      %v594 = vadd.f32 %v521, %v593
      %v595 = vpop.f32.mrb[0].mxu0
      %596 = vdwg.mxu0
      %v597 = vmax.f32 %v583, 0.0
      %v598 = vmax.f32 %v586, 0.0
      %v599 = vmax.f32 %v591, 0.0
      %v600 = vmax.f32 %v594, 0.0
      %v601 = vpack.c.bf16 %v597, %v597
      %v602 = vpack.c.bf16 %v598, %v598
      %v603 = vpack.c.bf16 %v599, %v599
      %v604 = vpack.c.bf16 %v600, %v600
      %vm605 = vcmask 125952
      %606 = vst.msk [vmem:[%s226] sm:$0xf] %vm605, %v601
      %607 = vst.msk [vmem:[%s226 + $0x4] sm:$0xf] %vm605, %v602
      %608 = vst.msk [vmem:[%s226 + $0x8] sm:$0xf] %vm605, %v603
      %609 = vst.msk [vmem:[%s226 + $0xc] sm:$0xf] %vm605, %v604
      %s610 = smul.u32 4, %s16
      %p611 = scmp.lt.s32.totalorder %s610, 15
      %s612 = scalar_select %p611, %s610, 15
      %s613 = smul.addr %s612, 4
      %s614 = scalar_lea.vmem %s5, %s613
      // Predicated region
      $region41: #{range_fire_up_forward.2} parent=39 // pred_check
        %p615 = pneg %p144
      $region42: #{range_fire_up_forward.2} parent=39 // pred_check_branch
        %617 = sbr.rel (%p615) target = $region44
      $region43: #{range_fire_up_forward.2} parent=39 // pred_region
        %s618 = smul.u32 4, %s16
      $region44: #{range_fire_up_forward.2} parent=39 // pred_fallthru
        _
    $region40: #{range_fire_up_forward.2} parent=5 // pred_fallthru
      _
    %p619 = scmp.le.s32.totalorder 2, %s11
    // Predicated region
    $region45: #{range_fire_up_forward.2} parent=5 // pred_check
      %p620 = pneg %p619
    $region46: #{range_fire_up_forward.2} parent=5 // pred_check_branch
      %622 = sbr.rel (%p620) target = $region48
    $region47: #{range_fire_up_forward.2} parent=5 // pred_region
      %s623 = ssub.s32 %s11, 2
      // Predicated region
      $region49: #{range_fire_up_forward.2} parent=47 // pred_check
        %p624 = pneg %p150
      $region50: #{range_fire_up_forward.2} parent=47 // pred_check_branch
        %626 = sbr.rel (%p624) target = $region52
      $region51: #{range_fire_up_forward.2} parent=47 // pred_region
        %s627 = smul.u32 4, %s17
        %p628 = scmp.lt.s32.totalorder %s627, 15
        %s629 = scalar_select %p628, %s627, 15
        %s630 = smul.addr %s629, 4
        %s631 = scalar_lea.vmem %s5, %s630
      $region52: #{range_fire_up_forward.2} parent=47 // pred_fallthru
        _
    $region48: #{range_fire_up_forward.2} parent=5 // pred_fallthru
      _
  $region6: #{range_fire_up_forward.2} parent=0 // loop_footer
    %s15 = sadd.s32 1, %s11
  $region7: #{range_fire_up_forward.2} parent=0 // loop_footer_branch
    %10 = sbr.rel target = $region3
  $region8: #{range_fire_up_forward.2} parent=0 // loop_exit
    _

// kernel: range_fire_up_forward.3
$region0: #{range_fire_up_forward.3}
  #allocation0 [shape = 'u32[]', space=smem, size = 0x4, offset = 0x4, fixed_abs, tag = 'smem constant byte address 0x4 - core index']
  #allocation1 [shape = 'u32[144,128]{1,0:T(1,128)}', space=vmem, size = 0x12000, scoped, tag = 'internal scratch']
  %s0 = inlined_call_operand.vmem [shape: bf16[2,8,16,8], index: 0, kind: input, shape index: {}, may-alias: {0,1,2}]
  %s1 = inlined_call_operand.vmem [shape: bf16[2,8,16,8], index: 1, kind: input, shape index: {}, may-alias: {0,1,2}]
  %s2 = inlined_call_operand.vmem [shape: bf16[2,8,16,8], index: 2, kind: input, shape index: {}, may-alias: {0,1,2}]
  %s3 = inlined_call_operand.vmem [shape: f32[2,8,16,1], index: 3, kind: input, shape index: {}, may-alias: {3,4,5}]
  %s4 = inlined_call_operand.vmem [shape: f32[2,8,16,1], index: 4, kind: input, shape index: {}, may-alias: {3,4,5}]
  %s5 = inlined_call_operand.vmem [shape: f32[2,8,16,1], index: 5, kind: input, shape index: {}, may-alias: {3,4,5}]
  %s6 = inlined_call_operand.vmem [shape: bf16[8,16], index: 6, kind: input, shape index: {}]
  %s7 = inlined_call_operand.vmem [shape: f32[1,16], index: 7, kind: input, shape index: {}]
  %s8 = inlined_call_operand.vmem [shape: bf16[9,8,16], index: 8, kind: input, shape index: {}]
  %s9 = inlined_call_operand.vmem [shape: f32[1,16], index: 9, kind: input, shape index: {}]
  %s10 = inlined_call_operand.vmem [shape: f32[1,16], index: 10, kind: input, shape index: {}]
  %s11 = inlined_call_operand.vmem [shape: f32[1,16], index: 11, kind: input, shape index: {}]
  %s12 = inlined_call_operand.vmem [shape: bf16[2,8,16,32], index: 12, kind: output, shape index: {}]
  %s13 = sld [smem:[#allocation0]]
  $region81: #{range_fire_up_forward.3} parent=0
    _
  %s15 = ssub.s32 1, %s13
  %s16 = scalar_select 0, %s15, %s13
  loop: start=0, step=1, limit=6
  $region2: #{range_fire_up_forward.3} parent=0 // loop_pre_header
    _
  $region3: #{range_fire_up_forward.3} parent=0 // loop_header
    %s18 = sphi 0, %s22
    %p19 = scmp.ge.s32.totalorder %s18, 6
    %s25 = sphi 0, %s37
    %s26 = sphi 0, %s33
    %s27 = sphi 0, %s25
    %s28 = sphi 0, %s26
    %s29 = sphi 0, %s27
    %s30 = sphi 0, %s28
    %s42 = sphi 0, %s44
    %s45 = sphi 0, %s42
    %s46 = sphi 0, %s45
    %s62 = sphi 0, %s46
    %s78 = sphi 0, %s80
    %s81 = sphi 0, %s78
    %s82 = sphi 0, %s81
    %s98 = sphi 0, %s82
    %s114 = sphi 0, %s116
    %s117 = sphi 0, %s114
    %s118 = sphi 0, %s117
    %s134 = sphi 0, %s118
    %s142 = sphi 0, %s144
    %s145 = sphi 0, %s142
    %s146 = sphi 0, %s145
    %s162 = sphi 0, %s146
    %s178 = sphi 0, %s180
    %s181 = sphi 0, %s178
    %s182 = sphi 0, %s181
    %s198 = sphi 0, %s182
    %s214 = sphi 0, %s216
    %s217 = sphi 0, %s214
    %s218 = sphi 0, %s217
    %s234 = sphi 0, %s218
    %s238 = sphi 0, %s238
    %s240 = sphi 0, %s238
    %s241 = sphi 0, %s240
    %s255 = sphi 0, %s241
    %s259 = sphi 0, %s259
    %s261 = sphi 0, %s259
    %s262 = sphi 0, %s261
    %s276 = sphi 0, %s262
    %s280 = sphi 0, %s280
    %s282 = sphi 0, %s280
    %s283 = sphi 0, %s282
    %s297 = sphi 0, %s283
    %s301 = sphi 0, %s301
    %s303 = sphi 0, %s301
    %s304 = sphi 0, %s303
    %s318 = sphi 0, %s304
    %s322 = sphi 0, %s322
    %s324 = sphi 0, %s322
    %s325 = sphi 0, %s324
    %s339 = sphi 0, %s325
    %s343 = sphi 0, %s343
    %s345 = sphi 0, %s343
    %s346 = sphi 0, %s345
    %s360 = sphi 0, %s346
    %s368 = sphi 0, %s370
    %s371 = sphi 0, %s368
    %s372 = sphi 0, %s371
    %s388 = sphi 0, %s372
  $region4: #{range_fire_up_forward.3} parent=0 // loop_header_branch
    %21 = sbr.rel (%p19) target = $region8
  $region5: #{range_fire_up_forward.3} parent=0 // loop_body
    %s23 = ssub.s32 %s18, 1
    %s24 = ssub.s32 %s18, 2
    %s31 = sadd.s32 1, %s26
    %p32 = scmp.ge.s32.totalorder %s31, 2
    %s33 = scalar_select %p32, 0, %s31
    %s34 = sadd.s32 1, %s25
    %s35 = scalar_select %p32, %s34, %s25
    %p36 = scmp.ge.s32.totalorder %s35, 2
    %s37 = scalar_select %p36, 0, %s35
    %s38 = ssub.s32 %s25, %s37
    %s39 = ssub.s32 %s26, %s33
    %s40 = sor.u32 %s38, %s39
    %p41 = scmp.eq.s32.totalorder %s40, 0
    %s43 = sadd.s32 %s42, 1
    %s44 = scalar_select %p41, %s42, %s43
    %p47 = pneg %p41
    %p48 = scmp.eq.s32.totalorder %s18, 3
    %p49 = por %p47, %p48
    %p50 = scmp.ne.s32.totalorder %s42, %s45
    %p51 = scmp.eq.s32.totalorder %s18, 0
    %p52 = por %p50, %p51
    %p53 = scmp.ne.s32.totalorder %s42, %s45
    %p54 = scmp.eq.s32.totalorder %s23, 3
    %p55 = por %p53, %p54
    %p56 = scmp.ne.s32.totalorder %s45, %s46
    %p57 = scmp.eq.s32.totalorder %s23, 0
    %p58 = por %p56, %p57
    %p59 = scmp.ne.s32.totalorder %s45, %s46
    %p60 = scmp.eq.s32.totalorder %s24, 3
    %p61 = por %p59, %p60
    %p63 = scmp.ne.s32.totalorder %s46, %s62
    %p64 = scmp.eq.s32.totalorder %s24, 0
    %p65 = por %p63, %p64
    %s66 = smul.u32 %s26, 4
    %s67 = ssub.s32 %s66, 1
    %p68 = scmp.gt.s32.totalorder %s67, 0
    %s69 = scalar_select %p68, %s67, 0
    %s70 = smul.u32 %s33, 4
    %s71 = ssub.s32 %s70, 1
    %p72 = scmp.gt.s32.totalorder %s71, 0
    %s73 = scalar_select %p72, %s71, 0
    %s74 = ssub.s32 %s25, %s37
    %s75 = ssub.s32 %s69, %s73
    %s76 = sor.u32 %s74, %s75
    %p77 = scmp.eq.s32.totalorder %s76, 0
    %s79 = sadd.s32 %s78, 1
    %s80 = scalar_select %p77, %s78, %s79
    %p83 = pneg %p77
    %p84 = scmp.eq.s32.totalorder %s18, 3
    %p85 = por %p83, %p84
    %p86 = scmp.ne.s32.totalorder %s78, %s81
    %p87 = scmp.eq.s32.totalorder %s18, 0
    %p88 = por %p86, %p87
    %p89 = scmp.ne.s32.totalorder %s78, %s81
    %p90 = scmp.eq.s32.totalorder %s23, 3
    %p91 = por %p89, %p90
    %p92 = scmp.ne.s32.totalorder %s81, %s82
    %p93 = scmp.eq.s32.totalorder %s23, 0
    %p94 = por %p92, %p93
    %p95 = scmp.ne.s32.totalorder %s81, %s82
    %p96 = scmp.eq.s32.totalorder %s24, 3
    %p97 = por %p95, %p96
    %p99 = scmp.ne.s32.totalorder %s82, %s98
    %p100 = scmp.eq.s32.totalorder %s24, 0
    %p101 = por %p99, %p100
    %s102 = sadd.s32 %s26, 1
    %s103 = smul.u32 %s102, 4
    %p104 = scmp.lt.s32.totalorder %s103, 7
    %s105 = scalar_select %p104, %s103, 7
    %s106 = sadd.s32 %s33, 1
    %s107 = smul.u32 %s106, 4
    %p108 = scmp.lt.s32.totalorder %s107, 7
    %s109 = scalar_select %p108, %s107, 7
    %s110 = ssub.s32 %s25, %s37
    %s111 = ssub.s32 %s105, %s109
    %s112 = sor.u32 %s110, %s111
    %p113 = scmp.eq.s32.totalorder %s112, 0
    %s115 = sadd.s32 %s114, 1
    %s116 = scalar_select %p113, %s114, %s115
    %p119 = pneg %p113
    %p120 = scmp.eq.s32.totalorder %s18, 3
    %p121 = por %p119, %p120
    %p122 = scmp.ne.s32.totalorder %s114, %s117
    %p123 = scmp.eq.s32.totalorder %s18, 0
    %p124 = por %p122, %p123
    %p125 = scmp.ne.s32.totalorder %s114, %s117
    %p126 = scmp.eq.s32.totalorder %s23, 3
    %p127 = por %p125, %p126
    %p128 = scmp.ne.s32.totalorder %s117, %s118
    %p129 = scmp.eq.s32.totalorder %s23, 0
    %p130 = por %p128, %p129
    %p131 = scmp.ne.s32.totalorder %s117, %s118
    %p132 = scmp.eq.s32.totalorder %s24, 3
    %p133 = por %p131, %p132
    %p135 = scmp.ne.s32.totalorder %s118, %s134
    %p136 = scmp.eq.s32.totalorder %s24, 0
    %p137 = por %p135, %p136
    %s138 = ssub.s32 %s25, %s37
    %s139 = ssub.s32 %s26, %s33
    %s140 = sor.u32 %s138, %s139
    %p141 = scmp.eq.s32.totalorder %s140, 0
    %s143 = sadd.s32 %s142, 1
    %s144 = scalar_select %p141, %s142, %s143
    %p147 = pneg %p141
    %p148 = scmp.eq.s32.totalorder %s18, 3
    %p149 = por %p147, %p148
    %p150 = scmp.ne.s32.totalorder %s142, %s145
    %p151 = scmp.eq.s32.totalorder %s18, 0
    %p152 = por %p150, %p151
    %p153 = scmp.ne.s32.totalorder %s142, %s145
    %p154 = scmp.eq.s32.totalorder %s23, 3
    %p155 = por %p153, %p154
    %p156 = scmp.ne.s32.totalorder %s145, %s146
    %p157 = scmp.eq.s32.totalorder %s23, 0
    %p158 = por %p156, %p157
    %p159 = scmp.ne.s32.totalorder %s145, %s146
    %p160 = scmp.eq.s32.totalorder %s24, 3
    %p161 = por %p159, %p160
    %p163 = scmp.ne.s32.totalorder %s146, %s162
    %p164 = scmp.eq.s32.totalorder %s24, 0
    %p165 = por %p163, %p164
    %s166 = smul.u32 %s26, 4
    %s167 = ssub.s32 %s166, 1
    %p168 = scmp.gt.s32.totalorder %s167, 0
    %s169 = scalar_select %p168, %s167, 0
    %s170 = smul.u32 %s33, 4
    %s171 = ssub.s32 %s170, 1
    %p172 = scmp.gt.s32.totalorder %s171, 0
    %s173 = scalar_select %p172, %s171, 0
    %s174 = ssub.s32 %s25, %s37
    %s175 = ssub.s32 %s169, %s173
    %s176 = sor.u32 %s174, %s175
    %p177 = scmp.eq.s32.totalorder %s176, 0
    %s179 = sadd.s32 %s178, 1
    %s180 = scalar_select %p177, %s178, %s179
    %p183 = pneg %p177
    %p184 = scmp.eq.s32.totalorder %s18, 3
    %p185 = por %p183, %p184
    %p186 = scmp.ne.s32.totalorder %s178, %s181
    %p187 = scmp.eq.s32.totalorder %s18, 0
    %p188 = por %p186, %p187
    %p189 = scmp.ne.s32.totalorder %s178, %s181
    %p190 = scmp.eq.s32.totalorder %s23, 3
    %p191 = por %p189, %p190
    %p192 = scmp.ne.s32.totalorder %s181, %s182
    %p193 = scmp.eq.s32.totalorder %s23, 0
    %p194 = por %p192, %p193
    %p195 = scmp.ne.s32.totalorder %s181, %s182
    %p196 = scmp.eq.s32.totalorder %s24, 3
    %p197 = por %p195, %p196
    %p199 = scmp.ne.s32.totalorder %s182, %s198
    %p200 = scmp.eq.s32.totalorder %s24, 0
    %p201 = por %p199, %p200
    %s202 = sadd.s32 %s26, 1
    %s203 = smul.u32 %s202, 4
    %p204 = scmp.lt.s32.totalorder %s203, 7
    %s205 = scalar_select %p204, %s203, 7
    %s206 = sadd.s32 %s33, 1
    %s207 = smul.u32 %s206, 4
    %p208 = scmp.lt.s32.totalorder %s207, 7
    %s209 = scalar_select %p208, %s207, 7
    %s210 = ssub.s32 %s25, %s37
    %s211 = ssub.s32 %s205, %s209
    %s212 = sor.u32 %s210, %s211
    %p213 = scmp.eq.s32.totalorder %s212, 0
    %s215 = sadd.s32 %s214, 1
    %s216 = scalar_select %p213, %s214, %s215
    %p219 = pneg %p213
    %p220 = scmp.eq.s32.totalorder %s18, 3
    %p221 = por %p219, %p220
    %p222 = scmp.ne.s32.totalorder %s214, %s217
    %p223 = scmp.eq.s32.totalorder %s18, 0
    %p224 = por %p222, %p223
    %p225 = scmp.ne.s32.totalorder %s214, %s217
    %p226 = scmp.eq.s32.totalorder %s23, 3
    %p227 = por %p225, %p226
    %p228 = scmp.ne.s32.totalorder %s217, %s218
    %p229 = scmp.eq.s32.totalorder %s23, 0
    %p230 = por %p228, %p229
    %p231 = scmp.ne.s32.totalorder %s217, %s218
    %p232 = scmp.eq.s32.totalorder %s24, 3
    %p233 = por %p231, %p232
    %p235 = scmp.ne.s32.totalorder %s218, %s234
    %p236 = scmp.eq.s32.totalorder %s24, 0
    %p237 = por %p235, %p236
    %s239 = sadd.s32 %s238, 1
    %p242 = scmp.eq.s32.totalorder %s18, 3
    %p243 = scmp.ne.s32.totalorder %s238, %s240
    %p244 = scmp.eq.s32.totalorder %s18, 0
    %p245 = por %p243, %p244
    %p246 = scmp.ne.s32.totalorder %s238, %s240
    %p247 = scmp.eq.s32.totalorder %s23, 3
    %p248 = por %p246, %p247
    %p249 = scmp.ne.s32.totalorder %s240, %s241
    %p250 = scmp.eq.s32.totalorder %s23, 0
    %p251 = por %p249, %p250
    %p252 = scmp.ne.s32.totalorder %s240, %s241
    %p253 = scmp.eq.s32.totalorder %s24, 3
    %p254 = por %p252, %p253
    %p256 = scmp.ne.s32.totalorder %s241, %s255
    %p257 = scmp.eq.s32.totalorder %s24, 0
    %p258 = por %p256, %p257
    %s260 = sadd.s32 %s259, 1
    %p263 = scmp.eq.s32.totalorder %s18, 3
    %p264 = scmp.ne.s32.totalorder %s259, %s261
    %p265 = scmp.eq.s32.totalorder %s18, 0
    %p266 = por %p264, %p265
    %p267 = scmp.ne.s32.totalorder %s259, %s261
    %p268 = scmp.eq.s32.totalorder %s23, 3
    %p269 = por %p267, %p268
    %p270 = scmp.ne.s32.totalorder %s261, %s262
    %p271 = scmp.eq.s32.totalorder %s23, 0
    %p272 = por %p270, %p271
    %p273 = scmp.ne.s32.totalorder %s261, %s262
    %p274 = scmp.eq.s32.totalorder %s24, 3
    %p275 = por %p273, %p274
    %p277 = scmp.ne.s32.totalorder %s262, %s276
    %p278 = scmp.eq.s32.totalorder %s24, 0
    %p279 = por %p277, %p278
    %s281 = sadd.s32 %s280, 1
    %p284 = scmp.eq.s32.totalorder %s18, 3
    %p285 = scmp.ne.s32.totalorder %s280, %s282
    %p286 = scmp.eq.s32.totalorder %s18, 0
    %p287 = por %p285, %p286
    %p288 = scmp.ne.s32.totalorder %s280, %s282
    %p289 = scmp.eq.s32.totalorder %s23, 3
    %p290 = por %p288, %p289
    %p291 = scmp.ne.s32.totalorder %s282, %s283
    %p292 = scmp.eq.s32.totalorder %s23, 0
    %p293 = por %p291, %p292
    %p294 = scmp.ne.s32.totalorder %s282, %s283
    %p295 = scmp.eq.s32.totalorder %s24, 3
    %p296 = por %p294, %p295
    %p298 = scmp.ne.s32.totalorder %s283, %s297
    %p299 = scmp.eq.s32.totalorder %s24, 0
    %p300 = por %p298, %p299
    %s302 = sadd.s32 %s301, 1
    %p305 = scmp.eq.s32.totalorder %s18, 3
    %p306 = scmp.ne.s32.totalorder %s301, %s303
    %p307 = scmp.eq.s32.totalorder %s18, 0
    %p308 = por %p306, %p307
    %p309 = scmp.ne.s32.totalorder %s301, %s303
    %p310 = scmp.eq.s32.totalorder %s23, 3
    %p311 = por %p309, %p310
    %p312 = scmp.ne.s32.totalorder %s303, %s304
    %p313 = scmp.eq.s32.totalorder %s23, 0
    %p314 = por %p312, %p313
    %p315 = scmp.ne.s32.totalorder %s303, %s304
    %p316 = scmp.eq.s32.totalorder %s24, 3
    %p317 = por %p315, %p316
    %p319 = scmp.ne.s32.totalorder %s304, %s318
    %p320 = scmp.eq.s32.totalorder %s24, 0
    %p321 = por %p319, %p320
    %s323 = sadd.s32 %s322, 1
    %p326 = scmp.eq.s32.totalorder %s18, 3
    %p327 = scmp.ne.s32.totalorder %s322, %s324
    %p328 = scmp.eq.s32.totalorder %s18, 0
    %p329 = por %p327, %p328
    %p330 = scmp.ne.s32.totalorder %s322, %s324
    %p331 = scmp.eq.s32.totalorder %s23, 3
    %p332 = por %p330, %p331
    %p333 = scmp.ne.s32.totalorder %s324, %s325
    %p334 = scmp.eq.s32.totalorder %s23, 0
    %p335 = por %p333, %p334
    %p336 = scmp.ne.s32.totalorder %s324, %s325
    %p337 = scmp.eq.s32.totalorder %s24, 3
    %p338 = por %p336, %p337
    %p340 = scmp.ne.s32.totalorder %s325, %s339
    %p341 = scmp.eq.s32.totalorder %s24, 0
    %p342 = por %p340, %p341
    %s344 = sadd.s32 %s343, 1
    %p347 = scmp.eq.s32.totalorder %s18, 3
    %p348 = scmp.ne.s32.totalorder %s343, %s345
    %p349 = scmp.eq.s32.totalorder %s18, 0
    %p350 = por %p348, %p349
    %p351 = scmp.ne.s32.totalorder %s343, %s345
    %p352 = scmp.eq.s32.totalorder %s23, 3
    %p353 = por %p351, %p352
    %p354 = scmp.ne.s32.totalorder %s345, %s346
    %p355 = scmp.eq.s32.totalorder %s23, 0
    %p356 = por %p354, %p355
    %p357 = scmp.ne.s32.totalorder %s345, %s346
    %p358 = scmp.eq.s32.totalorder %s24, 3
    %p359 = por %p357, %p358
    %p361 = scmp.ne.s32.totalorder %s346, %s360
    %p362 = scmp.eq.s32.totalorder %s24, 0
    %p363 = por %p361, %p362
    %s364 = ssub.s32 %s25, %s37
    %s365 = ssub.s32 %s26, %s33
    %s366 = sor.u32 %s364, %s365
    %p367 = scmp.eq.s32.totalorder %s366, 0
    %s369 = sadd.s32 %s368, 1
    %s370 = scalar_select %p367, %s368, %s369
    %p373 = pneg %p367
    %p374 = scmp.eq.s32.totalorder %s18, 3
    %p375 = por %p373, %p374
    %p376 = scmp.ne.s32.totalorder %s368, %s371
    %p377 = scmp.eq.s32.totalorder %s18, 0
    %p378 = por %p376, %p377
    %p379 = scmp.ne.s32.totalorder %s368, %s371
    %p380 = scmp.eq.s32.totalorder %s23, 3
    %p381 = por %p379, %p380
    %p382 = scmp.ne.s32.totalorder %s371, %s372
    %p383 = scmp.eq.s32.totalorder %s23, 0
    %p384 = por %p382, %p383
    %p385 = scmp.ne.s32.totalorder %s371, %s372
    %p386 = scmp.eq.s32.totalorder %s24, 3
    %p387 = por %p385, %p386
    %p389 = scmp.ne.s32.totalorder %s372, %s388
    %p390 = scmp.eq.s32.totalorder %s24, 0
    %p391 = por %p389, %p390
    %p392 = scmp.le.s32.totalorder 1, %s18
    %p393 = scmp.lt.s32.totalorder %s18, 5
    %p394 = pnand %p392, %p393
    %p395 = pneg %p394
    // Predicated region
    $region9: #{range_fire_up_forward.3} parent=5 // pred_check
      _
    $region10: #{range_fire_up_forward.3} parent=5 // pred_check_branch
      %397 = sbr.rel (%p394) target = $region12
    $region11: #{range_fire_up_forward.3} parent=5 // pred_region
      %s398 = ssub.s32 %s18, 1
      // Predicated region
      $region13: #{range_fire_up_forward.3} parent=11 // pred_check
        %p399 = pneg %p251
      $region14: #{range_fire_up_forward.3} parent=11 // pred_check_branch
        %401 = sbr.rel (%p399) target = $region16
      $region15: #{range_fire_up_forward.3} parent=11 // pred_region
        _
      $region16: #{range_fire_up_forward.3} parent=11 // pred_fallthru
        _
      // Predicated region
      $region17: #{range_fire_up_forward.3} parent=11 // pred_check
        %p402 = pneg %p272
      $region18: #{range_fire_up_forward.3} parent=11 // pred_check_branch
        %404 = sbr.rel (%p402) target = $region20
      $region19: #{range_fire_up_forward.3} parent=11 // pred_region
        _
      $region20: #{range_fire_up_forward.3} parent=11 // pred_fallthru
        _
      // Predicated region
      $region21: #{range_fire_up_forward.3} parent=11 // pred_check
        %p405 = pneg %p293
      $region22: #{range_fire_up_forward.3} parent=11 // pred_check_branch
        %407 = sbr.rel (%p405) target = $region24
      $region23: #{range_fire_up_forward.3} parent=11 // pred_region
        _
      $region24: #{range_fire_up_forward.3} parent=11 // pred_fallthru
        _
      // Predicated region
      $region25: #{range_fire_up_forward.3} parent=11 // pred_check
        %p408 = pneg %p314
      $region26: #{range_fire_up_forward.3} parent=11 // pred_check_branch
        %410 = sbr.rel (%p408) target = $region28
      $region27: #{range_fire_up_forward.3} parent=11 // pred_region
        _
      $region28: #{range_fire_up_forward.3} parent=11 // pred_fallthru
        _
      // Predicated region
      $region29: #{range_fire_up_forward.3} parent=11 // pred_check
        %p411 = pneg %p335
      $region30: #{range_fire_up_forward.3} parent=11 // pred_check_branch
        %413 = sbr.rel (%p411) target = $region32
      $region31: #{range_fire_up_forward.3} parent=11 // pred_region
        _
      $region32: #{range_fire_up_forward.3} parent=11 // pred_fallthru
        _
      // Predicated region
      $region33: #{range_fire_up_forward.3} parent=11 // pred_check
        %p414 = pneg %p356
      $region34: #{range_fire_up_forward.3} parent=11 // pred_check_branch
        %416 = sbr.rel (%p414) target = $region36
      $region35: #{range_fire_up_forward.3} parent=11 // pred_region
        _
      $region36: #{range_fire_up_forward.3} parent=11 // pred_fallthru
        _
    $region12: #{range_fire_up_forward.3} parent=5 // pred_fallthru
      _
    %p417 = scmp.lt.s32.totalorder %s18, 4
    // Predicated region
    $region37: #{range_fire_up_forward.3} parent=5 // pred_check
      %p418 = pneg %p417
    $region38: #{range_fire_up_forward.3} parent=5 // pred_check_branch
      %420 = sbr.rel (%p418) target = $region40
    $region39: #{range_fire_up_forward.3} parent=5 // pred_region
      // Predicated region
      $region41: #{range_fire_up_forward.3} parent=39 // pred_check
        %p421 = pneg %p52
      $region42: #{range_fire_up_forward.3} parent=39 // pred_check_branch
        %423 = sbr.rel (%p421) target = $region44
      $region43: #{range_fire_up_forward.3} parent=39 // pred_region
        %s424 = smul.u32 4, %s26
        %p425 = scmp.lt.s32.totalorder %s25, 1
        %s426 = scalar_select %p425, %s25, 1
        %p427 = scmp.lt.s32.totalorder %s424, 7
        %s428 = scalar_select %p427, %s424, 7
        %s429 = smul.addr %s428, 2
        %s430 = smul.addr %s426, 16
        %s431 = sadd.s32 %s429, %s430
        %s432 = smul.addr %s431, 4
        %s433 = scalar_lea.vmem %s0, %s432
        %s434 = smul.u32 4, %s26
      $region44: #{range_fire_up_forward.3} parent=39 // pred_fallthru
        _
      // Predicated region
      $region45: #{range_fire_up_forward.3} parent=39 // pred_check
        %p435 = pneg %p88
      $region46: #{range_fire_up_forward.3} parent=39 // pred_check_branch
        %437 = sbr.rel (%p435) target = $region48
      $region47: #{range_fire_up_forward.3} parent=39 // pred_region
        %s438 = smul.u32 %s26, 4
        %s439 = ssub.s32 %s438, 1
        %p440 = scmp.gt.s32.totalorder %s439, 0
        %s441 = scalar_select %p440, %s439, 0
        %p442 = scmp.lt.s32.totalorder %s25, 1
        %s443 = scalar_select %p442, %s25, 1
        %p444 = scmp.lt.s32.totalorder %s441, 7
        %s445 = scalar_select %p444, %s441, 7
        %s446 = smul.addr %s445, 2
        %s447 = smul.addr %s443, 16
        %s448 = sadd.s32 %s446, %s447
        %s449 = smul.addr %s448, 4
        %s450 = scalar_lea.vmem %s1, %s449
        %s451 = smul.u32 %s26, 4
        %s452 = ssub.s32 %s451, 1
        %p453 = scmp.gt.s32.totalorder %s452, 0
        %s454 = scalar_select %p453, %s452, 0
      $region48: #{range_fire_up_forward.3} parent=39 // pred_fallthru
        _
      // Predicated region
      $region49: #{range_fire_up_forward.3} parent=39 // pred_check
        %p455 = pneg %p124
      $region50: #{range_fire_up_forward.3} parent=39 // pred_check_branch
        %457 = sbr.rel (%p455) target = $region52
      $region51: #{range_fire_up_forward.3} parent=39 // pred_region
        %s458 = sadd.s32 %s26, 1
        %s459 = smul.u32 %s458, 4
        %p460 = scmp.lt.s32.totalorder %s459, 7
        %s461 = scalar_select %p460, %s459, 7
        %p462 = scmp.lt.s32.totalorder %s25, 1
        %s463 = scalar_select %p462, %s25, 1
        %p464 = scmp.lt.s32.totalorder %s461, 7
        %s465 = scalar_select %p464, %s461, 7
        %s466 = smul.addr %s465, 2
        %s467 = smul.addr %s463, 16
        %s468 = sadd.s32 %s466, %s467
        %s469 = smul.addr %s468, 4
        %s470 = scalar_lea.vmem %s2, %s469
        %s471 = sadd.s32 %s26, 1
        %s472 = smul.u32 %s471, 4
        %p473 = scmp.lt.s32.totalorder %s472, 7
        %s474 = scalar_select %p473, %s472, 7
      $region52: #{range_fire_up_forward.3} parent=39 // pred_fallthru
        _
      // Predicated region
      $region53: #{range_fire_up_forward.3} parent=39 // pred_check
        %p475 = pneg %p152
      $region54: #{range_fire_up_forward.3} parent=39 // pred_check_branch
        %477 = sbr.rel (%p475) target = $region56
      $region55: #{range_fire_up_forward.3} parent=39 // pred_region
        %s478 = smul.u32 4, %s26
        %p479 = scmp.lt.s32.totalorder %s25, 1
        %s480 = scalar_select %p479, %s25, 1
        %p481 = scmp.lt.s32.totalorder %s478, 7
        %s482 = scalar_select %p481, %s478, 7
        %s483 = smul.addr %s482, 2
        %s484 = smul.addr %s480, 16
        %s485 = sadd.s32 %s483, %s484
        %s486 = smul.addr %s485, 8
        %s487 = scalar_lea.vmem %s3, %s486
        %s488 = smul.u32 4, %s26
      $region56: #{range_fire_up_forward.3} parent=39 // pred_fallthru
        _
      // Predicated region
      $region57: #{range_fire_up_forward.3} parent=39 // pred_check
        %p489 = pneg %p188
      $region58: #{range_fire_up_forward.3} parent=39 // pred_check_branch
        %491 = sbr.rel (%p489) target = $region60
      $region59: #{range_fire_up_forward.3} parent=39 // pred_region
        %s492 = smul.u32 %s26, 4
        %s493 = ssub.s32 %s492, 1
        %p494 = scmp.gt.s32.totalorder %s493, 0
        %s495 = scalar_select %p494, %s493, 0
        %p496 = scmp.lt.s32.totalorder %s25, 1
        %s497 = scalar_select %p496, %s25, 1
        %p498 = scmp.lt.s32.totalorder %s495, 7
        %s499 = scalar_select %p498, %s495, 7
        %s500 = smul.addr %s499, 2
        %s501 = smul.addr %s497, 16
        %s502 = sadd.s32 %s500, %s501
        %s503 = smul.addr %s502, 8
        %s504 = scalar_lea.vmem %s4, %s503
        %s505 = smul.u32 %s26, 4
        %s506 = ssub.s32 %s505, 1
        %p507 = scmp.gt.s32.totalorder %s506, 0
        %s508 = scalar_select %p507, %s506, 0
      $region60: #{range_fire_up_forward.3} parent=39 // pred_fallthru
        _
      // Predicated region
      $region61: #{range_fire_up_forward.3} parent=39 // pred_check
        %p509 = pneg %p224
      $region62: #{range_fire_up_forward.3} parent=39 // pred_check_branch
        %511 = sbr.rel (%p509) target = $region64
      $region63: #{range_fire_up_forward.3} parent=39 // pred_region
        %s512 = sadd.s32 %s26, 1
        %s513 = smul.u32 %s512, 4
        %p514 = scmp.lt.s32.totalorder %s513, 7
        %s515 = scalar_select %p514, %s513, 7
        %p516 = scmp.lt.s32.totalorder %s25, 1
        %s517 = scalar_select %p516, %s25, 1
        %p518 = scmp.lt.s32.totalorder %s515, 7
        %s519 = scalar_select %p518, %s515, 7
        %s520 = smul.addr %s519, 2
        %s521 = smul.addr %s517, 16
        %s522 = sadd.s32 %s520, %s521
        %s523 = smul.addr %s522, 8
        %s524 = scalar_lea.vmem %s5, %s523
        %s525 = sadd.s32 %s26, 1
        %s526 = smul.u32 %s525, 4
        %p527 = scmp.lt.s32.totalorder %s526, 7
        %s528 = scalar_select %p527, %s526, 7
      $region64: #{range_fire_up_forward.3} parent=39 // pred_fallthru
        _
    $region40: #{range_fire_up_forward.3} parent=5 // pred_fallthru
      _
    %p529 = scmp.le.s32.totalorder 1, %s18
    %p530 = scmp.lt.s32.totalorder %s18, 5
    %p531 = pnand %p529, %p530
    %p532 = pneg %p531
    // Predicated region
    $region65: #{range_fire_up_forward.3} parent=5 // pred_check
      _
    $region66: #{range_fire_up_forward.3} parent=5 // pred_check_branch
      %534 = sbr.rel (%p531) target = $region68
    $region67: #{range_fire_up_forward.3} parent=5 // pred_region
      %s535 = ssub.s32 %s18, 1
      %s536 = smul.u32 4, %s28
      %p537 = scmp.lt.s32.totalorder %s27, 1
      %s538 = scalar_select %p537, %s27, 1
      %p539 = scmp.lt.s32.totalorder %s536, 7
      %s540 = scalar_select %p539, %s536, 7
      %s541 = smul.addr %s540, 2
      %s542 = smul.addr %s538, 16
      %s543 = sadd.s32 %s541, %s542
      %s544 = smul.addr %s543, 4
      %s545 = scalar_lea.vmem %s0, %s544
      %p546 = pneg %p58
      %p547 = pneg %p55
      %s548 = smul.u32 %s28, 4
      %s549 = ssub.s32 %s548, 1
      %p550 = scmp.gt.s32.totalorder %s549, 0
      %s551 = scalar_select %p550, %s549, 0
      %p552 = scmp.lt.s32.totalorder %s27, 1
      %s553 = scalar_select %p552, %s27, 1
      %p554 = scmp.lt.s32.totalorder %s551, 7
      %s555 = scalar_select %p554, %s551, 7
      %s556 = smul.addr %s555, 2
      %s557 = smul.addr %s553, 16
      %s558 = sadd.s32 %s556, %s557
      %s559 = smul.addr %s558, 4
      %s560 = scalar_lea.vmem %s1, %s559
      %p561 = pneg %p94
      %p562 = pneg %p91
      %s563 = sadd.s32 %s28, 1
      %s564 = smul.u32 %s563, 4
      %p565 = scmp.lt.s32.totalorder %s564, 7
      %s566 = scalar_select %p565, %s564, 7
      %p567 = scmp.lt.s32.totalorder %s27, 1
      %s568 = scalar_select %p567, %s27, 1
      %p569 = scmp.lt.s32.totalorder %s566, 7
      %s570 = scalar_select %p569, %s566, 7
      %s571 = smul.addr %s570, 2
      %s572 = smul.addr %s568, 16
      %s573 = sadd.s32 %s571, %s572
      %s574 = smul.addr %s573, 4
      %s575 = scalar_lea.vmem %s2, %s574
      %p576 = pneg %p130
      %p577 = pneg %p127
      %s578 = smul.u32 4, %s28
      %p579 = scmp.lt.s32.totalorder %s27, 1
      %s580 = scalar_select %p579, %s27, 1
      %p581 = scmp.lt.s32.totalorder %s578, 7
      %s582 = scalar_select %p581, %s578, 7
      %s583 = smul.addr %s582, 2
      %s584 = smul.addr %s580, 16
      %s585 = sadd.s32 %s583, %s584
      %s586 = smul.addr %s585, 8
      %s587 = scalar_lea.vmem %s3, %s586
      %p588 = pneg %p158
      %p589 = pneg %p155
      %s590 = smul.u32 %s28, 4
      %s591 = ssub.s32 %s590, 1
      %p592 = scmp.gt.s32.totalorder %s591, 0
      %s593 = scalar_select %p592, %s591, 0
      %p594 = scmp.lt.s32.totalorder %s27, 1
      %s595 = scalar_select %p594, %s27, 1
      %p596 = scmp.lt.s32.totalorder %s593, 7
      %s597 = scalar_select %p596, %s593, 7
      %s598 = smul.addr %s597, 2
      %s599 = smul.addr %s595, 16
      %s600 = sadd.s32 %s598, %s599
      %s601 = smul.addr %s600, 8
      %s602 = scalar_lea.vmem %s4, %s601
      %p603 = pneg %p194
      %p604 = pneg %p191
      %s605 = sadd.s32 %s28, 1
      %s606 = smul.u32 %s605, 4
      %p607 = scmp.lt.s32.totalorder %s606, 7
      %s608 = scalar_select %p607, %s606, 7
      %p609 = scmp.lt.s32.totalorder %s27, 1
      %s610 = scalar_select %p609, %s27, 1
      %p611 = scmp.lt.s32.totalorder %s608, 7
      %s612 = scalar_select %p611, %s608, 7
      %s613 = smul.addr %s612, 2
      %s614 = smul.addr %s610, 16
      %s615 = sadd.s32 %s613, %s614
      %s616 = smul.addr %s615, 8
      %s617 = scalar_lea.vmem %s5, %s616
      %p618 = pneg %p230
      %p619 = pneg %p227
      %p620 = pneg %p251
      %p621 = pneg %p248
      %p622 = pneg %p272
      %p623 = pneg %p269
      %p624 = pneg %p293
      %p625 = pneg %p290
      %p626 = pneg %p314
      %p627 = pneg %p311
      %p628 = pneg %p335
      %p629 = pneg %p332
      %p630 = pneg %p356
      %p631 = pneg %p353
      %p632 = pneg %p384
      %p633 = pneg %p381
      %s634 = smul.u32 4, %s28
      %p635 = scmp.lt.s32.totalorder %s27, 1
      %s636 = scalar_select %p635, %s27, 1
      %p637 = scmp.lt.s32.totalorder %s634, 7
      %s638 = scalar_select %p637, %s634, 7
      %s639 = smul.addr %s638, 2
      %s640 = smul.addr %s636, 16
      %s641 = sadd.s32 %s639, %s640
      %s642 = smul.addr %s641, 4
      %s643 = scalar_lea.vmem %s12, %s642
      %s644 = smul.u32 4, %s28
      %p645 = scmp.lt.s32.totalorder %s27, 1
      %s646 = scalar_select %p645, %s27, 1
      %p647 = scmp.lt.s32.totalorder %s644, 7
      %s648 = scalar_select %p647, %s644, 7
      %s649 = smul.addr %s648, 2
      %s650 = smul.addr %s646, 16
      %s651 = sadd.s32 %s649, %s650
      %s652 = smul.addr %s651, 4
      %s653 = scalar_lea.vmem %s0, %s652
      %s654 = smul.u32 4, %s28
      %s655 = smul.u32 %s28, 4
      %s656 = ssub.s32 %s655, 1
      %p657 = scmp.gt.s32.totalorder %s656, 0
      %s658 = scalar_select %p657, %s656, 0
      %p659 = scmp.lt.s32.totalorder %s27, 1
      %s660 = scalar_select %p659, %s27, 1
      %p661 = scmp.lt.s32.totalorder %s658, 7
      %s662 = scalar_select %p661, %s658, 7
      %s663 = smul.addr %s662, 2
      %s664 = smul.addr %s660, 16
      %s665 = sadd.s32 %s663, %s664
      %s666 = smul.addr %s665, 4
      %s667 = scalar_lea.vmem %s1, %s666
      %s668 = smul.u32 %s28, 4
      %s669 = ssub.s32 %s668, 1
      %p670 = scmp.gt.s32.totalorder %s669, 0
      %s671 = scalar_select %p670, %s669, 0
      %s672 = sadd.s32 %s28, 1
      %s673 = smul.u32 %s672, 4
      %p674 = scmp.lt.s32.totalorder %s673, 7
      %s675 = scalar_select %p674, %s673, 7
      %p676 = scmp.lt.s32.totalorder %s27, 1
      %s677 = scalar_select %p676, %s27, 1
      %p678 = scmp.lt.s32.totalorder %s675, 7
      %s679 = scalar_select %p678, %s675, 7
      %s680 = smul.addr %s679, 2
      %s681 = smul.addr %s677, 16
      %s682 = sadd.s32 %s680, %s681
      %s683 = smul.addr %s682, 4
      %s684 = scalar_lea.vmem %s2, %s683
      %s685 = sadd.s32 %s28, 1
      %s686 = smul.u32 %s685, 4
      %p687 = scmp.lt.s32.totalorder %s686, 7
      %s688 = scalar_select %p687, %s686, 7
      %s689 = smul.u32 4, %s28
      %p690 = scmp.lt.s32.totalorder %s27, 1
      %s691 = scalar_select %p690, %s27, 1
      %p692 = scmp.lt.s32.totalorder %s689, 7
      %s693 = scalar_select %p692, %s689, 7
      %s694 = smul.addr %s693, 2
      %s695 = smul.addr %s691, 16
      %s696 = sadd.s32 %s694, %s695
      %s697 = smul.addr %s696, 8
      %s698 = scalar_lea.vmem %s3, %s697
      %s699 = smul.u32 4, %s28
      %s700 = smul.u32 %s28, 4
      %s701 = ssub.s32 %s700, 1
      %p702 = scmp.gt.s32.totalorder %s701, 0
      %s703 = scalar_select %p702, %s701, 0
      %p704 = scmp.lt.s32.totalorder %s27, 1
      %s705 = scalar_select %p704, %s27, 1
      %p706 = scmp.lt.s32.totalorder %s703, 7
      %s707 = scalar_select %p706, %s703, 7
      %s708 = smul.addr %s707, 2
      %s709 = smul.addr %s705, 16
      %s710 = sadd.s32 %s708, %s709
      %s711 = smul.addr %s710, 8
      %s712 = scalar_lea.vmem %s4, %s711
      %s713 = smul.u32 %s28, 4
      %s714 = ssub.s32 %s713, 1
      %p715 = scmp.gt.s32.totalorder %s714, 0
      %s716 = scalar_select %p715, %s714, 0
      %s717 = sadd.s32 %s28, 1
      %s718 = smul.u32 %s717, 4
      %p719 = scmp.lt.s32.totalorder %s718, 7
      %s720 = scalar_select %p719, %s718, 7
      %p721 = scmp.lt.s32.totalorder %s27, 1
      %s722 = scalar_select %p721, %s27, 1
      %p723 = scmp.lt.s32.totalorder %s720, 7
      %s724 = scalar_select %p723, %s720, 7
      %s725 = smul.addr %s724, 2
      %s726 = smul.addr %s722, 16
      %s727 = sadd.s32 %s725, %s726
      %s728 = smul.addr %s727, 8
      %s729 = scalar_lea.vmem %s5, %s728
      %s730 = sadd.s32 %s28, 1
      %s731 = smul.u32 %s730, 4
      %p732 = scmp.lt.s32.totalorder %s731, 7
      %s733 = scalar_select %p732, %s731, 7
      %s734 = smul.u32 4, %s28
      %p735 = scmp.lt.s32.totalorder %s27, 1
      %s736 = scalar_select %p735, %s27, 1
      %p737 = scmp.lt.s32.totalorder %s734, 7
      %s738 = scalar_select %p737, %s734, 7
      %s739 = smul.addr %s738, 2
      %s740 = smul.addr %s736, 16
      %s741 = sadd.s32 %s739, %s740
      %s742 = smul.addr %s741, 4
      %s743 = scalar_lea.vmem %s12, %s742
      %s744 = smul.u32 4, %s28
      %v746 = vld [vmem:[%s653] sm:$0xf]
      %v747 = vld [vmem:[%s653 + $0x4] sm:$0xf]
      %v748 = vld [vmem:[%s653 + $0x8] sm:$0xf]
      %v749 = vld [vmem:[%s653 + $0xc] sm:$0xf]
      %v750 = vld [vmem:[%s653 + $0x10] sm:$0xf]
      %v751 = vld [vmem:[%s653 + $0x14] sm:$0xf]
      %v752 = vld [vmem:[%s653 + $0x18] sm:$0xf]
      %v753 = vld [vmem:[%s653 + $0x1c] sm:$0xf]
      %v754 = vld [vmem:[%s667] sm:$0xf]
      %v755 = vld [vmem:[%s667 + $0x4] sm:$0xf]
      %p756 = scmp.gt.s32.totalorder %s28, 0
      %s757 = scalar_select %p756, 1, 0
      %s758 = scvt.s32.f32 %s757
      %p760 = scmp.ne.f32.partialorder %s758, %s758
      %s761 = sshrl.u32 %s758, 16
      %s762 = sand.u32 %s761, 1
      %s763 = sadd.s32 32767, %s762
      %s764 = sadd.s32 %s758, %s763
      %s765 = sand.u32 %s764, 4294901760
      %s766 = scalar_select %p760, 2143289344, %s765
      %s768 = sshrl.u32 %s766, 16
      %s769 = sshll.u32 %s768, 16
      %s770 = sor.u32 %s768, %s769
      %v771 = vstv %s770
      %v773 = vmul.bf16 %v754, %v771
      %v774 = vmul.bf16 %v755, %v771
      %v775 = vld [vmem:[%s684] sm:$0xf]
      %v776 = vld [vmem:[%s684 + $0x4] sm:$0xf]
      %p777 = scmp.lt.s32.totalorder %s28, 1
      %s778 = scalar_select %p777, 1, 0
      %s779 = scvt.s32.f32 %s778
      %p781 = scmp.ne.f32.partialorder %s779, %s779
      %s782 = sshrl.u32 %s779, 16
      %s783 = sand.u32 %s782, 1
      %s784 = sadd.s32 32767, %s783
      %s785 = sadd.s32 %s779, %s784
      %s786 = sand.u32 %s785, 4294901760
      %s787 = scalar_select %p781, 2143289344, %s786
      %s789 = sshrl.u32 %s787, 16
      %s790 = sshll.u32 %s789, 16
      %s791 = sor.u32 %s789, %s790
      %v792 = vstv %s791
      %v794 = vmul.bf16 %v775, %v792
      %v795 = vmul.bf16 %v776, %v792
      %v796 = vld [vmem:[%s6] sm:$0xf]
      %v797 = vld [vmem:[%s7] sm:$0x1]
      %v799 = vlaneseq
      %v800 = vshrl.u32 %v799, 7
      %v801 = vsub.s32 0, %v800
      %v802 = vrot.slane %v797, %v801
      %v812 = vunpack.c.l.b16 %v746
      %v813 = vunpack.c.l.b16 %v747
      %v814 = vunpack.c.l.b16 %v748
      %v815 = vunpack.c.l.b16 %v749
      %v816 = vunpack.c.l.b16 %v750
      %v817 = vunpack.c.l.b16 %v751
      %v818 = vunpack.c.l.b16 %v752
      %v819 = vunpack.c.l.b16 %v753
      %v820 = vpack.c.b16 %v813, %v812
      %v821 = vpack.c.b16 %v815, %v814
      %v822 = vpack.c.b16 %v817, %v816
      %v823 = vpack.c.b16 %v819, %v818
      %vm824 = vcmask 64512
      %v826 = vsel %vm824, %v820, 0
      %v829 = vsel %vm824, %v821, 0
      %v832 = vsel %vm824, %v822, 0
      %v835 = vsel %vm824, %v823, 0
      %vm837 = vcmask 1043456
      %v839 = vsel %vm837, %v796, 0
      %841 = vmatprep.subr.bf16.mxu0 0
      %842 = vmatpush1.bf16.msra.mxu0 %v839
      %843 = vmatprep.subr.bf16.mxu0 0
      %844 = vmatpush1.bf16.msra.mxu0 0
      %845 = vmatprep.subr.bf16.mxu0 0
      %846 = vmatpush1.bf16.msra.mxu0 0
      %847 = vmatprep.subr.bf16.mxu0 0
      %848 = vmatpush1.bf16.msra.mxu0 0
      %849 = vmatprep.subr.bf16.mxu0 0
      %850 = vmatpush1.bf16.msra.mxu0 0
      %851 = vmatprep.subr.bf16.mxu0 0
      %852 = vmatpush1.bf16.msra.mxu0 0
      %853 = vmatprep.subr.bf16.mxu0 0
      %854 = vmatpush1.bf16.msra.mxu0 0
      %855 = vmatprep.subr.bf16.mxu0 0
      %856 = vmatpush1.bf16.msra.mxu0 0
      %857 = vmatprep.subr.bf16.mxu0 0
      %858 = vmatpush1.bf16.msra.mxu0 0
      %859 = vmatprep.subr.bf16.mxu0 0
      %860 = vmatpush1.bf16.msra.mxu0 0
      %861 = vmatprep.subr.bf16.mxu0 0
      %862 = vmatpush1.bf16.msra.mxu0 0
      %863 = vmatprep.subr.bf16.mxu0 0
      %864 = vmatpush1.bf16.msra.mxu0 0
      %865 = vmatprep.subr.bf16.mxu0 0
      %866 = vmatpush1.bf16.msra.mxu0 0
      %867 = vmatprep.subr.bf16.mxu0 0
      %868 = vmatpush1.bf16.msra.mxu0 0
      %869 = vmatprep.subr.bf16.mxu0 0
      %870 = vmatpush1.bf16.msra.mxu0 0
      %871 = vmatprep.subr.bf16.mxu0 0
      %872 = vmatpush1.bf16.msra.mxu0 0
      %873 = vmatprep.mubr.bf16.mxu0 0
      %874 = vmatmul.mubr.bf16.gmra.mrb[0].mxu0 %v826
      %v875 = vpop.f32.mrb[0].mxu0
      %v876 = vadd.f32 %v802, %v875
      %v877 = vpop.f32.mrb[0].mxu0
      %v878 = vpop.f32.mrb[0].mxu0
      %v879 = vadd.f32 %v802, %v878
      %v880 = vpop.f32.mrb[0].mxu0
      %881 = vmatprep.mubr.bf16.mxu0 0
      %882 = vmatmul.mubr.bf16.gmra.mrb[0].mxu0 %v829
      %v883 = vpop.f32.mrb[0].mxu0
      %v884 = vadd.f32 %v802, %v883
      %v885 = vpop.f32.mrb[0].mxu0
      %v886 = vpop.f32.mrb[0].mxu0
      %v887 = vadd.f32 %v802, %v886
      %v888 = vpop.f32.mrb[0].mxu0
      %889 = vmatprep.mubr.bf16.mxu0 0
      %890 = vmatmul.mubr.bf16.gmra.mrb[0].mxu0 %v832
      %v891 = vpop.f32.mrb[0].mxu0
      %v892 = vadd.f32 %v802, %v891
      %v893 = vpop.f32.mrb[0].mxu0
      %v894 = vpop.f32.mrb[0].mxu0
      %v895 = vadd.f32 %v802, %v894
      %v896 = vpop.f32.mrb[0].mxu0
      %897 = vmatprep.mubr.bf16.mxu0 0
      %898 = vmatmul.mubr.bf16.gmra.mrb[0].mxu0 %v835
      %v899 = vpop.f32.mrb[0].mxu0
      %v900 = vadd.f32 %v802, %v899
      %v901 = vpop.f32.mrb[0].mxu0
      %v902 = vpop.f32.mrb[0].mxu0
      %v903 = vadd.f32 %v802, %v902
      %v904 = vpop.f32.mrb[0].mxu0
      %905 = vdwg.mxu0
      %v906 = vmax.f32 %v876, 0.0
      %v907 = vmax.f32 %v879, 0.0
      %v908 = vmax.f32 %v884, 0.0
      %v909 = vmax.f32 %v887, 0.0
      %v910 = vmax.f32 %v892, 0.0
      %v911 = vmax.f32 %v895, 0.0
      %v912 = vmax.f32 %v900, 0.0
      %v913 = vmax.f32 %v903, 0.0
      %v918 = vunpack.c.l.b16 %v773
      %v919 = vunpack.c.l.b16 %v774
      %v920 = vunpack.c.l.b16 %v794
      %v921 = vunpack.c.l.b16 %v795
      %v922 = vpack.c.b16 %v919, %v918
      %v923 = vpack.c.b16 %v921, %v920
      %v925 = vshrl.u32 %v922, 16
      %v927 = vrot.slane %v925, 7
      %v928 = vshll.u32 %v922, 16
      %v930 = vor.u32 %v927, %v928
      %v931 = vshrl.u32 %v820, 16
      %v933 = vrot.slane %v931, 7
      %v934 = vshll.u32 %v820, 16
      %v936 = vor.u32 %v933, %v934
      %v937 = vshrl.u32 %v821, 16
      %v939 = vrot.slane %v937, 7
      %v940 = vshll.u32 %v821, 16
      %v942 = vor.u32 %v939, %v940
      %v943 = vshrl.u32 %v822, 16
      %v945 = vrot.slane %v943, 7
      %v946 = vshll.u32 %v822, 16
      %v948 = vor.u32 %v945, %v946
      %v949 = vshrl.u32 %v823, 16
      %v951 = vrot.slane %v949, 7
      %v952 = vshll.u32 %v823, 16
      %v954 = vor.u32 %v951, %v952
      %v956 = vshrl.u32 %v923, 16
      %v958 = vrot.slane %v956, 7
      %v959 = vshll.u32 %v923, 16
      %v961 = vor.u32 %v958, %v959
      %vm974 = vcmask 1040384
      %vm975 = vsmask.f32 256
      %vm976 = vmand %vm974, %vm975
      %v977 = vsel %vm976, 0, %v930
      %v978 = vsel %vm976, 0, %v936
      %v979 = vsel %vm976, 0, %v942
      %v980 = vsel %vm976, 0, %v948
      %v981 = vsel %vm976, 0, %v954
      %v982 = vsel %vm976, 0, %v961
      %v983 = vsel %vm976, %v927, 0
      %v984 = vsel %vm976, %v933, 0
      %v985 = vsel %vm976, %v939, 0
      %v986 = vsel %vm976, %v945, 0
      %v987 = vsel %vm976, %v951, 0
      %v988 = vsel %vm976, %v958, 0
      %v989 = vld [vmem:[%s698] sm:$0xff]
      %v990 = vld [vmem:[%s698 + $0x8] sm:$0xff]
      %v991 = vld [vmem:[%s698 + $0x10] sm:$0xff]
      %v992 = vld [vmem:[%s698 + $0x18] sm:$0xff]
      %v993 = vld [vmem:[%s698 + $0x20] sm:$0xff]
      %v994 = vld [vmem:[%s698 + $0x28] sm:$0xff]
      %v995 = vld [vmem:[%s698 + $0x30] sm:$0xff]
      %v996 = vld [vmem:[%s698 + $0x38] sm:$0xff]
      %v997 = vld [vmem:[%s712] sm:$0xff]
      %v998 = vld [vmem:[%s712 + $0x8] sm:$0xff]
      %v999 = vld [vmem:[%s729] sm:$0xff]
      %v1000 = vld [vmem:[%s729 + $0x8] sm:$0xff]
      %vm1013 = vcmask 1040384
      %v1014 = vrot.slane %v997, 7
      %v1015 = vrot.slane %v998, 7
      %v1016 = vsel %vm1013, %v1014, %v1015
      %v1017 = vrot.slane %v989, 7
      %v1018 = vrot.slane %v990, 7
      %v1019 = vsel %vm1013, %v1017, %v1018
      %v1020 = vrot.slane %v991, 7
      %v1021 = vrot.slane %v992, 7
      %v1022 = vsel %vm1013, %v1020, %v1021
      %v1023 = vrot.slane %v993, 7
      %v1024 = vrot.slane %v994, 7
      %v1025 = vsel %vm1013, %v1023, %v1024
      %v1026 = vrot.slane %v995, 7
      %v1027 = vrot.slane %v996, 7
      %v1028 = vsel %vm1013, %v1026, %v1027
      %v1029 = vrot.slane %v999, 7
      %v1030 = vrot.slane %v1000, 7
      %v1031 = vsel %vm1013, %v1029, %v1030
      %v1044 = vsel %vm1013, 0.0, %v1014
      %v1045 = vsel %vm1013, 0.0, %v1017
      %v1046 = vsel %vm1013, 0.0, %v1020
      %v1047 = vsel %vm1013, 0.0, %v1023
      %v1048 = vsel %vm1013, 0.0, %v1026
      %v1049 = vsel %vm1013, 0.0, %v1029
      %v1050 = vsel %vm1013, %v1015, 0.0
      %v1051 = vsel %vm1013, %v1018, 0.0
      %v1052 = vsel %vm1013, %v1021, 0.0
      %v1053 = vsel %vm1013, %v1024, 0.0
      %v1054 = vsel %vm1013, %v1027, 0.0
      %v1055 = vsel %vm1013, %v1030, 0.0
      %v1056 = vunpack.c.l.bf16 %v977
      %v1057 = vunpack.c.h.bf16 %v977
      %v1058 = vunpack.c.l.bf16 %v983
      %v1059 = vunpack.c.l.bf16 %v978
      %v1060 = vunpack.c.h.bf16 %v978
      %v1061 = vunpack.c.l.bf16 %v984
      %v1062 = vunpack.c.l.bf16 %v979
      %v1063 = vunpack.c.h.bf16 %v979
      %v1064 = vunpack.c.l.bf16 %v985
      %v1065 = vunpack.c.l.bf16 %v980
      %v1066 = vunpack.c.h.bf16 %v980
      %v1067 = vunpack.c.l.bf16 %v986
      %v1068 = vunpack.c.l.bf16 %v981
      %v1069 = vunpack.c.h.bf16 %v981
      %v1070 = vunpack.c.l.bf16 %v987
      %v1071 = vunpack.c.l.bf16 %v982
      %v1072 = vunpack.c.h.bf16 %v982
      %v1073 = vunpack.c.l.bf16 %v988
      %1075 = vset.pattern.permute.xlu0 0
      %1076 = vperm.xlu0 %1075, %v1044
      %v1077 = vpop.permute.xlu0 %1076
      %1079 = vset.pattern.permute.xlu0 0
      %1080 = vperm.xlu0 %1079, %v1016
      %v1081 = vpop.permute.xlu0 %1080
      %1084 = vset.pattern.permute.xlu0 0
      %1085 = vperm.xlu0 %1084, %v1050
      %v1086 = vpop.permute.xlu0 %1085
      %1089 = vset.pattern.permute.xlu0 0
      %1090 = vperm.xlu0 %1089, %v1045
      %v1091 = vpop.permute.xlu0 %1090
      %1093 = vset.pattern.permute.xlu0 0
      %1094 = vperm.xlu0 %1093, %v1019
      %v1095 = vpop.permute.xlu0 %1094
      %1098 = vset.pattern.permute.xlu0 0
      %1099 = vperm.xlu0 %1098, %v1051
      %v1100 = vpop.permute.xlu0 %1099
      %1103 = vset.pattern.permute.xlu0 0
      %1104 = vperm.xlu0 %1103, %v1046
      %v1105 = vpop.permute.xlu0 %1104
      %1107 = vset.pattern.permute.xlu0 0
      %1108 = vperm.xlu0 %1107, %v1022
      %v1109 = vpop.permute.xlu0 %1108
      %1112 = vset.pattern.permute.xlu0 0
      %1113 = vperm.xlu0 %1112, %v1052
      %v1114 = vpop.permute.xlu0 %1113
      %1117 = vset.pattern.permute.xlu0 0
      %1118 = vperm.xlu0 %1117, %v1047
      %v1119 = vpop.permute.xlu0 %1118
      %1121 = vset.pattern.permute.xlu0 0
      %1122 = vperm.xlu0 %1121, %v1025
      %v1123 = vpop.permute.xlu0 %1122
      %1126 = vset.pattern.permute.xlu0 0
      %1127 = vperm.xlu0 %1126, %v1053
      %v1128 = vpop.permute.xlu0 %1127
      %1131 = vset.pattern.permute.xlu0 0
      %1132 = vperm.xlu0 %1131, %v1048
      %v1133 = vpop.permute.xlu0 %1132
      %1135 = vset.pattern.permute.xlu0 0
      %1136 = vperm.xlu0 %1135, %v1028
      %v1137 = vpop.permute.xlu0 %1136
      %1140 = vset.pattern.permute.xlu0 0
      %1141 = vperm.xlu0 %1140, %v1054
      %v1142 = vpop.permute.xlu0 %1141
      %1145 = vset.pattern.permute.xlu0 0
      %1146 = vperm.xlu0 %1145, %v1049
      %v1147 = vpop.permute.xlu0 %1146
      %1149 = vset.pattern.permute.xlu0 0
      %1150 = vperm.xlu0 %1149, %v1031
      %v1151 = vpop.permute.xlu0 %1150
      %1154 = vset.pattern.permute.xlu0 0
      %1155 = vperm.xlu0 %1154, %v1055
      %v1156 = vpop.permute.xlu0 %1155
      %v1158 = vmul.f32 %v1056, %v1077
      %v1159 = vmul.f32 %v1057, %v1081
      %v1160 = vmul.f32 %v1058, %v1086
      %v1161 = vmul.f32 %v1059, %v1091
      %v1162 = vmul.f32 %v1060, %v1095
      %v1163 = vmul.f32 %v1061, %v1100
      %v1164 = vmul.f32 %v1062, %v1105
      %v1165 = vmul.f32 %v1063, %v1109
      %v1166 = vmul.f32 %v1064, %v1114
      %v1167 = vmul.f32 %v1065, %v1119
      %v1168 = vmul.f32 %v1066, %v1123
      %v1169 = vmul.f32 %v1067, %v1128
      %v1170 = vmul.f32 %v1068, %v1133
      %v1171 = vmul.f32 %v1069, %v1137
      %v1172 = vmul.f32 %v1070, %v1142
      %v1173 = vmul.f32 %v1071, %v1147
      %v1174 = vmul.f32 %v1072, %v1151
      %v1175 = vmul.f32 %v1073, %v1156
      %v1176 = vpack.c.bf16 %v1159, %v1158
      %v1177 = vpack.c.bf16 %v1160, %v1160
      %v1178 = vpack.c.bf16 %v1162, %v1161
      %v1179 = vpack.c.bf16 %v1163, %v1163
      %v1180 = vpack.c.bf16 %v1165, %v1164
      %v1181 = vpack.c.bf16 %v1166, %v1166
      %v1182 = vpack.c.bf16 %v1168, %v1167
      %v1183 = vpack.c.bf16 %v1169, %v1169
      %v1184 = vpack.c.bf16 %v1171, %v1170
      %v1185 = vpack.c.bf16 %v1172, %v1172
      %v1186 = vpack.c.bf16 %v1174, %v1173
      %v1187 = vpack.c.bf16 %v1175, %v1175
      %v1188 = vld [vmem:[%s8] sm:$0xf]
      %v1189 = vld [vmem:[%s8 + $0x4] sm:$0xf]
      %v1190 = vld [vmem:[%s8 + $0x8] sm:$0xf]
      %v1191 = vld [vmem:[%s8 + $0xc] sm:$0xf]
      %v1192 = vld [vmem:[%s8 + $0x10] sm:$0xf]
      %v1193 = vld [vmem:[%s8 + $0x14] sm:$0xf]
      %v1194 = vld [vmem:[%s8 + $0x18] sm:$0xf]
      %v1195 = vld [vmem:[%s8 + $0x1c] sm:$0xf]
      %v1196 = vld [vmem:[%s8 + $0x20] sm:$0xf]
      %vm1197 = vsmask.f32 7424
      %v1199 = vshrl.u32 %v977, 16
      %v1201 = vshll.u32 %v977, 16
      %v1203 = vrot.slane %v1201, 1
      %v1204 = vor.u32 %v1199, %v1203
      %v1206 = vshll.u32 %v983, 16
      %v1208 = vrot.slane %v1206, 1
      %v1209 = vsel %vm1197, %v1204, %v1208
      %v1211 = vshrl.u32 %v978, 16
      %v1213 = vshll.u32 %v978, 16
      %v1215 = vrot.slane %v1213, 1
      %v1216 = vor.u32 %v1211, %v1215
      %v1218 = vshll.u32 %v984, 16
      %v1220 = vrot.slane %v1218, 1
      %v1221 = vsel %vm1197, %v1216, %v1220
      %v1223 = vshrl.u32 %v979, 16
      %v1225 = vshll.u32 %v979, 16
      %v1227 = vrot.slane %v1225, 1
      %v1228 = vor.u32 %v1223, %v1227
      %v1230 = vshll.u32 %v985, 16
      %v1232 = vrot.slane %v1230, 1
      %v1233 = vsel %vm1197, %v1228, %v1232
      %v1235 = vshrl.u32 %v980, 16
      %v1237 = vshll.u32 %v980, 16
      %v1239 = vrot.slane %v1237, 1
      %v1240 = vor.u32 %v1235, %v1239
      %v1242 = vshll.u32 %v986, 16
      %v1244 = vrot.slane %v1242, 1
      %v1245 = vsel %vm1197, %v1240, %v1244
      %v1247 = vsel %vm824, %v1209, 0
      %v1250 = vsel %vm824, %v1221, 0
      %v1253 = vsel %vm824, %v1233, 0
      %v1256 = vsel %vm824, %v1245, 0
      %v1259 = vsel %vm837, %v1189, 0
      %1261 = vmatprep.subr.bf16.mxu0 0
      %1262 = vmatpush1.bf16.msra.mxu0 %v1259
      %1263 = vmatprep.subr.bf16.mxu0 0
      %1264 = vmatpush1.bf16.msra.mxu0 0
      %1265 = vmatprep.subr.bf16.mxu0 0
      %1266 = vmatpush1.bf16.msra.mxu0 0
      %1267 = vmatprep.subr.bf16.mxu0 0
      %1268 = vmatpush1.bf16.msra.mxu0 0
      %1269 = vmatprep.subr.bf16.mxu0 0
      %1270 = vmatpush1.bf16.msra.mxu0 0
      %1271 = vmatprep.subr.bf16.mxu0 0
      %1272 = vmatpush1.bf16.msra.mxu0 0
      %1273 = vmatprep.subr.bf16.mxu0 0
      %1274 = vmatpush1.bf16.msra.mxu0 0
      %1275 = vmatprep.subr.bf16.mxu0 0
      %1276 = vmatpush1.bf16.msra.mxu0 0
      %1277 = vmatprep.subr.bf16.mxu0 0
      %1278 = vmatpush1.bf16.msra.mxu0 0
      %1279 = vmatprep.subr.bf16.mxu0 0
      %1280 = vmatpush1.bf16.msra.mxu0 0
      %1281 = vmatprep.subr.bf16.mxu0 0
      %1282 = vmatpush1.bf16.msra.mxu0 0
      %1283 = vmatprep.subr.bf16.mxu0 0
      %1284 = vmatpush1.bf16.msra.mxu0 0
      %1285 = vmatprep.subr.bf16.mxu0 0
      %1286 = vmatpush1.bf16.msra.mxu0 0
      %1287 = vmatprep.subr.bf16.mxu0 0
      %1288 = vmatpush1.bf16.msra.mxu0 0
      %1289 = vmatprep.subr.bf16.mxu0 0
      %1290 = vmatpush1.bf16.msra.mxu0 0
      %1291 = vmatprep.subr.bf16.mxu0 0
      %1292 = vmatpush1.bf16.msra.mxu0 0
      %1293 = vmatprep.mubr.bf16.mxu0 0
      %1294 = vmatmul.mubr.bf16.gmra.mrb[0].mxu0 %v1247
      %v1295 = vpop.f32.mrb[0].mxu0
      %v1296 = vadd.f32 0.0, %v1295
      %v1297 = vpop.f32.mrb[0].mxu0
      %v1298 = vpop.f32.mrb[0].mxu0
      %v1299 = vadd.f32 0.0, %v1298
      %v1300 = vpop.f32.mrb[0].mxu0
      %1301 = vmatprep.mubr.bf16.mxu0 0
      %1302 = vmatmul.mubr.bf16.gmra.mrb[0].mxu0 %v1250
      %v1303 = vpop.f32.mrb[0].mxu0
      %v1304 = vadd.f32 0.0, %v1303
      %v1305 = vpop.f32.mrb[0].mxu0
      %v1306 = vpop.f32.mrb[0].mxu0
      %v1307 = vadd.f32 0.0, %v1306
      %v1308 = vpop.f32.mrb[0].mxu0
      %1309 = vmatprep.mubr.bf16.mxu0 0
      %1310 = vmatmul.mubr.bf16.gmra.mrb[0].mxu0 %v1253
      %v1311 = vpop.f32.mrb[0].mxu0
      %v1312 = vadd.f32 0.0, %v1311
      %v1313 = vpop.f32.mrb[0].mxu0
      %v1314 = vpop.f32.mrb[0].mxu0
      %v1315 = vadd.f32 0.0, %v1314
      %v1316 = vpop.f32.mrb[0].mxu0
      %1317 = vmatprep.mubr.bf16.mxu0 0
      %1318 = vmatmul.mubr.bf16.gmra.mrb[0].mxu0 %v1256
      %v1319 = vpop.f32.mrb[0].mxu0
      %v1320 = vadd.f32 0.0, %v1319
      %v1321 = vpop.f32.mrb[0].mxu0
      %v1322 = vpop.f32.mrb[0].mxu0
      %v1323 = vadd.f32 0.0, %v1322
      %v1324 = vpop.f32.mrb[0].mxu0
      %1325 = vdwg.mxu0
      %v1326 = vsel %vm824, %v977, 0
      %v1328 = vsel %vm824, %v978, 0
      %v1330 = vsel %vm824, %v979, 0
      %v1332 = vsel %vm824, %v980, 0
      %v1335 = vsel %vm837, %v1188, 0
      %1337 = vmatprep.subr.bf16.mxu0 0
      %1338 = vmatpush1.bf16.msra.mxu0 %v1335
      %1339 = vmatprep.subr.bf16.mxu0 0
      %1340 = vmatpush1.bf16.msra.mxu0 0
      %1341 = vmatprep.subr.bf16.mxu0 0
      %1342 = vmatpush1.bf16.msra.mxu0 0
      %1343 = vmatprep.subr.bf16.mxu0 0
      %1344 = vmatpush1.bf16.msra.mxu0 0
      %1345 = vmatprep.subr.bf16.mxu0 0
      %1346 = vmatpush1.bf16.msra.mxu0 0
      %1347 = vmatprep.subr.bf16.mxu0 0
      %1348 = vmatpush1.bf16.msra.mxu0 0
      %1349 = vmatprep.subr.bf16.mxu0 0
      %1350 = vmatpush1.bf16.msra.mxu0 0
      %1351 = vmatprep.subr.bf16.mxu0 0
      %1352 = vmatpush1.bf16.msra.mxu0 0
      %1353 = vmatprep.subr.bf16.mxu0 0
      %1354 = vmatpush1.bf16.msra.mxu0 0
      %1355 = vmatprep.subr.bf16.mxu0 0
      %1356 = vmatpush1.bf16.msra.mxu0 0
      %1357 = vmatprep.subr.bf16.mxu0 0
      %1358 = vmatpush1.bf16.msra.mxu0 0
      %1359 = vmatprep.subr.bf16.mxu0 0
      %1360 = vmatpush1.bf16.msra.mxu0 0
      %1361 = vmatprep.subr.bf16.mxu0 0
      %1362 = vmatpush1.bf16.msra.mxu0 0
      %1363 = vmatprep.subr.bf16.mxu0 0
      %1364 = vmatpush1.bf16.msra.mxu0 0
      %1365 = vmatprep.subr.bf16.mxu0 0
      %1366 = vmatpush1.bf16.msra.mxu0 0
      %1367 = vmatprep.subr.bf16.mxu0 0
      %1368 = vmatpush1.bf16.msra.mxu0 0
      %1369 = vmatprep.mubr.bf16.mxu0 0
      %1370 = vmatmul.mubr.bf16.gmra.mrb[0].mxu0 %v1326
      %v1371 = vpop.f32.mrb[0].mxu0
      %v1372 = vadd.f32 %v1296, %v1371
      %v1373 = vpop.f32.mrb[0].mxu0
      %v1374 = vpop.f32.mrb[0].mxu0
      %v1375 = vadd.f32 %v1299, %v1374
      %v1376 = vpop.f32.mrb[0].mxu0
      %1377 = vmatprep.mubr.bf16.mxu0 0
      %1378 = vmatmul.mubr.bf16.gmra.mrb[0].mxu0 %v1328
      %v1379 = vpop.f32.mrb[0].mxu0
      %v1380 = vadd.f32 %v1304, %v1379
      %v1381 = vpop.f32.mrb[0].mxu0
      %v1382 = vpop.f32.mrb[0].mxu0
      %v1383 = vadd.f32 %v1307, %v1382
      %v1384 = vpop.f32.mrb[0].mxu0
      %1385 = vmatprep.mubr.bf16.mxu0 0
      %1386 = vmatmul.mubr.bf16.gmra.mrb[0].mxu0 %v1330
      %v1387 = vpop.f32.mrb[0].mxu0
      %v1388 = vadd.f32 %v1312, %v1387
      %v1389 = vpop.f32.mrb[0].mxu0
      %v1390 = vpop.f32.mrb[0].mxu0
      %v1391 = vadd.f32 %v1315, %v1390
      %v1392 = vpop.f32.mrb[0].mxu0
      %1393 = vmatprep.mubr.bf16.mxu0 0
      %1394 = vmatmul.mubr.bf16.gmra.mrb[0].mxu0 %v1332
      %v1395 = vpop.f32.mrb[0].mxu0
      %v1396 = vadd.f32 %v1320, %v1395
      %v1397 = vpop.f32.mrb[0].mxu0
      %v1398 = vpop.f32.mrb[0].mxu0
      %v1399 = vadd.f32 %v1323, %v1398
      %v1400 = vpop.f32.mrb[0].mxu0
      %1401 = vdwg.mxu0
      %v1403 = vshrl.u32 %v1176, 16
      %v1405 = vshll.u32 %v1176, 16
      %v1407 = vrot.slane %v1405, 1
      %v1408 = vor.u32 %v1403, %v1407
      %v1410 = vshll.u32 %v1177, 16
      %v1412 = vrot.slane %v1410, 1
      %v1413 = vsel %vm1197, %v1408, %v1412
      %v1415 = vshrl.u32 %v1178, 16
      %v1417 = vshll.u32 %v1178, 16
      %v1419 = vrot.slane %v1417, 1
      %v1420 = vor.u32 %v1415, %v1419
      %v1422 = vshll.u32 %v1179, 16
      %v1424 = vrot.slane %v1422, 1
      %v1425 = vsel %vm1197, %v1420, %v1424
      %v1427 = vshrl.u32 %v1180, 16
      %v1429 = vshll.u32 %v1180, 16
      %v1431 = vrot.slane %v1429, 1
      %v1432 = vor.u32 %v1427, %v1431
      %v1434 = vshll.u32 %v1181, 16
      %v1436 = vrot.slane %v1434, 1
      %v1437 = vsel %vm1197, %v1432, %v1436
      %v1439 = vshrl.u32 %v1182, 16
      %v1441 = vshll.u32 %v1182, 16
      %v1443 = vrot.slane %v1441, 1
      %v1444 = vor.u32 %v1439, %v1443
      %v1446 = vshll.u32 %v1183, 16
      %v1448 = vrot.slane %v1446, 1
      %v1449 = vsel %vm1197, %v1444, %v1448
      %v1451 = vsel %vm824, %v1413, 0
      %v1454 = vsel %vm824, %v1425, 0
      %v1457 = vsel %vm824, %v1437, 0
      %v1460 = vsel %vm824, %v1449, 0
      %1462 = vmatprep.subr.bf16.mxu0 0
      %1463 = vmatpush1.bf16.msra.mxu0 %v1259
      %1464 = vmatprep.subr.bf16.mxu0 0
      %1465 = vmatpush1.bf16.msra.mxu0 0
      %1466 = vmatprep.subr.bf16.mxu0 0
      %1467 = vmatpush1.bf16.msra.mxu0 0
      %1468 = vmatprep.subr.bf16.mxu0 0
      %1469 = vmatpush1.bf16.msra.mxu0 0
      %1470 = vmatprep.subr.bf16.mxu0 0
      %1471 = vmatpush1.bf16.msra.mxu0 0
      %1472 = vmatprep.subr.bf16.mxu0 0
      %1473 = vmatpush1.bf16.msra.mxu0 0
      %1474 = vmatprep.subr.bf16.mxu0 0
      %1475 = vmatpush1.bf16.msra.mxu0 0
      %1476 = vmatprep.subr.bf16.mxu0 0
      %1477 = vmatpush1.bf16.msra.mxu0 0
      %1478 = vmatprep.subr.bf16.mxu0 0
      %1479 = vmatpush1.bf16.msra.mxu0 0
      %1480 = vmatprep.subr.bf16.mxu0 0
      %1481 = vmatpush1.bf16.msra.mxu0 0
      %1482 = vmatprep.subr.bf16.mxu0 0
      %1483 = vmatpush1.bf16.msra.mxu0 0
      %1484 = vmatprep.subr.bf16.mxu0 0
      %1485 = vmatpush1.bf16.msra.mxu0 0
      %1486 = vmatprep.subr.bf16.mxu0 0
      %1487 = vmatpush1.bf16.msra.mxu0 0
      %1488 = vmatprep.subr.bf16.mxu0 0
      %1489 = vmatpush1.bf16.msra.mxu0 0
      %1490 = vmatprep.subr.bf16.mxu0 0
      %1491 = vmatpush1.bf16.msra.mxu0 0
      %1492 = vmatprep.subr.bf16.mxu0 0
      %1493 = vmatpush1.bf16.msra.mxu0 0
      %1494 = vmatprep.mubr.bf16.mxu0 0
      %1495 = vmatmul.mubr.bf16.gmra.mrb[0].mxu0 %v1451
      %v1496 = vpop.f32.mrb[0].mxu0
      %v1497 = vadd.f32 0.0, %v1496
      %v1498 = vpop.f32.mrb[0].mxu0
      %v1499 = vpop.f32.mrb[0].mxu0
      %v1500 = vadd.f32 0.0, %v1499
      %v1501 = vpop.f32.mrb[0].mxu0
      %1502 = vmatprep.mubr.bf16.mxu0 0
      %1503 = vmatmul.mubr.bf16.gmra.mrb[0].mxu0 %v1454
      %v1504 = vpop.f32.mrb[0].mxu0
      %v1505 = vadd.f32 0.0, %v1504
      %v1506 = vpop.f32.mrb[0].mxu0
      %v1507 = vpop.f32.mrb[0].mxu0
      %v1508 = vadd.f32 0.0, %v1507
      %v1509 = vpop.f32.mrb[0].mxu0
      %1510 = vmatprep.mubr.bf16.mxu0 0
      %1511 = vmatmul.mubr.bf16.gmra.mrb[0].mxu0 %v1457
      %v1512 = vpop.f32.mrb[0].mxu0
      %v1513 = vadd.f32 0.0, %v1512
      %v1514 = vpop.f32.mrb[0].mxu0
      %v1515 = vpop.f32.mrb[0].mxu0
      %v1516 = vadd.f32 0.0, %v1515
      %v1517 = vpop.f32.mrb[0].mxu0
      %1518 = vmatprep.mubr.bf16.mxu0 0
      %1519 = vmatmul.mubr.bf16.gmra.mrb[0].mxu0 %v1460
      %v1520 = vpop.f32.mrb[0].mxu0
      %v1521 = vadd.f32 0.0, %v1520
      %v1522 = vpop.f32.mrb[0].mxu0
      %v1523 = vpop.f32.mrb[0].mxu0
      %v1524 = vadd.f32 0.0, %v1523
      %v1525 = vpop.f32.mrb[0].mxu0
      %1526 = vdwg.mxu0
      %v1527 = vsel %vm824, %v1176, 0
      %v1529 = vsel %vm824, %v1178, 0
      %v1531 = vsel %vm824, %v1180, 0
      %v1533 = vsel %vm824, %v1182, 0
      %1535 = vmatprep.subr.bf16.mxu0 0
      %1536 = vmatpush1.bf16.msra.mxu0 %v1335
      %1537 = vmatprep.subr.bf16.mxu0 0
      %1538 = vmatpush1.bf16.msra.mxu0 0
      %1539 = vmatprep.subr.bf16.mxu0 0
      %1540 = vmatpush1.bf16.msra.mxu0 0
      %1541 = vmatprep.subr.bf16.mxu0 0
      %1542 = vmatpush1.bf16.msra.mxu0 0
      %1543 = vmatprep.subr.bf16.mxu0 0
      %1544 = vmatpush1.bf16.msra.mxu0 0
      %1545 = vmatprep.subr.bf16.mxu0 0
      %1546 = vmatpush1.bf16.msra.mxu0 0
      %1547 = vmatprep.subr.bf16.mxu0 0
      %1548 = vmatpush1.bf16.msra.mxu0 0
      %1549 = vmatprep.subr.bf16.mxu0 0
      %1550 = vmatpush1.bf16.msra.mxu0 0
      %1551 = vmatprep.subr.bf16.mxu0 0
      %1552 = vmatpush1.bf16.msra.mxu0 0
      %1553 = vmatprep.subr.bf16.mxu0 0
      %1554 = vmatpush1.bf16.msra.mxu0 0
      %1555 = vmatprep.subr.bf16.mxu0 0
      %1556 = vmatpush1.bf16.msra.mxu0 0
      %1557 = vmatprep.subr.bf16.mxu0 0
      %1558 = vmatpush1.bf16.msra.mxu0 0
      %1559 = vmatprep.subr.bf16.mxu0 0
      %1560 = vmatpush1.bf16.msra.mxu0 0
      %1561 = vmatprep.subr.bf16.mxu0 0
      %1562 = vmatpush1.bf16.msra.mxu0 0
      %1563 = vmatprep.subr.bf16.mxu0 0
      %1564 = vmatpush1.bf16.msra.mxu0 0
      %1565 = vmatprep.subr.bf16.mxu0 0
      %1566 = vmatpush1.bf16.msra.mxu0 0
      %1567 = vmatprep.mubr.bf16.mxu0 0
      %1568 = vmatmul.mubr.bf16.gmra.mrb[0].mxu0 %v1527
      %v1569 = vpop.f32.mrb[0].mxu0
      %v1570 = vadd.f32 %v1497, %v1569
      %v1571 = vpop.f32.mrb[0].mxu0
      %v1572 = vpop.f32.mrb[0].mxu0
      %v1573 = vadd.f32 %v1500, %v1572
      %v1574 = vpop.f32.mrb[0].mxu0
      %1575 = vmatprep.mubr.bf16.mxu0 0
      %1576 = vmatmul.mubr.bf16.gmra.mrb[0].mxu0 %v1529
      %v1577 = vpop.f32.mrb[0].mxu0
      %v1578 = vadd.f32 %v1505, %v1577
      %v1579 = vpop.f32.mrb[0].mxu0
      %v1580 = vpop.f32.mrb[0].mxu0
      %v1581 = vadd.f32 %v1508, %v1580
      %v1582 = vpop.f32.mrb[0].mxu0
      %1583 = vmatprep.mubr.bf16.mxu0 0
      %1584 = vmatmul.mubr.bf16.gmra.mrb[0].mxu0 %v1531
      %v1585 = vpop.f32.mrb[0].mxu0
      %v1586 = vadd.f32 %v1513, %v1585
      %v1587 = vpop.f32.mrb[0].mxu0
      %v1588 = vpop.f32.mrb[0].mxu0
      %v1589 = vadd.f32 %v1516, %v1588
      %v1590 = vpop.f32.mrb[0].mxu0
      %1591 = vmatprep.mubr.bf16.mxu0 0
      %1592 = vmatmul.mubr.bf16.gmra.mrb[0].mxu0 %v1533
      %v1593 = vpop.f32.mrb[0].mxu0
      %v1594 = vadd.f32 %v1521, %v1593
      %v1595 = vpop.f32.mrb[0].mxu0
      %v1596 = vpop.f32.mrb[0].mxu0
      %v1597 = vadd.f32 %v1524, %v1596
      %v1598 = vpop.f32.mrb[0].mxu0
      %1599 = vdwg.mxu0
      %vm1608 = vcmask 1046528
      %v1609 = vrot.slane %v977, 1
      %v1610 = vrot.slane %v983, 1
      %v1611 = vsel %vm1608, %v1609, %v1610
      %v1612 = vrot.slane %v978, 1
      %v1613 = vrot.slane %v984, 1
      %v1614 = vsel %vm1608, %v1612, %v1613
      %v1615 = vrot.slane %v979, 1
      %v1616 = vrot.slane %v985, 1
      %v1617 = vsel %vm1608, %v1615, %v1616
      %v1618 = vrot.slane %v980, 1
      %v1619 = vrot.slane %v986, 1
      %v1620 = vsel %vm1608, %v1618, %v1619
      %v1622 = vsel %vm824, %v1611, 0
      %v1625 = vsel %vm824, %v1614, 0
      %v1628 = vsel %vm824, %v1617, 0
      %v1631 = vsel %vm824, %v1620, 0
      %v1634 = vsel %vm837, %v1190, 0
      %1636 = vmatprep.subr.bf16.mxu0 0
      %1637 = vmatpush1.bf16.msra.mxu0 %v1634
      %1638 = vmatprep.subr.bf16.mxu0 0
      %1639 = vmatpush1.bf16.msra.mxu0 0
      %1640 = vmatprep.subr.bf16.mxu0 0
      %1641 = vmatpush1.bf16.msra.mxu0 0
      %1642 = vmatprep.subr.bf16.mxu0 0
      %1643 = vmatpush1.bf16.msra.mxu0 0
      %1644 = vmatprep.subr.bf16.mxu0 0
      %1645 = vmatpush1.bf16.msra.mxu0 0
      %1646 = vmatprep.subr.bf16.mxu0 0
      %1647 = vmatpush1.bf16.msra.mxu0 0
      %1648 = vmatprep.subr.bf16.mxu0 0
      %1649 = vmatpush1.bf16.msra.mxu0 0
      %1650 = vmatprep.subr.bf16.mxu0 0
      %1651 = vmatpush1.bf16.msra.mxu0 0
      %1652 = vmatprep.subr.bf16.mxu0 0
      %1653 = vmatpush1.bf16.msra.mxu0 0
      %1654 = vmatprep.subr.bf16.mxu0 0
      %1655 = vmatpush1.bf16.msra.mxu0 0
      %1656 = vmatprep.subr.bf16.mxu0 0
      %1657 = vmatpush1.bf16.msra.mxu0 0
      %1658 = vmatprep.subr.bf16.mxu0 0
      %1659 = vmatpush1.bf16.msra.mxu0 0
      %1660 = vmatprep.subr.bf16.mxu0 0
      %1661 = vmatpush1.bf16.msra.mxu0 0
      %1662 = vmatprep.subr.bf16.mxu0 0
      %1663 = vmatpush1.bf16.msra.mxu0 0
      %1664 = vmatprep.subr.bf16.mxu0 0
      %1665 = vmatpush1.bf16.msra.mxu0 0
      %1666 = vmatprep.subr.bf16.mxu0 0
      %1667 = vmatpush1.bf16.msra.mxu0 0
      %1668 = vmatprep.mubr.bf16.mxu0 0
      %1669 = vmatmul.mubr.bf16.gmra.mrb[0].mxu0 %v1622
      %v1670 = vpop.f32.mrb[0].mxu0
      %v1671 = vadd.f32 0.0, %v1670
      %v1672 = vpop.f32.mrb[0].mxu0
      %v1673 = vpop.f32.mrb[0].mxu0
      %v1674 = vadd.f32 0.0, %v1673
      %v1675 = vpop.f32.mrb[0].mxu0
      %1676 = vmatprep.mubr.bf16.mxu0 0
      %1677 = vmatmul.mubr.bf16.gmra.mrb[0].mxu0 %v1625
      %v1678 = vpop.f32.mrb[0].mxu0
      %v1679 = vadd.f32 0.0, %v1678
      %v1680 = vpop.f32.mrb[0].mxu0
      %v1681 = vpop.f32.mrb[0].mxu0
      %v1682 = vadd.f32 0.0, %v1681
      %v1683 = vpop.f32.mrb[0].mxu0
      %1684 = vmatprep.mubr.bf16.mxu0 0
      %1685 = vmatmul.mubr.bf16.gmra.mrb[0].mxu0 %v1628
      %v1686 = vpop.f32.mrb[0].mxu0
      %v1687 = vadd.f32 0.0, %v1686
      %v1688 = vpop.f32.mrb[0].mxu0
      %v1689 = vpop.f32.mrb[0].mxu0
      %v1690 = vadd.f32 0.0, %v1689
      %v1691 = vpop.f32.mrb[0].mxu0
      %1692 = vmatprep.mubr.bf16.mxu0 0
      %1693 = vmatmul.mubr.bf16.gmra.mrb[0].mxu0 %v1631
      %v1694 = vpop.f32.mrb[0].mxu0
      %v1695 = vadd.f32 0.0, %v1694
      %v1696 = vpop.f32.mrb[0].mxu0
      %v1697 = vpop.f32.mrb[0].mxu0
      %v1698 = vadd.f32 0.0, %v1697
      %v1699 = vpop.f32.mrb[0].mxu0
      %1700 = vdwg.mxu0
      %v1701 = vadd.f32 %v1372, %v1671
      %v1702 = vadd.f32 %v1375, %v1674
      %v1703 = vadd.f32 %v1380, %v1679
      %v1704 = vadd.f32 %v1383, %v1682
      %v1705 = vadd.f32 %v1388, %v1687
      %v1706 = vadd.f32 %v1391, %v1690
      %v1707 = vadd.f32 %v1396, %v1695
      %v1708 = vadd.f32 %v1399, %v1698
      %v1717 = vrot.slane %v1176, 1
      %v1718 = vrot.slane %v1177, 1
      %v1719 = vsel %vm1608, %v1717, %v1718
      %v1720 = vrot.slane %v1178, 1
      %v1721 = vrot.slane %v1179, 1
      %v1722 = vsel %vm1608, %v1720, %v1721
      %v1723 = vrot.slane %v1180, 1
      %v1724 = vrot.slane %v1181, 1
      %v1725 = vsel %vm1608, %v1723, %v1724
      %v1726 = vrot.slane %v1182, 1
      %v1727 = vrot.slane %v1183, 1
      %v1728 = vsel %vm1608, %v1726, %v1727
      %v1730 = vsel %vm824, %v1719, 0
      %v1733 = vsel %vm824, %v1722, 0
      %v1736 = vsel %vm824, %v1725, 0
      %v1739 = vsel %vm824, %v1728, 0
      %1741 = vmatprep.subr.bf16.mxu0 0
      %1742 = vmatpush1.bf16.msra.mxu0 %v1634
      %1743 = vmatprep.subr.bf16.mxu0 0
      %1744 = vmatpush1.bf16.msra.mxu0 0
      %1745 = vmatprep.subr.bf16.mxu0 0
      %1746 = vmatpush1.bf16.msra.mxu0 0
      %1747 = vmatprep.subr.bf16.mxu0 0
      %1748 = vmatpush1.bf16.msra.mxu0 0
      %1749 = vmatprep.subr.bf16.mxu0 0
      %1750 = vmatpush1.bf16.msra.mxu0 0
      %1751 = vmatprep.subr.bf16.mxu0 0
      %1752 = vmatpush1.bf16.msra.mxu0 0
      %1753 = vmatprep.subr.bf16.mxu0 0
      %1754 = vmatpush1.bf16.msra.mxu0 0
      %1755 = vmatprep.subr.bf16.mxu0 0
      %1756 = vmatpush1.bf16.msra.mxu0 0
      %1757 = vmatprep.subr.bf16.mxu0 0
      %1758 = vmatpush1.bf16.msra.mxu0 0
      %1759 = vmatprep.subr.bf16.mxu0 0
      %1760 = vmatpush1.bf16.msra.mxu0 0
      %1761 = vmatprep.subr.bf16.mxu0 0
      %1762 = vmatpush1.bf16.msra.mxu0 0
      %1763 = vmatprep.subr.bf16.mxu0 0
      %1764 = vmatpush1.bf16.msra.mxu0 0
      %1765 = vmatprep.subr.bf16.mxu0 0
      %1766 = vmatpush1.bf16.msra.mxu0 0
      %1767 = vmatprep.subr.bf16.mxu0 0
      %1768 = vmatpush1.bf16.msra.mxu0 0
      %1769 = vmatprep.subr.bf16.mxu0 0
      %1770 = vmatpush1.bf16.msra.mxu0 0
      %1771 = vmatprep.subr.bf16.mxu0 0
      %1772 = vmatpush1.bf16.msra.mxu0 0
      %1773 = vmatprep.mubr.bf16.mxu0 0
      %1774 = vmatmul.mubr.bf16.gmra.mrb[0].mxu0 %v1730
      %v1775 = vpop.f32.mrb[0].mxu0
      %v1776 = vadd.f32 0.0, %v1775
      %v1777 = vpop.f32.mrb[0].mxu0
      %v1778 = vpop.f32.mrb[0].mxu0
      %v1779 = vadd.f32 0.0, %v1778
      %v1780 = vpop.f32.mrb[0].mxu0
      %1781 = vmatprep.mubr.bf16.mxu0 0
      %1782 = vmatmul.mubr.bf16.gmra.mrb[0].mxu0 %v1733
      %v1783 = vpop.f32.mrb[0].mxu0
      %v1784 = vadd.f32 0.0, %v1783
      %v1785 = vpop.f32.mrb[0].mxu0
      %v1786 = vpop.f32.mrb[0].mxu0
      %v1787 = vadd.f32 0.0, %v1786
      %v1788 = vpop.f32.mrb[0].mxu0
      %1789 = vmatprep.mubr.bf16.mxu0 0
      %1790 = vmatmul.mubr.bf16.gmra.mrb[0].mxu0 %v1736
      %v1791 = vpop.f32.mrb[0].mxu0
      %v1792 = vadd.f32 0.0, %v1791
      %v1793 = vpop.f32.mrb[0].mxu0
      %v1794 = vpop.f32.mrb[0].mxu0
      %v1795 = vadd.f32 0.0, %v1794
      %v1796 = vpop.f32.mrb[0].mxu0
      %1797 = vmatprep.mubr.bf16.mxu0 0
      %1798 = vmatmul.mubr.bf16.gmra.mrb[0].mxu0 %v1739
      %v1799 = vpop.f32.mrb[0].mxu0
      %v1800 = vadd.f32 0.0, %v1799
      %v1801 = vpop.f32.mrb[0].mxu0
      %v1802 = vpop.f32.mrb[0].mxu0
      %v1803 = vadd.f32 0.0, %v1802
      %v1804 = vpop.f32.mrb[0].mxu0
      %1805 = vdwg.mxu0
      %v1806 = vadd.f32 %v1570, %v1776
      %v1807 = vadd.f32 %v1573, %v1779
      %v1808 = vadd.f32 %v1578, %v1784
      %v1809 = vadd.f32 %v1581, %v1787
      %v1810 = vadd.f32 %v1586, %v1792
      %v1811 = vadd.f32 %v1589, %v1795
      %v1812 = vadd.f32 %v1594, %v1800
      %v1813 = vadd.f32 %v1597, %v1803
      %v1815 = vsel %vm824, %v981, 0
      %v1818 = vsel %vm837, %v1191, 0
      %1820 = vmatprep.subr.bf16.mxu0 0
      %1821 = vmatpush1.bf16.msra.mxu0 %v1818
      %1822 = vmatprep.subr.bf16.mxu0 0
      %1823 = vmatpush1.bf16.msra.mxu0 0
      %1824 = vmatprep.subr.bf16.mxu0 0
      %1825 = vmatpush1.bf16.msra.mxu0 0
      %1826 = vmatprep.subr.bf16.mxu0 0
      %1827 = vmatpush1.bf16.msra.mxu0 0
      %1828 = vmatprep.subr.bf16.mxu0 0
      %1829 = vmatpush1.bf16.msra.mxu0 0
      %1830 = vmatprep.subr.bf16.mxu0 0
      %1831 = vmatpush1.bf16.msra.mxu0 0
      %1832 = vmatprep.subr.bf16.mxu0 0
      %1833 = vmatpush1.bf16.msra.mxu0 0
      %1834 = vmatprep.subr.bf16.mxu0 0
      %1835 = vmatpush1.bf16.msra.mxu0 0
      %1836 = vmatprep.subr.bf16.mxu0 0
      %1837 = vmatpush1.bf16.msra.mxu0 0
      %1838 = vmatprep.subr.bf16.mxu0 0
      %1839 = vmatpush1.bf16.msra.mxu0 0
      %1840 = vmatprep.subr.bf16.mxu0 0
      %1841 = vmatpush1.bf16.msra.mxu0 0
      %1842 = vmatprep.subr.bf16.mxu0 0
      %1843 = vmatpush1.bf16.msra.mxu0 0
      %1844 = vmatprep.subr.bf16.mxu0 0
      %1845 = vmatpush1.bf16.msra.mxu0 0
      %1846 = vmatprep.subr.bf16.mxu0 0
      %1847 = vmatpush1.bf16.msra.mxu0 0
      %1848 = vmatprep.subr.bf16.mxu0 0
      %1849 = vmatpush1.bf16.msra.mxu0 0
      %1850 = vmatprep.subr.bf16.mxu0 0
      %1851 = vmatpush1.bf16.msra.mxu0 0
      %1852 = vmatprep.mubr.bf16.mxu0 0
      %1853 = vmatmul.mubr.bf16.gmra.mrb[0].mxu0 %v1328
      %v1854 = vpop.f32.mrb[0].mxu0
      %v1855 = vadd.f32 0.0, %v1854
      %v1856 = vpop.f32.mrb[0].mxu0
      %v1857 = vpop.f32.mrb[0].mxu0
      %v1858 = vadd.f32 0.0, %v1857
      %v1859 = vpop.f32.mrb[0].mxu0
      %1860 = vmatprep.mubr.bf16.mxu0 0
      %1861 = vmatmul.mubr.bf16.gmra.mrb[0].mxu0 %v1330
      %v1862 = vpop.f32.mrb[0].mxu0
      %v1863 = vadd.f32 0.0, %v1862
      %v1864 = vpop.f32.mrb[0].mxu0
      %v1865 = vpop.f32.mrb[0].mxu0
      %v1866 = vadd.f32 0.0, %v1865
      %v1867 = vpop.f32.mrb[0].mxu0
      %1868 = vmatprep.mubr.bf16.mxu0 0
      %1869 = vmatmul.mubr.bf16.gmra.mrb[0].mxu0 %v1332
      %v1870 = vpop.f32.mrb[0].mxu0
      %v1871 = vadd.f32 0.0, %v1870
      %v1872 = vpop.f32.mrb[0].mxu0
      %v1873 = vpop.f32.mrb[0].mxu0
      %v1874 = vadd.f32 0.0, %v1873
      %v1875 = vpop.f32.mrb[0].mxu0
      %1876 = vmatprep.mubr.bf16.mxu0 0
      %1877 = vmatmul.mubr.bf16.gmra.mrb[0].mxu0 %v1815
      %v1878 = vpop.f32.mrb[0].mxu0
      %v1879 = vadd.f32 0.0, %v1878
      %v1880 = vpop.f32.mrb[0].mxu0
      %v1881 = vpop.f32.mrb[0].mxu0
      %v1882 = vadd.f32 0.0, %v1881
      %v1883 = vpop.f32.mrb[0].mxu0
      %1884 = vdwg.mxu0
      %v1885 = vadd.f32 %v1701, %v1855
      %v1886 = vadd.f32 %v1702, %v1858
      %v1887 = vadd.f32 %v1703, %v1863
      %v1888 = vadd.f32 %v1704, %v1866
      %v1889 = vadd.f32 %v1705, %v1871
      %v1890 = vadd.f32 %v1706, %v1874
      %v1891 = vadd.f32 %v1707, %v1879
      %v1892 = vadd.f32 %v1708, %v1882
      %v1894 = vsel %vm824, %v1184, 0
      %1896 = vmatprep.subr.bf16.mxu0 0
      %1897 = vmatpush1.bf16.msra.mxu0 %v1818
      %1898 = vmatprep.subr.bf16.mxu0 0
      %1899 = vmatpush1.bf16.msra.mxu0 0
      %1900 = vmatprep.subr.bf16.mxu0 0
      %1901 = vmatpush1.bf16.msra.mxu0 0
      %1902 = vmatprep.subr.bf16.mxu0 0
      %1903 = vmatpush1.bf16.msra.mxu0 0
      %1904 = vmatprep.subr.bf16.mxu0 0
      %1905 = vmatpush1.bf16.msra.mxu0 0
      %1906 = vmatprep.subr.bf16.mxu0 0
      %1907 = vmatpush1.bf16.msra.mxu0 0
      %1908 = vmatprep.subr.bf16.mxu0 0
      %1909 = vmatpush1.bf16.msra.mxu0 0
      %1910 = vmatprep.subr.bf16.mxu0 0
      %1911 = vmatpush1.bf16.msra.mxu0 0
      %1912 = vmatprep.subr.bf16.mxu0 0
      %1913 = vmatpush1.bf16.msra.mxu0 0
      %1914 = vmatprep.subr.bf16.mxu0 0
      %1915 = vmatpush1.bf16.msra.mxu0 0
      %1916 = vmatprep.subr.bf16.mxu0 0
      %1917 = vmatpush1.bf16.msra.mxu0 0
      %1918 = vmatprep.subr.bf16.mxu0 0
      %1919 = vmatpush1.bf16.msra.mxu0 0
      %1920 = vmatprep.subr.bf16.mxu0 0
      %1921 = vmatpush1.bf16.msra.mxu0 0
      %1922 = vmatprep.subr.bf16.mxu0 0
      %1923 = vmatpush1.bf16.msra.mxu0 0
      %1924 = vmatprep.subr.bf16.mxu0 0
      %1925 = vmatpush1.bf16.msra.mxu0 0
      %1926 = vmatprep.subr.bf16.mxu0 0
      %1927 = vmatpush1.bf16.msra.mxu0 0
      %1928 = vmatprep.mubr.bf16.mxu0 0
      %1929 = vmatmul.mubr.bf16.gmra.mrb[0].mxu0 %v1529
      %v1930 = vpop.f32.mrb[0].mxu0
      %v1931 = vadd.f32 0.0, %v1930
      %v1932 = vpop.f32.mrb[0].mxu0
      %v1933 = vpop.f32.mrb[0].mxu0
      %v1934 = vadd.f32 0.0, %v1933
      %v1935 = vpop.f32.mrb[0].mxu0
      %1936 = vmatprep.mubr.bf16.mxu0 0
      %1937 = vmatmul.mubr.bf16.gmra.mrb[0].mxu0 %v1531
      %v1938 = vpop.f32.mrb[0].mxu0
      %v1939 = vadd.f32 0.0, %v1938
      %v1940 = vpop.f32.mrb[0].mxu0
      %v1941 = vpop.f32.mrb[0].mxu0
      %v1942 = vadd.f32 0.0, %v1941
      %v1943 = vpop.f32.mrb[0].mxu0
      %1944 = vmatprep.mubr.bf16.mxu0 0
      %1945 = vmatmul.mubr.bf16.gmra.mrb[0].mxu0 %v1533
      %v1946 = vpop.f32.mrb[0].mxu0
      %v1947 = vadd.f32 0.0, %v1946
      %v1948 = vpop.f32.mrb[0].mxu0
      %v1949 = vpop.f32.mrb[0].mxu0
      %v1950 = vadd.f32 0.0, %v1949
      %v1951 = vpop.f32.mrb[0].mxu0
      %1952 = vmatprep.mubr.bf16.mxu0 0
      %1953 = vmatmul.mubr.bf16.gmra.mrb[0].mxu0 %v1894
      %v1954 = vpop.f32.mrb[0].mxu0
      %v1955 = vadd.f32 0.0, %v1954
      %v1956 = vpop.f32.mrb[0].mxu0
      %v1957 = vpop.f32.mrb[0].mxu0
      %v1958 = vadd.f32 0.0, %v1957
      %v1959 = vpop.f32.mrb[0].mxu0
      %1960 = vdwg.mxu0
      %v1961 = vadd.f32 %v1806, %v1931
      %v1962 = vadd.f32 %v1807, %v1934
      %v1963 = vadd.f32 %v1808, %v1939
      %v1964 = vadd.f32 %v1809, %v1942
      %v1965 = vadd.f32 %v1810, %v1947
      %v1966 = vadd.f32 %v1811, %v1950
      %v1967 = vadd.f32 %v1812, %v1955
      %v1968 = vadd.f32 %v1813, %v1958
      %v1969 = vshrl.u32 %v981, 16
      %v1971 = vshll.u32 %v981, 16
      %v1973 = vrot.slane %v1971, 1
      %v1974 = vor.u32 %v1969, %v1973
      %v1976 = vshll.u32 %v987, 16
      %v1978 = vrot.slane %v1976, 1
      %v1979 = vsel %vm1197, %v1974, %v1978
      %v1981 = vsel %vm824, %v1979, 0
      %v1984 = vsel %vm837, %v1192, 0
      %1986 = vmatprep.subr.bf16.mxu0 0
      %1987 = vmatpush1.bf16.msra.mxu0 %v1984
      %1988 = vmatprep.subr.bf16.mxu0 0
      %1989 = vmatpush1.bf16.msra.mxu0 0
      %1990 = vmatprep.subr.bf16.mxu0 0
      %1991 = vmatpush1.bf16.msra.mxu0 0
      %1992 = vmatprep.subr.bf16.mxu0 0
      %1993 = vmatpush1.bf16.msra.mxu0 0
      %1994 = vmatprep.subr.bf16.mxu0 0
      %1995 = vmatpush1.bf16.msra.mxu0 0
      %1996 = vmatprep.subr.bf16.mxu0 0
      %1997 = vmatpush1.bf16.msra.mxu0 0
      %1998 = vmatprep.subr.bf16.mxu0 0
      %1999 = vmatpush1.bf16.msra.mxu0 0
      %2000 = vmatprep.subr.bf16.mxu0 0
      %2001 = vmatpush1.bf16.msra.mxu0 0
      %2002 = vmatprep.subr.bf16.mxu0 0
      %2003 = vmatpush1.bf16.msra.mxu0 0
      %2004 = vmatprep.subr.bf16.mxu0 0
      %2005 = vmatpush1.bf16.msra.mxu0 0
      %2006 = vmatprep.subr.bf16.mxu0 0
      %2007 = vmatpush1.bf16.msra.mxu0 0
      %2008 = vmatprep.subr.bf16.mxu0 0
      %2009 = vmatpush1.bf16.msra.mxu0 0
      %2010 = vmatprep.subr.bf16.mxu0 0
      %2011 = vmatpush1.bf16.msra.mxu0 0
      %2012 = vmatprep.subr.bf16.mxu0 0
      %2013 = vmatpush1.bf16.msra.mxu0 0
      %2014 = vmatprep.subr.bf16.mxu0 0
      %2015 = vmatpush1.bf16.msra.mxu0 0
      %2016 = vmatprep.subr.bf16.mxu0 0
      %2017 = vmatpush1.bf16.msra.mxu0 0
      %2018 = vmatprep.mubr.bf16.mxu0 0
      %2019 = vmatmul.mubr.bf16.gmra.mrb[0].mxu0 %v1250
      %v2020 = vpop.f32.mrb[0].mxu0
      %v2021 = vadd.f32 0.0, %v2020
      %v2022 = vpop.f32.mrb[0].mxu0
      %v2023 = vpop.f32.mrb[0].mxu0
      %v2024 = vadd.f32 0.0, %v2023
      %v2025 = vpop.f32.mrb[0].mxu0
      %2026 = vmatprep.mubr.bf16.mxu0 0
      %2027 = vmatmul.mubr.bf16.gmra.mrb[0].mxu0 %v1253
      %v2028 = vpop.f32.mrb[0].mxu0
      %v2029 = vadd.f32 0.0, %v2028
      %v2030 = vpop.f32.mrb[0].mxu0
      %v2031 = vpop.f32.mrb[0].mxu0
      %v2032 = vadd.f32 0.0, %v2031
      %v2033 = vpop.f32.mrb[0].mxu0
      %2034 = vmatprep.mubr.bf16.mxu0 0
      %2035 = vmatmul.mubr.bf16.gmra.mrb[0].mxu0 %v1256
      %v2036 = vpop.f32.mrb[0].mxu0
      %v2037 = vadd.f32 0.0, %v2036
      %v2038 = vpop.f32.mrb[0].mxu0
      %v2039 = vpop.f32.mrb[0].mxu0
      %v2040 = vadd.f32 0.0, %v2039
      %v2041 = vpop.f32.mrb[0].mxu0
      %2042 = vmatprep.mubr.bf16.mxu0 0
      %2043 = vmatmul.mubr.bf16.gmra.mrb[0].mxu0 %v1981
      %v2044 = vpop.f32.mrb[0].mxu0
      %v2045 = vadd.f32 0.0, %v2044
      %v2046 = vpop.f32.mrb[0].mxu0
      %v2047 = vpop.f32.mrb[0].mxu0
      %v2048 = vadd.f32 0.0, %v2047
      %v2049 = vpop.f32.mrb[0].mxu0
      %2050 = vdwg.mxu0
      %v2051 = vadd.f32 %v1885, %v2021
      %v2052 = vadd.f32 %v1886, %v2024
      %v2053 = vadd.f32 %v1887, %v2029
      %v2054 = vadd.f32 %v1888, %v2032
      %v2055 = vadd.f32 %v1889, %v2037
      %v2056 = vadd.f32 %v1890, %v2040
      %v2057 = vadd.f32 %v1891, %v2045
      %v2058 = vadd.f32 %v1892, %v2048
      %v2059 = vshrl.u32 %v1184, 16
      %v2061 = vshll.u32 %v1184, 16
      %v2063 = vrot.slane %v2061, 1
      %v2064 = vor.u32 %v2059, %v2063
      %v2066 = vshll.u32 %v1185, 16
      %v2068 = vrot.slane %v2066, 1
      %v2069 = vsel %vm1197, %v2064, %v2068
      %v2071 = vsel %vm824, %v2069, 0
      %2073 = vmatprep.subr.bf16.mxu0 0
      %2074 = vmatpush1.bf16.msra.mxu0 %v1984
      %2075 = vmatprep.subr.bf16.mxu0 0
      %2076 = vmatpush1.bf16.msra.mxu0 0
      %2077 = vmatprep.subr.bf16.mxu0 0
      %2078 = vmatpush1.bf16.msra.mxu0 0
      %2079 = vmatprep.subr.bf16.mxu0 0
      %2080 = vmatpush1.bf16.msra.mxu0 0
      %2081 = vmatprep.subr.bf16.mxu0 0
      %2082 = vmatpush1.bf16.msra.mxu0 0
      %2083 = vmatprep.subr.bf16.mxu0 0
      %2084 = vmatpush1.bf16.msra.mxu0 0
      %2085 = vmatprep.subr.bf16.mxu0 0
      %2086 = vmatpush1.bf16.msra.mxu0 0
      %2087 = vmatprep.subr.bf16.mxu0 0
      %2088 = vmatpush1.bf16.msra.mxu0 0
      %2089 = vmatprep.subr.bf16.mxu0 0
      %2090 = vmatpush1.bf16.msra.mxu0 0
      %2091 = vmatprep.subr.bf16.mxu0 0
      %2092 = vmatpush1.bf16.msra.mxu0 0
      %2093 = vmatprep.subr.bf16.mxu0 0
      %2094 = vmatpush1.bf16.msra.mxu0 0
      %2095 = vmatprep.subr.bf16.mxu0 0
      %2096 = vmatpush1.bf16.msra.mxu0 0
      %2097 = vmatprep.subr.bf16.mxu0 0
      %2098 = vmatpush1.bf16.msra.mxu0 0
      %2099 = vmatprep.subr.bf16.mxu0 0
      %2100 = vmatpush1.bf16.msra.mxu0 0
      %2101 = vmatprep.subr.bf16.mxu0 0
      %2102 = vmatpush1.bf16.msra.mxu0 0
      %2103 = vmatprep.subr.bf16.mxu0 0
      %2104 = vmatpush1.bf16.msra.mxu0 0
      %2105 = vmatprep.mubr.bf16.mxu0 0
      %2106 = vmatmul.mubr.bf16.gmra.mrb[0].mxu0 %v1454
      %v2107 = vpop.f32.mrb[0].mxu0
      %v2108 = vadd.f32 0.0, %v2107
      %v2109 = vpop.f32.mrb[0].mxu0
      %v2110 = vpop.f32.mrb[0].mxu0
      %v2111 = vadd.f32 0.0, %v2110
      %v2112 = vpop.f32.mrb[0].mxu0
      %2113 = vmatprep.mubr.bf16.mxu0 0
      %2114 = vmatmul.mubr.bf16.gmra.mrb[0].mxu0 %v1457
      %v2115 = vpop.f32.mrb[0].mxu0
      %v2116 = vadd.f32 0.0, %v2115
      %v2117 = vpop.f32.mrb[0].mxu0
      %v2118 = vpop.f32.mrb[0].mxu0
      %v2119 = vadd.f32 0.0, %v2118
      %v2120 = vpop.f32.mrb[0].mxu0
      %2121 = vmatprep.mubr.bf16.mxu0 0
      %2122 = vmatmul.mubr.bf16.gmra.mrb[0].mxu0 %v1460
      %v2123 = vpop.f32.mrb[0].mxu0
      %v2124 = vadd.f32 0.0, %v2123
      %v2125 = vpop.f32.mrb[0].mxu0
      %v2126 = vpop.f32.mrb[0].mxu0
      %v2127 = vadd.f32 0.0, %v2126
      %v2128 = vpop.f32.mrb[0].mxu0
      %2129 = vmatprep.mubr.bf16.mxu0 0
      %2130 = vmatmul.mubr.bf16.gmra.mrb[0].mxu0 %v2071
      %v2131 = vpop.f32.mrb[0].mxu0
      %v2132 = vadd.f32 0.0, %v2131
      %v2133 = vpop.f32.mrb[0].mxu0
      %v2134 = vpop.f32.mrb[0].mxu0
      %v2135 = vadd.f32 0.0, %v2134
      %v2136 = vpop.f32.mrb[0].mxu0
      %2137 = vdwg.mxu0
      %v2138 = vadd.f32 %v1961, %v2108
      %v2139 = vadd.f32 %v1962, %v2111
      %v2140 = vadd.f32 %v1963, %v2116
      %v2141 = vadd.f32 %v1964, %v2119
      %v2142 = vadd.f32 %v1965, %v2124
      %v2143 = vadd.f32 %v1966, %v2127
      %v2144 = vadd.f32 %v1967, %v2132
      %v2145 = vadd.f32 %v1968, %v2135
      %v2148 = vrot.slane %v981, 1
      %v2149 = vrot.slane %v987, 1
      %v2150 = vsel %vm1608, %v2148, %v2149
      %v2152 = vsel %vm824, %v2150, 0
      %v2155 = vsel %vm837, %v1193, 0
      %2157 = vmatprep.subr.bf16.mxu0 0
      %2158 = vmatpush1.bf16.msra.mxu0 %v2155
      %2159 = vmatprep.subr.bf16.mxu0 0
      %2160 = vmatpush1.bf16.msra.mxu0 0
      %2161 = vmatprep.subr.bf16.mxu0 0
      %2162 = vmatpush1.bf16.msra.mxu0 0
      %2163 = vmatprep.subr.bf16.mxu0 0
      %2164 = vmatpush1.bf16.msra.mxu0 0
      %2165 = vmatprep.subr.bf16.mxu0 0
      %2166 = vmatpush1.bf16.msra.mxu0 0
      %2167 = vmatprep.subr.bf16.mxu0 0
      %2168 = vmatpush1.bf16.msra.mxu0 0
      %2169 = vmatprep.subr.bf16.mxu0 0
      %2170 = vmatpush1.bf16.msra.mxu0 0
      %2171 = vmatprep.subr.bf16.mxu0 0
      %2172 = vmatpush1.bf16.msra.mxu0 0
      %2173 = vmatprep.subr.bf16.mxu0 0
      %2174 = vmatpush1.bf16.msra.mxu0 0
      %2175 = vmatprep.subr.bf16.mxu0 0
      %2176 = vmatpush1.bf16.msra.mxu0 0
      %2177 = vmatprep.subr.bf16.mxu0 0
      %2178 = vmatpush1.bf16.msra.mxu0 0
      %2179 = vmatprep.subr.bf16.mxu0 0
      %2180 = vmatpush1.bf16.msra.mxu0 0
      %2181 = vmatprep.subr.bf16.mxu0 0
      %2182 = vmatpush1.bf16.msra.mxu0 0
      %2183 = vmatprep.subr.bf16.mxu0 0
      %2184 = vmatpush1.bf16.msra.mxu0 0
      %2185 = vmatprep.subr.bf16.mxu0 0
      %2186 = vmatpush1.bf16.msra.mxu0 0
      %2187 = vmatprep.subr.bf16.mxu0 0
      %2188 = vmatpush1.bf16.msra.mxu0 0
      %2189 = vmatprep.mubr.bf16.mxu0 0
      %2190 = vmatmul.mubr.bf16.gmra.mrb[0].mxu0 %v1625
      %v2191 = vpop.f32.mrb[0].mxu0
      %v2192 = vadd.f32 0.0, %v2191
      %v2193 = vpop.f32.mrb[0].mxu0
      %v2194 = vpop.f32.mrb[0].mxu0
      %v2195 = vadd.f32 0.0, %v2194
      %v2196 = vpop.f32.mrb[0].mxu0
      %2197 = vmatprep.mubr.bf16.mxu0 0
      %2198 = vmatmul.mubr.bf16.gmra.mrb[0].mxu0 %v1628
      %v2199 = vpop.f32.mrb[0].mxu0
      %v2200 = vadd.f32 0.0, %v2199
      %v2201 = vpop.f32.mrb[0].mxu0
      %v2202 = vpop.f32.mrb[0].mxu0
      %v2203 = vadd.f32 0.0, %v2202
      %v2204 = vpop.f32.mrb[0].mxu0
      %2205 = vmatprep.mubr.bf16.mxu0 0
      %2206 = vmatmul.mubr.bf16.gmra.mrb[0].mxu0 %v1631
      %v2207 = vpop.f32.mrb[0].mxu0
      %v2208 = vadd.f32 0.0, %v2207
      %v2209 = vpop.f32.mrb[0].mxu0
      %v2210 = vpop.f32.mrb[0].mxu0
      %v2211 = vadd.f32 0.0, %v2210
      %v2212 = vpop.f32.mrb[0].mxu0
      %2213 = vmatprep.mubr.bf16.mxu0 0
      %2214 = vmatmul.mubr.bf16.gmra.mrb[0].mxu0 %v2152
      %v2215 = vpop.f32.mrb[0].mxu0
      %v2216 = vadd.f32 0.0, %v2215
      %v2217 = vpop.f32.mrb[0].mxu0
      %v2218 = vpop.f32.mrb[0].mxu0
      %v2219 = vadd.f32 0.0, %v2218
      %v2220 = vpop.f32.mrb[0].mxu0
      %2221 = vdwg.mxu0
      %v2222 = vadd.f32 %v2051, %v2192
      %v2223 = vadd.f32 %v2052, %v2195
      %v2224 = vadd.f32 %v2053, %v2200
      %v2225 = vadd.f32 %v2054, %v2203
      %v2226 = vadd.f32 %v2055, %v2208
      %v2227 = vadd.f32 %v2056, %v2211
      %v2228 = vadd.f32 %v2057, %v2216
      %v2229 = vadd.f32 %v2058, %v2219
      %v2232 = vrot.slane %v1184, 1
      %v2233 = vrot.slane %v1185, 1
      %v2234 = vsel %vm1608, %v2232, %v2233
      %v2236 = vsel %vm824, %v2234, 0
      %2238 = vmatprep.subr.bf16.mxu0 0
      %2239 = vmatpush1.bf16.msra.mxu0 %v2155
      %2240 = vmatprep.subr.bf16.mxu0 0
      %2241 = vmatpush1.bf16.msra.mxu0 0
      %2242 = vmatprep.subr.bf16.mxu0 0
      %2243 = vmatpush1.bf16.msra.mxu0 0
      %2244 = vmatprep.subr.bf16.mxu0 0
      %2245 = vmatpush1.bf16.msra.mxu0 0
      %2246 = vmatprep.subr.bf16.mxu0 0
      %2247 = vmatpush1.bf16.msra.mxu0 0
      %2248 = vmatprep.subr.bf16.mxu0 0
      %2249 = vmatpush1.bf16.msra.mxu0 0
      %2250 = vmatprep.subr.bf16.mxu0 0
      %2251 = vmatpush1.bf16.msra.mxu0 0
      %2252 = vmatprep.subr.bf16.mxu0 0
      %2253 = vmatpush1.bf16.msra.mxu0 0
      %2254 = vmatprep.subr.bf16.mxu0 0
      %2255 = vmatpush1.bf16.msra.mxu0 0
      %2256 = vmatprep.subr.bf16.mxu0 0
      %2257 = vmatpush1.bf16.msra.mxu0 0
      %2258 = vmatprep.subr.bf16.mxu0 0
      %2259 = vmatpush1.bf16.msra.mxu0 0
      %2260 = vmatprep.subr.bf16.mxu0 0
      %2261 = vmatpush1.bf16.msra.mxu0 0
      %2262 = vmatprep.subr.bf16.mxu0 0
      %2263 = vmatpush1.bf16.msra.mxu0 0
      %2264 = vmatprep.subr.bf16.mxu0 0
      %2265 = vmatpush1.bf16.msra.mxu0 0
      %2266 = vmatprep.subr.bf16.mxu0 0
      %2267 = vmatpush1.bf16.msra.mxu0 0
      %2268 = vmatprep.subr.bf16.mxu0 0
      %2269 = vmatpush1.bf16.msra.mxu0 0
      %2270 = vmatprep.mubr.bf16.mxu0 0
      %2271 = vmatmul.mubr.bf16.gmra.mrb[0].mxu0 %v1733
      %v2272 = vpop.f32.mrb[0].mxu0
      %v2273 = vadd.f32 0.0, %v2272
      %v2274 = vpop.f32.mrb[0].mxu0
      %v2275 = vpop.f32.mrb[0].mxu0
      %v2276 = vadd.f32 0.0, %v2275
      %v2277 = vpop.f32.mrb[0].mxu0
      %2278 = vmatprep.mubr.bf16.mxu0 0
      %2279 = vmatmul.mubr.bf16.gmra.mrb[0].mxu0 %v1736
      %v2280 = vpop.f32.mrb[0].mxu0
      %v2281 = vadd.f32 0.0, %v2280
      %v2282 = vpop.f32.mrb[0].mxu0
      %v2283 = vpop.f32.mrb[0].mxu0
      %v2284 = vadd.f32 0.0, %v2283
      %v2285 = vpop.f32.mrb[0].mxu0
      %2286 = vmatprep.mubr.bf16.mxu0 0
      %2287 = vmatmul.mubr.bf16.gmra.mrb[0].mxu0 %v1739
      %v2288 = vpop.f32.mrb[0].mxu0
      %v2289 = vadd.f32 0.0, %v2288
      %v2290 = vpop.f32.mrb[0].mxu0
      %v2291 = vpop.f32.mrb[0].mxu0
      %v2292 = vadd.f32 0.0, %v2291
      %v2293 = vpop.f32.mrb[0].mxu0
      %2294 = vmatprep.mubr.bf16.mxu0 0
      %2295 = vmatmul.mubr.bf16.gmra.mrb[0].mxu0 %v2236
      %v2296 = vpop.f32.mrb[0].mxu0
      %v2297 = vadd.f32 0.0, %v2296
      %v2298 = vpop.f32.mrb[0].mxu0
      %v2299 = vpop.f32.mrb[0].mxu0
      %v2300 = vadd.f32 0.0, %v2299
      %v2301 = vpop.f32.mrb[0].mxu0
      %2302 = vdwg.mxu0
      %v2303 = vadd.f32 %v2138, %v2273
      %v2304 = vadd.f32 %v2139, %v2276
      %v2305 = vadd.f32 %v2140, %v2281
      %v2306 = vadd.f32 %v2141, %v2284
      %v2307 = vadd.f32 %v2142, %v2289
      %v2308 = vadd.f32 %v2143, %v2292
      %v2309 = vadd.f32 %v2144, %v2297
      %v2310 = vadd.f32 %v2145, %v2300
      %v2312 = vsel %vm824, %v982, 0
      %v2315 = vsel %vm837, %v1194, 0
      %2317 = vmatprep.subr.bf16.mxu0 0
      %2318 = vmatpush1.bf16.msra.mxu0 %v2315
      %2319 = vmatprep.subr.bf16.mxu0 0
      %2320 = vmatpush1.bf16.msra.mxu0 0
      %2321 = vmatprep.subr.bf16.mxu0 0
      %2322 = vmatpush1.bf16.msra.mxu0 0
      %2323 = vmatprep.subr.bf16.mxu0 0
      %2324 = vmatpush1.bf16.msra.mxu0 0
      %2325 = vmatprep.subr.bf16.mxu0 0
      %2326 = vmatpush1.bf16.msra.mxu0 0
      %2327 = vmatprep.subr.bf16.mxu0 0
      %2328 = vmatpush1.bf16.msra.mxu0 0
      %2329 = vmatprep.subr.bf16.mxu0 0
      %2330 = vmatpush1.bf16.msra.mxu0 0
      %2331 = vmatprep.subr.bf16.mxu0 0
      %2332 = vmatpush1.bf16.msra.mxu0 0
      %2333 = vmatprep.subr.bf16.mxu0 0
      %2334 = vmatpush1.bf16.msra.mxu0 0
      %2335 = vmatprep.subr.bf16.mxu0 0
      %2336 = vmatpush1.bf16.msra.mxu0 0
      %2337 = vmatprep.subr.bf16.mxu0 0
      %2338 = vmatpush1.bf16.msra.mxu0 0
      %2339 = vmatprep.subr.bf16.mxu0 0
      %2340 = vmatpush1.bf16.msra.mxu0 0
      %2341 = vmatprep.subr.bf16.mxu0 0
      %2342 = vmatpush1.bf16.msra.mxu0 0
      %2343 = vmatprep.subr.bf16.mxu0 0
      %2344 = vmatpush1.bf16.msra.mxu0 0
      %2345 = vmatprep.subr.bf16.mxu0 0
      %2346 = vmatpush1.bf16.msra.mxu0 0
      %2347 = vmatprep.subr.bf16.mxu0 0
      %2348 = vmatpush1.bf16.msra.mxu0 0
      %2349 = vmatprep.mubr.bf16.mxu0 0
      %2350 = vmatmul.mubr.bf16.gmra.mrb[0].mxu0 %v1330
      %v2351 = vpop.f32.mrb[0].mxu0
      %v2352 = vadd.f32 0.0, %v2351
      %v2353 = vpop.f32.mrb[0].mxu0
      %v2354 = vpop.f32.mrb[0].mxu0
      %v2355 = vadd.f32 0.0, %v2354
      %v2356 = vpop.f32.mrb[0].mxu0
      %2357 = vmatprep.mubr.bf16.mxu0 0
      %2358 = vmatmul.mubr.bf16.gmra.mrb[0].mxu0 %v1332
      %v2359 = vpop.f32.mrb[0].mxu0
      %v2360 = vadd.f32 0.0, %v2359
      %v2361 = vpop.f32.mrb[0].mxu0
      %v2362 = vpop.f32.mrb[0].mxu0
      %v2363 = vadd.f32 0.0, %v2362
      %v2364 = vpop.f32.mrb[0].mxu0
      %2365 = vmatprep.mubr.bf16.mxu0 0
      %2366 = vmatmul.mubr.bf16.gmra.mrb[0].mxu0 %v1815
      %v2367 = vpop.f32.mrb[0].mxu0
      %v2368 = vadd.f32 0.0, %v2367
      %v2369 = vpop.f32.mrb[0].mxu0
      %v2370 = vpop.f32.mrb[0].mxu0
      %v2371 = vadd.f32 0.0, %v2370
      %v2372 = vpop.f32.mrb[0].mxu0
      %2373 = vmatprep.mubr.bf16.mxu0 0
      %2374 = vmatmul.mubr.bf16.gmra.mrb[0].mxu0 %v2312
      %v2375 = vpop.f32.mrb[0].mxu0
      %v2376 = vadd.f32 0.0, %v2375
      %v2377 = vpop.f32.mrb[0].mxu0
      %v2378 = vpop.f32.mrb[0].mxu0
      %v2379 = vadd.f32 0.0, %v2378
      %v2380 = vpop.f32.mrb[0].mxu0
      %2381 = vdwg.mxu0
      %v2382 = vadd.f32 %v2222, %v2352
      %v2383 = vadd.f32 %v2223, %v2355
      %v2384 = vadd.f32 %v2224, %v2360
      %v2385 = vadd.f32 %v2225, %v2363
      %v2386 = vadd.f32 %v2226, %v2368
      %v2387 = vadd.f32 %v2227, %v2371
      %v2388 = vadd.f32 %v2228, %v2376
      %v2389 = vadd.f32 %v2229, %v2379
      %v2391 = vsel %vm824, %v1186, 0
      %2393 = vmatprep.subr.bf16.mxu0 0
      %2394 = vmatpush1.bf16.msra.mxu0 %v2315
      %2395 = vmatprep.subr.bf16.mxu0 0
      %2396 = vmatpush1.bf16.msra.mxu0 0
      %2397 = vmatprep.subr.bf16.mxu0 0
      %2398 = vmatpush1.bf16.msra.mxu0 0
      %2399 = vmatprep.subr.bf16.mxu0 0
      %2400 = vmatpush1.bf16.msra.mxu0 0
      %2401 = vmatprep.subr.bf16.mxu0 0
      %2402 = vmatpush1.bf16.msra.mxu0 0
      %2403 = vmatprep.subr.bf16.mxu0 0
      %2404 = vmatpush1.bf16.msra.mxu0 0
      %2405 = vmatprep.subr.bf16.mxu0 0
      %2406 = vmatpush1.bf16.msra.mxu0 0
      %2407 = vmatprep.subr.bf16.mxu0 0
      %2408 = vmatpush1.bf16.msra.mxu0 0
      %2409 = vmatprep.subr.bf16.mxu0 0
      %2410 = vmatpush1.bf16.msra.mxu0 0
      %2411 = vmatprep.subr.bf16.mxu0 0
      %2412 = vmatpush1.bf16.msra.mxu0 0
      %2413 = vmatprep.subr.bf16.mxu0 0
      %2414 = vmatpush1.bf16.msra.mxu0 0
      %2415 = vmatprep.subr.bf16.mxu0 0
      %2416 = vmatpush1.bf16.msra.mxu0 0
      %2417 = vmatprep.subr.bf16.mxu0 0
      %2418 = vmatpush1.bf16.msra.mxu0 0
      %2419 = vmatprep.subr.bf16.mxu0 0
      %2420 = vmatpush1.bf16.msra.mxu0 0
      %2421 = vmatprep.subr.bf16.mxu0 0
      %2422 = vmatpush1.bf16.msra.mxu0 0
      %2423 = vmatprep.subr.bf16.mxu0 0
      %2424 = vmatpush1.bf16.msra.mxu0 0
      %2425 = vmatprep.mubr.bf16.mxu0 0
      %2426 = vmatmul.mubr.bf16.gmra.mrb[0].mxu0 %v1531
      %v2427 = vpop.f32.mrb[0].mxu0
      %v2428 = vadd.f32 0.0, %v2427
      %v2429 = vpop.f32.mrb[0].mxu0
      %v2430 = vpop.f32.mrb[0].mxu0
      %v2431 = vadd.f32 0.0, %v2430
      %v2432 = vpop.f32.mrb[0].mxu0
      %2433 = vmatprep.mubr.bf16.mxu0 0
      %2434 = vmatmul.mubr.bf16.gmra.mrb[0].mxu0 %v1533
      %v2435 = vpop.f32.mrb[0].mxu0
      %v2436 = vadd.f32 0.0, %v2435
      %v2437 = vpop.f32.mrb[0].mxu0
      %v2438 = vpop.f32.mrb[0].mxu0
      %v2439 = vadd.f32 0.0, %v2438
      %v2440 = vpop.f32.mrb[0].mxu0
      %2441 = vmatprep.mubr.bf16.mxu0 0
      %2442 = vmatmul.mubr.bf16.gmra.mrb[0].mxu0 %v1894
      %v2443 = vpop.f32.mrb[0].mxu0
      %v2444 = vadd.f32 0.0, %v2443
      %v2445 = vpop.f32.mrb[0].mxu0
      %v2446 = vpop.f32.mrb[0].mxu0
      %v2447 = vadd.f32 0.0, %v2446
      %v2448 = vpop.f32.mrb[0].mxu0
      %2449 = vmatprep.mubr.bf16.mxu0 0
      %2450 = vmatmul.mubr.bf16.gmra.mrb[0].mxu0 %v2391
      %v2451 = vpop.f32.mrb[0].mxu0
      %v2452 = vadd.f32 0.0, %v2451
      %v2453 = vpop.f32.mrb[0].mxu0
      %v2454 = vpop.f32.mrb[0].mxu0
      %v2455 = vadd.f32 0.0, %v2454
      %v2456 = vpop.f32.mrb[0].mxu0
      %2457 = vdwg.mxu0
      %v2458 = vadd.f32 %v2303, %v2428
      %v2459 = vadd.f32 %v2304, %v2431
      %v2460 = vadd.f32 %v2305, %v2436
      %v2461 = vadd.f32 %v2306, %v2439
      %v2462 = vadd.f32 %v2307, %v2444
      %v2463 = vadd.f32 %v2308, %v2447
      %v2464 = vadd.f32 %v2309, %v2452
      %v2465 = vadd.f32 %v2310, %v2455
      %v2466 = vshrl.u32 %v982, 16
      %v2468 = vshll.u32 %v982, 16
      %v2470 = vrot.slane %v2468, 1
      %v2471 = vor.u32 %v2466, %v2470
      %v2473 = vshll.u32 %v988, 16
      %v2475 = vrot.slane %v2473, 1
      %v2476 = vsel %vm1197, %v2471, %v2475
      %v2478 = vsel %vm824, %v2476, 0
      %v2481 = vsel %vm837, %v1195, 0
      %2483 = vmatprep.subr.bf16.mxu0 0
      %2484 = vmatpush1.bf16.msra.mxu0 %v2481
      %2485 = vmatprep.subr.bf16.mxu0 0
      %2486 = vmatpush1.bf16.msra.mxu0 0
      %2487 = vmatprep.subr.bf16.mxu0 0
      %2488 = vmatpush1.bf16.msra.mxu0 0
      %2489 = vmatprep.subr.bf16.mxu0 0
      %2490 = vmatpush1.bf16.msra.mxu0 0
      %2491 = vmatprep.subr.bf16.mxu0 0
      %2492 = vmatpush1.bf16.msra.mxu0 0
      %2493 = vmatprep.subr.bf16.mxu0 0
      %2494 = vmatpush1.bf16.msra.mxu0 0
      %2495 = vmatprep.subr.bf16.mxu0 0
      %2496 = vmatpush1.bf16.msra.mxu0 0
      %2497 = vmatprep.subr.bf16.mxu0 0
      %2498 = vmatpush1.bf16.msra.mxu0 0
      %2499 = vmatprep.subr.bf16.mxu0 0
      %2500 = vmatpush1.bf16.msra.mxu0 0
      %2501 = vmatprep.subr.bf16.mxu0 0
      %2502 = vmatpush1.bf16.msra.mxu0 0
      %2503 = vmatprep.subr.bf16.mxu0 0
      %2504 = vmatpush1.bf16.msra.mxu0 0
      %2505 = vmatprep.subr.bf16.mxu0 0
      %2506 = vmatpush1.bf16.msra.mxu0 0
      %2507 = vmatprep.subr.bf16.mxu0 0
      %2508 = vmatpush1.bf16.msra.mxu0 0
      %2509 = vmatprep.subr.bf16.mxu0 0
      %2510 = vmatpush1.bf16.msra.mxu0 0
      %2511 = vmatprep.subr.bf16.mxu0 0
      %2512 = vmatpush1.bf16.msra.mxu0 0
      %2513 = vmatprep.subr.bf16.mxu0 0
      %2514 = vmatpush1.bf16.msra.mxu0 0
      %2515 = vmatprep.mubr.bf16.mxu0 0
      %2516 = vmatmul.mubr.bf16.gmra.mrb[0].mxu0 %v1253
      %v2517 = vpop.f32.mrb[0].mxu0
      %v2518 = vadd.f32 0.0, %v2517
      %v2519 = vpop.f32.mrb[0].mxu0
      %v2520 = vpop.f32.mrb[0].mxu0
      %v2521 = vadd.f32 0.0, %v2520
      %v2522 = vpop.f32.mrb[0].mxu0
      %2523 = vmatprep.mubr.bf16.mxu0 0
      %2524 = vmatmul.mubr.bf16.gmra.mrb[0].mxu0 %v1256
      %v2525 = vpop.f32.mrb[0].mxu0
      %v2526 = vadd.f32 0.0, %v2525
      %v2527 = vpop.f32.mrb[0].mxu0
      %v2528 = vpop.f32.mrb[0].mxu0
      %v2529 = vadd.f32 0.0, %v2528
      %v2530 = vpop.f32.mrb[0].mxu0
      %2531 = vmatprep.mubr.bf16.mxu0 0
      %2532 = vmatmul.mubr.bf16.gmra.mrb[0].mxu0 %v1981
      %v2533 = vpop.f32.mrb[0].mxu0
      %v2534 = vadd.f32 0.0, %v2533
      %v2535 = vpop.f32.mrb[0].mxu0
      %v2536 = vpop.f32.mrb[0].mxu0
      %v2537 = vadd.f32 0.0, %v2536
      %v2538 = vpop.f32.mrb[0].mxu0
      %2539 = vmatprep.mubr.bf16.mxu0 0
      %2540 = vmatmul.mubr.bf16.gmra.mrb[0].mxu0 %v2478
      %v2541 = vpop.f32.mrb[0].mxu0
      %v2542 = vadd.f32 0.0, %v2541
      %v2543 = vpop.f32.mrb[0].mxu0
      %v2544 = vpop.f32.mrb[0].mxu0
      %v2545 = vadd.f32 0.0, %v2544
      %v2546 = vpop.f32.mrb[0].mxu0
      %2547 = vdwg.mxu0
      %v2548 = vadd.f32 %v2382, %v2518
      %v2549 = vadd.f32 %v2383, %v2521
      %v2550 = vadd.f32 %v2384, %v2526
      %v2551 = vadd.f32 %v2385, %v2529
      %v2552 = vadd.f32 %v2386, %v2534
      %v2553 = vadd.f32 %v2387, %v2537
      %v2554 = vadd.f32 %v2388, %v2542
      %v2555 = vadd.f32 %v2389, %v2545
      %v2556 = vshrl.u32 %v1186, 16
      %v2558 = vshll.u32 %v1186, 16
      %v2560 = vrot.slane %v2558, 1
      %v2561 = vor.u32 %v2556, %v2560
      %v2563 = vshll.u32 %v1187, 16
      %v2565 = vrot.slane %v2563, 1
      %v2566 = vsel %vm1197, %v2561, %v2565
      %v2568 = vsel %vm824, %v2566, 0
      %2570 = vmatprep.subr.bf16.mxu0 0
      %2571 = vmatpush1.bf16.msra.mxu0 %v2481
      %2572 = vmatprep.subr.bf16.mxu0 0
      %2573 = vmatpush1.bf16.msra.mxu0 0
      %2574 = vmatprep.subr.bf16.mxu0 0
      %2575 = vmatpush1.bf16.msra.mxu0 0
      %2576 = vmatprep.subr.bf16.mxu0 0
      %2577 = vmatpush1.bf16.msra.mxu0 0
      %2578 = vmatprep.subr.bf16.mxu0 0
      %2579 = vmatpush1.bf16.msra.mxu0 0
      %2580 = vmatprep.subr.bf16.mxu0 0
      %2581 = vmatpush1.bf16.msra.mxu0 0
      %2582 = vmatprep.subr.bf16.mxu0 0
      %2583 = vmatpush1.bf16.msra.mxu0 0
      %2584 = vmatprep.subr.bf16.mxu0 0
      %2585 = vmatpush1.bf16.msra.mxu0 0
      %2586 = vmatprep.subr.bf16.mxu0 0
      %2587 = vmatpush1.bf16.msra.mxu0 0
      %2588 = vmatprep.subr.bf16.mxu0 0
      %2589 = vmatpush1.bf16.msra.mxu0 0
      %2590 = vmatprep.subr.bf16.mxu0 0
      %2591 = vmatpush1.bf16.msra.mxu0 0
      %2592 = vmatprep.subr.bf16.mxu0 0
      %2593 = vmatpush1.bf16.msra.mxu0 0
      %2594 = vmatprep.subr.bf16.mxu0 0
      %2595 = vmatpush1.bf16.msra.mxu0 0
      %2596 = vmatprep.subr.bf16.mxu0 0
      %2597 = vmatpush1.bf16.msra.mxu0 0
      %2598 = vmatprep.subr.bf16.mxu0 0
      %2599 = vmatpush1.bf16.msra.mxu0 0
      %2600 = vmatprep.subr.bf16.mxu0 0
      %2601 = vmatpush1.bf16.msra.mxu0 0
      %2602 = vmatprep.mubr.bf16.mxu0 0
      %2603 = vmatmul.mubr.bf16.gmra.mrb[0].mxu0 %v1457
      %v2604 = vpop.f32.mrb[0].mxu0
      %v2605 = vadd.f32 0.0, %v2604
      %v2606 = vpop.f32.mrb[0].mxu0
      %v2607 = vpop.f32.mrb[0].mxu0
      %v2608 = vadd.f32 0.0, %v2607
      %v2609 = vpop.f32.mrb[0].mxu0
      %2610 = vmatprep.mubr.bf16.mxu0 0
      %2611 = vmatmul.mubr.bf16.gmra.mrb[0].mxu0 %v1460
      %v2612 = vpop.f32.mrb[0].mxu0
      %v2613 = vadd.f32 0.0, %v2612
      %v2614 = vpop.f32.mrb[0].mxu0
      %v2615 = vpop.f32.mrb[0].mxu0
      %v2616 = vadd.f32 0.0, %v2615
      %v2617 = vpop.f32.mrb[0].mxu0
      %2618 = vmatprep.mubr.bf16.mxu0 0
      %2619 = vmatmul.mubr.bf16.gmra.mrb[0].mxu0 %v2071
      %v2620 = vpop.f32.mrb[0].mxu0
      %v2621 = vadd.f32 0.0, %v2620
      %v2622 = vpop.f32.mrb[0].mxu0
      %v2623 = vpop.f32.mrb[0].mxu0
      %v2624 = vadd.f32 0.0, %v2623
      %v2625 = vpop.f32.mrb[0].mxu0
      %2626 = vmatprep.mubr.bf16.mxu0 0
      %2627 = vmatmul.mubr.bf16.gmra.mrb[0].mxu0 %v2568
      %v2628 = vpop.f32.mrb[0].mxu0
      %v2629 = vadd.f32 0.0, %v2628
      %v2630 = vpop.f32.mrb[0].mxu0
      %v2631 = vpop.f32.mrb[0].mxu0
      %v2632 = vadd.f32 0.0, %v2631
      %v2633 = vpop.f32.mrb[0].mxu0
      %2634 = vdwg.mxu0
      %v2635 = vadd.f32 %v2458, %v2605
      %v2636 = vadd.f32 %v2459, %v2608
      %v2637 = vadd.f32 %v2460, %v2613
      %v2638 = vadd.f32 %v2461, %v2616
      %v2639 = vadd.f32 %v2462, %v2621
      %v2640 = vadd.f32 %v2463, %v2624
      %v2641 = vadd.f32 %v2464, %v2629
      %v2642 = vadd.f32 %v2465, %v2632
      %v2645 = vrot.slane %v982, 1
      %v2646 = vrot.slane %v988, 1
      %v2647 = vsel %vm1608, %v2645, %v2646
      %v2649 = vsel %vm824, %v2647, 0
      %v2652 = vsel %vm837, %v1196, 0
      %2654 = vmatprep.subr.bf16.mxu0 0
      %2655 = vmatpush1.bf16.msra.mxu0 %v2652
      %2656 = vmatprep.subr.bf16.mxu0 0
      %2657 = vmatpush1.bf16.msra.mxu0 0
      %2658 = vmatprep.subr.bf16.mxu0 0
      %2659 = vmatpush1.bf16.msra.mxu0 0
      %2660 = vmatprep.subr.bf16.mxu0 0
      %2661 = vmatpush1.bf16.msra.mxu0 0
      %2662 = vmatprep.subr.bf16.mxu0 0
      %2663 = vmatpush1.bf16.msra.mxu0 0
      %2664 = vmatprep.subr.bf16.mxu0 0
      %2665 = vmatpush1.bf16.msra.mxu0 0
      %2666 = vmatprep.subr.bf16.mxu0 0
      %2667 = vmatpush1.bf16.msra.mxu0 0
      %2668 = vmatprep.subr.bf16.mxu0 0
      %2669 = vmatpush1.bf16.msra.mxu0 0
      %2670 = vmatprep.subr.bf16.mxu0 0
      %2671 = vmatpush1.bf16.msra.mxu0 0
      %2672 = vmatprep.subr.bf16.mxu0 0
      %2673 = vmatpush1.bf16.msra.mxu0 0
      %2674 = vmatprep.subr.bf16.mxu0 0
      %2675 = vmatpush1.bf16.msra.mxu0 0
      %2676 = vmatprep.subr.bf16.mxu0 0
      %2677 = vmatpush1.bf16.msra.mxu0 0
      %2678 = vmatprep.subr.bf16.mxu0 0
      %2679 = vmatpush1.bf16.msra.mxu0 0
      %2680 = vmatprep.subr.bf16.mxu0 0
      %2681 = vmatpush1.bf16.msra.mxu0 0
      %2682 = vmatprep.subr.bf16.mxu0 0
      %2683 = vmatpush1.bf16.msra.mxu0 0
      %2684 = vmatprep.subr.bf16.mxu0 0
      %2685 = vmatpush1.bf16.msra.mxu0 0
      %2686 = vmatprep.mubr.bf16.mxu0 0
      %2687 = vmatmul.mubr.bf16.gmra.mrb[0].mxu0 %v1628
      %v2688 = vpop.f32.mrb[0].mxu0
      %v2689 = vadd.f32 0.0, %v2688
      %v2690 = vpop.f32.mrb[0].mxu0
      %v2691 = vpop.f32.mrb[0].mxu0
      %v2692 = vadd.f32 0.0, %v2691
      %v2693 = vpop.f32.mrb[0].mxu0
      %2694 = vmatprep.mubr.bf16.mxu0 0
      %2695 = vmatmul.mubr.bf16.gmra.mrb[0].mxu0 %v1631
      %v2696 = vpop.f32.mrb[0].mxu0
      %v2697 = vadd.f32 0.0, %v2696
      %v2698 = vpop.f32.mrb[0].mxu0
      %v2699 = vpop.f32.mrb[0].mxu0
      %v2700 = vadd.f32 0.0, %v2699
      %v2701 = vpop.f32.mrb[0].mxu0
      %2702 = vmatprep.mubr.bf16.mxu0 0
      %2703 = vmatmul.mubr.bf16.gmra.mrb[0].mxu0 %v2152
      %v2704 = vpop.f32.mrb[0].mxu0
      %v2705 = vadd.f32 0.0, %v2704
      %v2706 = vpop.f32.mrb[0].mxu0
      %v2707 = vpop.f32.mrb[0].mxu0
      %v2708 = vadd.f32 0.0, %v2707
      %v2709 = vpop.f32.mrb[0].mxu0
      %2710 = vmatprep.mubr.bf16.mxu0 0
      %2711 = vmatmul.mubr.bf16.gmra.mrb[0].mxu0 %v2649
      %v2712 = vpop.f32.mrb[0].mxu0
      %v2713 = vadd.f32 0.0, %v2712
      %v2714 = vpop.f32.mrb[0].mxu0
      %v2715 = vpop.f32.mrb[0].mxu0
      %v2716 = vadd.f32 0.0, %v2715
      %v2717 = vpop.f32.mrb[0].mxu0
      %2718 = vdwg.mxu0
      %v2719 = vadd.f32 %v2548, %v2689
      %v2720 = vadd.f32 %v2549, %v2692
      %v2721 = vadd.f32 %v2550, %v2697
      %v2722 = vadd.f32 %v2551, %v2700
      %v2723 = vadd.f32 %v2552, %v2705
      %v2724 = vadd.f32 %v2553, %v2708
      %v2725 = vadd.f32 %v2554, %v2713
      %v2726 = vadd.f32 %v2555, %v2716
      %v2729 = vrot.slane %v1186, 1
      %v2730 = vrot.slane %v1187, 1
      %v2731 = vsel %vm1608, %v2729, %v2730
      %v2733 = vsel %vm824, %v2731, 0
      %2735 = vmatprep.subr.bf16.mxu0 0
      %2736 = vmatpush1.bf16.msra.mxu0 %v2652
      %2737 = vmatprep.subr.bf16.mxu0 0
      %2738 = vmatpush1.bf16.msra.mxu0 0
      %2739 = vmatprep.subr.bf16.mxu0 0
      %2740 = vmatpush1.bf16.msra.mxu0 0
      %2741 = vmatprep.subr.bf16.mxu0 0
      %2742 = vmatpush1.bf16.msra.mxu0 0
      %2743 = vmatprep.subr.bf16.mxu0 0
      %2744 = vmatpush1.bf16.msra.mxu0 0
      %2745 = vmatprep.subr.bf16.mxu0 0
      %2746 = vmatpush1.bf16.msra.mxu0 0
      %2747 = vmatprep.subr.bf16.mxu0 0
      %2748 = vmatpush1.bf16.msra.mxu0 0
      %2749 = vmatprep.subr.bf16.mxu0 0
      %2750 = vmatpush1.bf16.msra.mxu0 0
      %2751 = vmatprep.subr.bf16.mxu0 0
      %2752 = vmatpush1.bf16.msra.mxu0 0
      %2753 = vmatprep.subr.bf16.mxu0 0
      %2754 = vmatpush1.bf16.msra.mxu0 0
      %2755 = vmatprep.subr.bf16.mxu0 0
      %2756 = vmatpush1.bf16.msra.mxu0 0
      %2757 = vmatprep.subr.bf16.mxu0 0
      %2758 = vmatpush1.bf16.msra.mxu0 0
      %2759 = vmatprep.subr.bf16.mxu0 0
      %2760 = vmatpush1.bf16.msra.mxu0 0
      %2761 = vmatprep.subr.bf16.mxu0 0
      %2762 = vmatpush1.bf16.msra.mxu0 0
      %2763 = vmatprep.subr.bf16.mxu0 0
      %2764 = vmatpush1.bf16.msra.mxu0 0
      %2765 = vmatprep.subr.bf16.mxu0 0
      %2766 = vmatpush1.bf16.msra.mxu0 0
      %2767 = vmatprep.mubr.bf16.mxu0 0
      %2768 = vmatmul.mubr.bf16.gmra.mrb[0].mxu0 %v1736
      %v2769 = vpop.f32.mrb[0].mxu0
      %v2770 = vadd.f32 0.0, %v2769
      %v2771 = vpop.f32.mrb[0].mxu0
      %v2772 = vpop.f32.mrb[0].mxu0
      %v2773 = vadd.f32 0.0, %v2772
      %v2774 = vpop.f32.mrb[0].mxu0
      %2775 = vmatprep.mubr.bf16.mxu0 0
      %2776 = vmatmul.mubr.bf16.gmra.mrb[0].mxu0 %v1739
      %v2777 = vpop.f32.mrb[0].mxu0
      %v2778 = vadd.f32 0.0, %v2777
      %v2779 = vpop.f32.mrb[0].mxu0
      %v2780 = vpop.f32.mrb[0].mxu0
      %v2781 = vadd.f32 0.0, %v2780
      %v2782 = vpop.f32.mrb[0].mxu0
      %2783 = vmatprep.mubr.bf16.mxu0 0
      %2784 = vmatmul.mubr.bf16.gmra.mrb[0].mxu0 %v2236
      %v2785 = vpop.f32.mrb[0].mxu0
      %v2786 = vadd.f32 0.0, %v2785
      %v2787 = vpop.f32.mrb[0].mxu0
      %v2788 = vpop.f32.mrb[0].mxu0
      %v2789 = vadd.f32 0.0, %v2788
      %v2790 = vpop.f32.mrb[0].mxu0
      %2791 = vmatprep.mubr.bf16.mxu0 0
      %2792 = vmatmul.mubr.bf16.gmra.mrb[0].mxu0 %v2733
      %v2793 = vpop.f32.mrb[0].mxu0
      %v2794 = vadd.f32 0.0, %v2793
      %v2795 = vpop.f32.mrb[0].mxu0
      %v2796 = vpop.f32.mrb[0].mxu0
      %v2797 = vadd.f32 0.0, %v2796
      %v2798 = vpop.f32.mrb[0].mxu0
      %2799 = vdwg.mxu0
      %v2800 = vadd.f32 %v2635, %v2770
      %v2801 = vadd.f32 %v2636, %v2773
      %v2802 = vadd.f32 %v2637, %v2778
      %v2803 = vadd.f32 %v2638, %v2781
      %v2804 = vadd.f32 %v2639, %v2786
      %v2805 = vadd.f32 %v2640, %v2789
      %v2806 = vadd.f32 %v2641, %v2794
      %v2807 = vadd.f32 %v2642, %v2797
      %v2808 = vld [vmem:[%s9] sm:$0x1]
      %v2810 = vlaneseq
      %v2811 = vshrl.u32 %v2810, 7
      %v2812 = vsub.s32 0, %v2811
      %v2813 = vrot.slane %v2808, %v2812
      %v2815 = vadd.f32 %v2719, %v2813
      %v2816 = vadd.f32 %v2720, %v2813
      %v2817 = vadd.f32 %v2721, %v2813
      %v2818 = vadd.f32 %v2722, %v2813
      %v2819 = vadd.f32 %v2723, %v2813
      %v2820 = vadd.f32 %v2724, %v2813
      %v2821 = vadd.f32 %v2725, %v2813
      %v2822 = vadd.f32 %v2726, %v2813
      %v2823 = vadd.f32 %v2800, %v2813
      %v2824 = vadd.f32 %v2801, %v2813
      %v2825 = vadd.f32 %v2802, %v2813
      %v2826 = vadd.f32 %v2803, %v2813
      %v2827 = vadd.f32 %v2804, %v2813
      %v2828 = vadd.f32 %v2805, %v2813
      %v2829 = vadd.f32 %v2806, %v2813
      %v2830 = vadd.f32 %v2807, %v2813
      %vm2831 = vcmp.ge.f32.partialorder %v2815, 0.0
      %vm2832 = vcmp.ge.f32.partialorder %v2816, 0.0
      %vm2833 = vcmp.ge.f32.partialorder %v2817, 0.0
      %vm2834 = vcmp.ge.f32.partialorder %v2818, 0.0
      %vm2835 = vcmp.ge.f32.partialorder %v2819, 0.0
      %vm2836 = vcmp.ge.f32.partialorder %v2820, 0.0
      %vm2837 = vcmp.ge.f32.partialorder %v2821, 0.0
      %vm2838 = vcmp.ge.f32.partialorder %v2822, 0.0
      %v2839 = vmul.f32 %v2815, 0.01
      %v2840 = vmul.f32 %v2816, 0.01
      %v2841 = vmul.f32 %v2817, 0.01
      %v2842 = vmul.f32 %v2818, 0.01
      %v2843 = vmul.f32 %v2819, 0.01
      %v2844 = vmul.f32 %v2820, 0.01
      %v2845 = vmul.f32 %v2821, 0.01
      %v2846 = vmul.f32 %v2822, 0.01
      %v2847 = vsel %vm2831, %v2815, %v2839
      %v2848 = vsel %vm2832, %v2816, %v2840
      %v2849 = vsel %vm2833, %v2817, %v2841
      %v2850 = vsel %vm2834, %v2818, %v2842
      %v2851 = vsel %vm2835, %v2819, %v2843
      %v2852 = vsel %vm2836, %v2820, %v2844
      %v2853 = vsel %vm2837, %v2821, %v2845
      %v2854 = vsel %vm2838, %v2822, %v2846
      %vm2855 = vcmp.ge.f32.partialorder %v2823, 0.0
      %vm2856 = vcmp.ge.f32.partialorder %v2824, 0.0
      %vm2857 = vcmp.ge.f32.partialorder %v2825, 0.0
      %vm2858 = vcmp.ge.f32.partialorder %v2826, 0.0
      %vm2859 = vcmp.ge.f32.partialorder %v2827, 0.0
      %vm2860 = vcmp.ge.f32.partialorder %v2828, 0.0
      %vm2861 = vcmp.ge.f32.partialorder %v2829, 0.0
      %vm2862 = vcmp.ge.f32.partialorder %v2830, 0.0
      %v2863 = vmul.f32 %v2823, 0.01
      %v2864 = vmul.f32 %v2824, 0.01
      %v2865 = vmul.f32 %v2825, 0.01
      %v2866 = vmul.f32 %v2826, 0.01
      %v2867 = vmul.f32 %v2827, 0.01
      %v2868 = vmul.f32 %v2828, 0.01
      %v2869 = vmul.f32 %v2829, 0.01
      %v2870 = vmul.f32 %v2830, 0.01
      %v2871 = vsel %vm2855, %v2823, %v2863
      %v2872 = vsel %vm2856, %v2824, %v2864
      %v2873 = vsel %vm2857, %v2825, %v2865
      %v2874 = vsel %vm2858, %v2826, %v2866
      %v2875 = vsel %vm2859, %v2827, %v2867
      %v2876 = vsel %vm2860, %v2828, %v2868
      %v2877 = vsel %vm2861, %v2829, %v2869
      %v2878 = vsel %vm2862, %v2830, %v2870
      %2879 = vset.pattern.permute.xlu0 0
      %2880 = vperm.xlu0 %2879, %v989
      %v2881 = vpop.permute.xlu0 %2880
      %2883 = vset.pattern.permute.xlu0 0
      %2884 = vperm.xlu0 %2883, %v990
      %v2885 = vpop.permute.xlu0 %2884
      %2887 = vset.pattern.permute.xlu0 0
      %2888 = vperm.xlu0 %2887, %v991
      %v2889 = vpop.permute.xlu0 %2888
      %2891 = vset.pattern.permute.xlu0 0
      %2892 = vperm.xlu0 %2891, %v992
      %v2893 = vpop.permute.xlu0 %2892
      %2895 = vset.pattern.permute.xlu0 0
      %2896 = vperm.xlu0 %2895, %v993
      %v2897 = vpop.permute.xlu0 %2896
      %2899 = vset.pattern.permute.xlu0 0
      %2900 = vperm.xlu0 %2899, %v994
      %v2901 = vpop.permute.xlu0 %2900
      %2903 = vset.pattern.permute.xlu0 0
      %2904 = vperm.xlu0 %2903, %v995
      %v2905 = vpop.permute.xlu0 %2904
      %2907 = vset.pattern.permute.xlu0 0
      %2908 = vperm.xlu0 %2907, %v996
      %v2909 = vpop.permute.xlu0 %2908
      %v2911 = vmul.f32 %v2847, %v2881
      %v2912 = vmul.f32 %v2848, %v2885
      %v2913 = vmul.f32 %v2849, %v2889
      %v2914 = vmul.f32 %v2850, %v2893
      %v2915 = vmul.f32 %v2851, %v2897
      %v2916 = vmul.f32 %v2852, %v2901
      %v2917 = vmul.f32 %v2853, %v2905
      %v2918 = vmul.f32 %v2854, %v2909
      %v2919 = vsub.f32 %v2911, %v2871
      %v2920 = vsub.f32 %v2912, %v2872
      %v2921 = vsub.f32 %v2913, %v2873
      %v2922 = vsub.f32 %v2914, %v2874
      %v2923 = vsub.f32 %v2915, %v2875
      %v2924 = vsub.f32 %v2916, %v2876
      %v2925 = vsub.f32 %v2917, %v2877
      %v2926 = vsub.f32 %v2918, %v2878
      %v2927 = vand.u32 2147483647, %v2919
      %v2928 = vand.u32 2147483647, %v2920
      %v2929 = vand.u32 2147483647, %v2921
      %v2930 = vand.u32 2147483647, %v2922
      %v2931 = vand.u32 2147483647, %v2923
      %v2932 = vand.u32 2147483647, %v2924
      %v2933 = vand.u32 2147483647, %v2925
      %v2934 = vand.u32 2147483647, %v2926
      %v2935 = vsub.f32 %v2847, %v2927
      %v2936 = vsub.f32 %v2848, %v2928
      %v2937 = vsub.f32 %v2849, %v2929
      %v2938 = vsub.f32 %v2850, %v2930
      %v2939 = vsub.f32 %v2851, %v2931
      %v2940 = vsub.f32 %v2852, %v2932
      %v2941 = vsub.f32 %v2853, %v2933
      %v2942 = vsub.f32 %v2854, %v2934
      %v2943 = vld [vmem:[%s10] sm:$0x1]
      %v2945 = vlaneseq
      %v2946 = vshrl.u32 %v2945, 7
      %v2947 = vsub.s32 0, %v2946
      %v2948 = vrot.slane %v2943, %v2947
      %v2950 = vmul.f32 %v2935, %v2948
      %v2951 = vmul.f32 %v2936, %v2948
      %v2952 = vmul.f32 %v2937, %v2948
      %v2953 = vmul.f32 %v2938, %v2948
      %v2954 = vmul.f32 %v2939, %v2948
      %v2955 = vmul.f32 %v2940, %v2948
      %v2956 = vmul.f32 %v2941, %v2948
      %v2957 = vmul.f32 %v2942, %v2948
      %v2958 = vld [vmem:[%s11] sm:$0x1]
      %v2960 = vlaneseq
      %v2961 = vshrl.u32 %v2960, 7
      %v2962 = vsub.s32 0, %v2961
      %v2963 = vrot.slane %v2958, %v2962
      %v2965 = vadd.f32 %v2950, %v2963
      %v2966 = vadd.f32 %v2951, %v2963
      %v2967 = vadd.f32 %v2952, %v2963
      %v2968 = vadd.f32 %v2953, %v2963
      %v2969 = vadd.f32 %v2954, %v2963
      %v2970 = vadd.f32 %v2955, %v2963
      %v2971 = vadd.f32 %v2956, %v2963
      %v2972 = vadd.f32 %v2957, %v2963
      %v2973 = vmax.f32 %v2965, 0.0
      %v2974 = vmax.f32 %v2966, 0.0
      %v2975 = vmax.f32 %v2967, 0.0
      %v2976 = vmax.f32 %v2968, 0.0
      %v2977 = vmax.f32 %v2969, 0.0
      %v2978 = vmax.f32 %v2970, 0.0
      %v2979 = vmax.f32 %v2971, 0.0
      %v2980 = vmax.f32 %v2972, 0.0
      %2989 = vrot.lane.b32.xlu0 %v2973, 16
      %v2990 = vpop.permute.xlu0 %2989
      %2991 = vrot.lane.b32.xlu0 %v2974, 16
      %v2992 = vpop.permute.xlu0 %2991
      %2993 = vrot.lane.b32.xlu0 %v2975, 16
      %v2994 = vpop.permute.xlu0 %2993
      %2995 = vrot.lane.b32.xlu0 %v2976, 16
      %v2996 = vpop.permute.xlu0 %2995
      %2997 = vrot.lane.b32.xlu0 %v2977, 16
      %v2998 = vpop.permute.xlu0 %2997
      %2999 = vrot.lane.b32.xlu0 %v2978, 16
      %v3000 = vpop.permute.xlu0 %2999
      %3001 = vrot.lane.b32.xlu0 %v2979, 16
      %v3002 = vpop.permute.xlu0 %3001
      %3003 = vrot.lane.b32.xlu0 %v2980, 16
      %v3004 = vpop.permute.xlu0 %3003
      %vm3013 = vcmask 130048
      %v3014 = vsel %vm3013, %v906, %v2990
      %v3015 = vsel %vm3013, %v907, %v2992
      %v3016 = vsel %vm3013, %v908, %v2994
      %v3017 = vsel %vm3013, %v909, %v2996
      %v3018 = vsel %vm3013, %v910, %v2998
      %v3019 = vsel %vm3013, %v911, %v3000
      %v3020 = vsel %vm3013, %v912, %v3002
      %v3021 = vsel %vm3013, %v913, %v3004
      %v3022 = vpack.c.bf16 %v3015, %v3014
      %v3023 = vpack.c.bf16 %v3017, %v3016
      %v3024 = vpack.c.bf16 %v3019, %v3018
      %v3025 = vpack.c.bf16 %v3021, %v3020
      %v3030 = vunpack.c.l.b16 %v3022
      %v3031 = vunpack.c.h.b16 %v3022
      %v3032 = vunpack.c.l.b16 %v3023
      %v3033 = vunpack.c.h.b16 %v3023
      %v3034 = vunpack.c.l.b16 %v3024
      %v3035 = vunpack.c.h.b16 %v3024
      %v3036 = vunpack.c.l.b16 %v3025
      %v3037 = vunpack.c.h.b16 %v3025
      %v3038 = vpack.c.b16 %v3030, %v3030
      %v3039 = vpack.c.b16 %v3031, %v3031
      %v3040 = vpack.c.b16 %v3032, %v3032
      %v3041 = vpack.c.b16 %v3033, %v3033
      %v3042 = vpack.c.b16 %v3034, %v3034
      %v3043 = vpack.c.b16 %v3035, %v3035
      %v3044 = vpack.c.b16 %v3036, %v3036
      %v3045 = vpack.c.b16 %v3037, %v3037
      %vm3054 = vcmask 257024
      %3055 = vst.msk [vmem:[%s743] sm:$0xf] %vm3054, %v3038
      %3056 = vst.msk [vmem:[%s743 + $0x4] sm:$0xf] %vm3054, %v3039
      %3057 = vst.msk [vmem:[%s743 + $0x8] sm:$0xf] %vm3054, %v3040
      %3058 = vst.msk [vmem:[%s743 + $0xc] sm:$0xf] %vm3054, %v3041
      %3059 = vst.msk [vmem:[%s743 + $0x10] sm:$0xf] %vm3054, %v3042
      %3060 = vst.msk [vmem:[%s743 + $0x14] sm:$0xf] %vm3054, %v3043
      %3061 = vst.msk [vmem:[%s743 + $0x18] sm:$0xf] %vm3054, %v3044
      %3062 = vst.msk [vmem:[%s743 + $0x1c] sm:$0xf] %vm3054, %v3045
      %s3063 = smul.u32 4, %s28
      %p3064 = scmp.lt.s32.totalorder %s27, 1
      %s3065 = scalar_select %p3064, %s27, 1
      %p3066 = scmp.lt.s32.totalorder %s3063, 7
      %s3067 = scalar_select %p3066, %s3063, 7
      %s3068 = smul.addr %s3067, 2
      %s3069 = smul.addr %s3065, 16
      %s3070 = sadd.s32 %s3068, %s3069
      %s3071 = smul.addr %s3070, 4
      %s3072 = scalar_lea.vmem %s12, %s3071
      // Predicated region
      $region69: #{range_fire_up_forward.3} parent=67 // pred_check
        %p3073 = pneg %p381
      $region70: #{range_fire_up_forward.3} parent=67 // pred_check_branch
        %3075 = sbr.rel (%p3073) target = $region72
      $region71: #{range_fire_up_forward.3} parent=67 // pred_region
        %s3076 = smul.u32 4, %s28
      $region72: #{range_fire_up_forward.3} parent=67 // pred_fallthru
        _
    $region68: #{range_fire_up_forward.3} parent=5 // pred_fallthru
      _
    %p3077 = scmp.le.s32.totalorder 2, %s18
    // Predicated region
    $region73: #{range_fire_up_forward.3} parent=5 // pred_check
      %p3078 = pneg %p3077
    $region74: #{range_fire_up_forward.3} parent=5 // pred_check_branch
      %3080 = sbr.rel (%p3078) target = $region76
    $region75: #{range_fire_up_forward.3} parent=5 // pred_region
      %s3081 = ssub.s32 %s18, 2
      // Predicated region
      $region77: #{range_fire_up_forward.3} parent=75 // pred_check
        %p3082 = pneg %p387
      $region78: #{range_fire_up_forward.3} parent=75 // pred_check_branch
        %3084 = sbr.rel (%p3082) target = $region80
      $region79: #{range_fire_up_forward.3} parent=75 // pred_region
        %s3085 = smul.u32 4, %s30
        %p3086 = scmp.lt.s32.totalorder %s29, 1
        %s3087 = scalar_select %p3086, %s29, 1
        %p3088 = scmp.lt.s32.totalorder %s3085, 7
        %s3089 = scalar_select %p3088, %s3085, 7
        %s3090 = smul.addr %s3089, 2
        %s3091 = smul.addr %s3087, 16
        %s3092 = sadd.s32 %s3090, %s3091
        %s3093 = smul.addr %s3092, 4
        %s3094 = scalar_lea.vmem %s12, %s3093
      $region80: #{range_fire_up_forward.3} parent=75 // pred_fallthru
        _
    $region76: #{range_fire_up_forward.3} parent=5 // pred_fallthru
      _
  $region6: #{range_fire_up_forward.3} parent=0 // loop_footer
    %s22 = sadd.s32 1, %s18
  $region7: #{range_fire_up_forward.3} parent=0 // loop_footer_branch
    %17 = sbr.rel target = $region3
  $region8: #{range_fire_up_forward.3} parent=0 // loop_exit
    _

</llo_original>
